<compile_context>
chip_gen: v6e
topology: v6e:2x2x1
jax: 0.10.0
libtpu: 0.0.40
codegen_flags: <defaults>
</compile_context>

<pallas_src>
import functools

import jax
import jax.numpy as jnp
from jax import lax
from jax.experimental import pallas as pl
from jax.experimental.pallas import tpu as pltpu

EPS = 1e-5  # nn.GroupNorm default eps


def _hardswish(x):
    # x * relu6(x + 3) / 6
    return x * jnp.clip(x + 3.0, 0.0, 6.0) * (1.0 / 6.0)


def _group_norm(xf, gmat_ref, gamma, beta, cg):
    # xf: (L, C) f32; gmat_ref: (C, C) group-membership matrix; gamma/beta: (1, C).
    # Per-channel sum / sumsq, then ONE fused (2,C)x(C,C) group-reduction matmul
    # (skipped when cg == 1: the group matrix is the identity).
    L, C = xf.shape
    inv_n = 1.0 / float(L * cg)
    s = jnp.sum(xf, axis=0, keepdims=True)          # (1, C)
    sq = jnp.sum(xf * xf, axis=0, keepdims=True)    # (1, C)
    if cg == 1:
        gs, gsq = s, sq
    else:
        st = jnp.concatenate([s, sq], axis=0)       # (2, C)
        r = jnp.dot(st, gmat_ref[...], preferred_element_type=jnp.float32)
        gs, gsq = r[0:1, :], r[1:2, :]
    mean = gs * inv_n
    var = gsq * inv_n - mean * mean                 # biased variance (PyTorch GN)
    # TODO(synk): E[x^2]-E[x]^2 is cancellation-prone for badly-centered inputs; use a
    # two-pass variant if activations stop being roughly zero-mean.
    inv = lax.rsqrt(var + EPS)
    scale = inv * gamma                              # (1, C)
    shift = beta - mean * scale                      # (1, C)
    return xf * scale + shift


def residual_kernel(x_ref, w1_ref, w2_ref, g1_ref, b1_ref, g2_ref, b2_ref,
                    m1_ref, m2_ref, o_ref, pad_ref, col_ref, *, cg1, cg2):
    _, H, W, Cin = x_ref.shape
    Cres, Cout = w2_ref.shape

    xf = x_ref[0].astype(jnp.float32).reshape(H * W, Cin)   # (H*W, Cin)

    # --- GroupNorm(32, in_dim) + Hardswish (f32) ---
    a1 = _hardswish(_group_norm(xf, m1_ref, g1_ref[...], b1_ref[...], cg1))

    # --- zero-padded bf16 activation scratch: border-only zero, interior written once ---
    zrow = jnp.zeros((1, W + 2, Cin), pad_ref.dtype)
    zcol = jnp.zeros((H, 1, Cin), pad_ref.dtype)
    pad_ref[0:1, :, :] = zrow
    pad_ref[H + 1:H + 2, :, :] = zrow
    pad_ref[1:H + 1, 0:1, :] = zcol
    pad_ref[1:H + 1, W + 1:W + 2, :] = zcol
    pad_ref[1:H + 1, 1:W + 1, :] = a1.reshape(H, W, Cin).astype(pad_ref.dtype)

    # --- Conv2d(in_dim, res_h_dim, k=3, s=1, p=1, bias=False): single im2col matmul ---
    taps = [(dy, dx) for dy in range(3) for dx in range(3)]
    for t, (dy, dx) in enumerate(taps):
        col_ref[:, t * Cin:(t + 1) * Cin] = (
            pad_ref[dy:dy + H, dx:dx + W, :].reshape(H * W, Cin))
    acc = jnp.dot(col_ref[...], w1_ref[...],
                  preferred_element_type=jnp.float32)        # (H*W, Cres) f32

    # TODO(synk): nn.Dropout2d(0.1) is identity in eval mode; training-mode channel
    # dropout (stochastic) is not implemented here.

    # --- GroupNorm(32, res_h_dim) + Hardswish (f32) ---
    a2 = _hardswish(_group_norm(acc, m2_ref, g2_ref[...], b2_ref[...], cg2))

    # --- Conv2d(res_h_dim, h_dim, k=1, bias=False) (bf16 MXU) + residual add (f32) ---
    y = jnp.dot(a2.astype(jnp.bfloat16), w2_ref[...],
                preferred_element_type=jnp.float32)          # (H*W, Cout) f32
    o_ref[0] = (xf + y).reshape(H, W, Cout).astype(o_ref.dtype)


def residual_layer_nhwc(x_nhwc, params, num_groups=32):
    """Hot path: NHWC in / NHWC out, no HBM transposes.

    params = (w1_hwio[3,3,Cin,Cres], w2[Cres,Cout], g1[Cin], b1[Cin], g2[Cres], b2[Cres]).
    """
    w1, w2, g1, b1, g2, b2 = params
    N, H, W, C = x_nhwc.shape
    Cres = w1.shape[3]
    Cout = w2.shape[1]
    assert Cout == C, "residual add requires h_dim == in_dim"
    assert C % num_groups == 0 and Cres % num_groups == 0
    cg1 = C // num_groups
    cg2 = Cres // num_groups

    # Weight / constant packing (tiny; in a real model pre-pack once outside the step).
    w1r = w1.reshape(9 * C, Cres).astype(jnp.bfloat16)   # (ky,kx,cin) row-major == im2col order
    w2b = w2.astype(jnp.bfloat16)
    g1r = g1.reshape(1, C).astype(jnp.float32)
    b1r = b1.reshape(1, C).astype(jnp.float32)
    g2r = g2.reshape(1, Cres).astype(jnp.float32)
    b2r = b2.reshape(1, Cres).astype(jnp.float32)

    def group_mat(ch, cg):
        g = jnp.arange(ch) // cg
        return (g[:, None] == g[None, :]).astype(jnp.float32)

    m1 = group_mat(C, cg1)
    m2 = group_mat(Cres, cg2)

    kernel = functools.partial(residual_kernel, cg1=cg1, cg2=cg2)

    # Per-step VMEM: double-buffered (1,H,W,C) in/out blocks + weights + bf16 pad/im2col
    # scratch ≈ a couple of MiB at these shapes — fits every generation.
    # TODO(synk): for production H,W (>=128) tile the H axis (with halo rows in the pad
    # scratch) so the per-step footprint stays inside v7x's 64 MiB VMEM.
    return pl.pallas_call(
        kernel,
        out_shape=jax.ShapeDtypeStruct((N, H, W, C), x_nhwc.dtype),
        grid_spec=pltpu.PrefetchScalarGridSpec(
            num_scalar_prefetch=0,
            grid=(N,),
            in_specs=[
                pl.BlockSpec((1, H, W, C), lambda n: (n, 0, 0, 0)),   # x (NHWC)
                pl.BlockSpec((9 * C, Cres), lambda n: (0, 0)),        # conv3x3 weight (im2col form)
                pl.BlockSpec((Cres, Cout), lambda n: (0, 0)),         # conv1x1 weight
                pl.BlockSpec((1, C), lambda n: (0, 0)),               # gn1 gamma
                pl.BlockSpec((1, C), lambda n: (0, 0)),               # gn1 beta
                pl.BlockSpec((1, Cres), lambda n: (0, 0)),            # gn2 gamma
                pl.BlockSpec((1, Cres), lambda n: (0, 0)),            # gn2 beta
                pl.BlockSpec((C, C), lambda n: (0, 0)),               # group matrix 1
                pl.BlockSpec((Cres, Cres), lambda n: (0, 0)),         # group matrix 2
            ],
            out_specs=pl.BlockSpec((1, H, W, C), lambda n: (n, 0, 0, 0)),
            scratch_shapes=[
                pltpu.VMEM((H + 2, W + 2, C), jnp.bfloat16),          # zero-padded activations
                pltpu.VMEM((H * W, 9 * C), jnp.bfloat16),             # im2col buffer
            ],
        ),
        compiler_params=pltpu.CompilerParams(
            dimension_semantics=("parallel",),          # batch images are independent
            vmem_limit_bytes=32 * 1024 * 1024,
        ),
    )(x_nhwc, w1r, w2b, g1r, b1r, g2r, b2r, m1, m2)


def residual_layer(x_nchw, params, num_groups=32):
    """PyTorch-parity adapter (NCHW in/out). The two transposes round-trip HBM; in a real
    model keep activations NHWC end-to-end and call residual_layer_nhwc directly."""
    x = jnp.transpose(x_nchw, (0, 2, 3, 1))
    out = residual_layer_nhwc(x, params, num_groups)
    return jnp.transpose(out, (0, 3, 1, 2))


def reference(x_nchw, params, num_groups=32):
    """Pure-JAX f32 reference matching the PyTorch module (eval mode)."""
    w1, w2, g1, b1, g2, b2 = params

    def gn(x, gamma, beta):
        n, c, h, w = x.shape
        xr = x.reshape(n, num_groups, c // num_groups, h, w)
        mu = xr.mean(axis=(2, 3, 4), keepdims=True)
        var = xr.var(axis=(2, 3, 4), keepdims=True)
        xn = ((xr - mu) / jnp.sqrt(var + EPS)).reshape(n, c, h, w)
        return xn * gamma.reshape(1, -1, 1, 1) + beta.reshape(1, -1, 1, 1)

    def hs(x):
        return x * jnp.clip(x + 3.0, 0.0, 6.0) / 6.0

    a = hs(gn(x_nchw, g1, b1))
    y = lax.conv_general_dilated(a, w1, (1, 1), "SAME",
                                 dimension_numbers=("NCHW", "HWIO", "NCHW"),
                                 precision=lax.Precision.HIGHEST)
    a2 = hs(gn(y, g2, b2))
    y2 = lax.conv_general_dilated(a2, w2.reshape(1, 1, *w2.shape), (1, 1), "SAME",
                                  dimension_numbers=("NCHW", "HWIO", "NCHW"),
                                  precision=lax.Precision.HIGHEST)
    return x_nchw + y2


if __name__ == "__main__":
    # GroupNorm(32, .) forces channel counts to be multiples of 32; 128/64 channels are
    # the typical VQ-VAE residual-layer sizes and keep the lane (channel) axis dense.
    in_dim = h_dim = 128
    res_h_dim = 64
    N, H, W = 2, 16, 16

    key = jax.random.PRNGKey(0)
    k = jax.random.split(key, 7)
    x = jax.random.normal(k[0], (N, in_dim, H, W), jnp.float32)
    # Deterministic synthetic parameters (shapes per module __init__; conv weights in
    # HWIO / (Cres, Cout) form — the PyTorch OIHW tensors map via a simple transpose).
    w1 = 0.1 * jax.random.normal(k[1], (3, 3, in_dim, res_h_dim), jnp.float32)  # HWIO
    w2 = 0.1 * jax.random.normal(k[2], (res_h_dim, h_dim), jnp.float32)         # 1x1 conv
    g1 = 1.0 + 0.1 * jax.random.normal(k[3], (in_dim,), jnp.float32)
    b1 = 0.1 * jax.random.normal(k[4], (in_dim,), jnp.float32)
    g2 = 1.0 + 0.1 * jax.random.normal(k[5], (res_h_dim,), jnp.float32)
    b2 = 0.1 * jax.random.normal(k[6], (res_h_dim,), jnp.float32)
    params = (w1, w2, g1, b1, g2, b2)

    out = residual_layer(x, params)
    jax.block_until_ready(out)

    ref = reference(x, params)
    assert out.shape == x.shape
    # Slightly looser tolerance than the pure-f32 version: conv operands are fed to the
    # MXU in bf16 (f32 accumulation).
    err = float(jnp.max(jnp.abs(out - ref)))
    assert jnp.allclose(out, ref, atol=2e-2, rtol=2e-2), err
    print("KERNEL_OK")
</pallas_src>

<mosaic_0001>
module attributes {stable_mosaic.version = 11 : i64} {
  func.func @residual_kernel(%arg0: i32, %arg1: memref<1x16x16x128xf32, #tpu.memory_space<vmem>>, %arg2: memref<1152x64xbf16, #tpu.memory_space<vmem>>, %arg3: memref<64x128xbf16, #tpu.memory_space<vmem>>, %arg4: memref<1x128xf32, #tpu.memory_space<vmem>>, %arg5: memref<1x128xf32, #tpu.memory_space<vmem>>, %arg6: memref<1x64xf32, #tpu.memory_space<vmem>>, %arg7: memref<1x64xf32, #tpu.memory_space<vmem>>, %arg8: memref<128x128xf32, #tpu.memory_space<vmem>>, %arg9: memref<64x64xf32, #tpu.memory_space<vmem>>, %arg10: memref<1x16x16x128xf32, #tpu.memory_space<vmem>>, %arg11: memref<18x18x128xbf16, #tpu.memory_space<vmem>>, %arg12: memref<256x1152xbf16, #tpu.memory_space<vmem>>) attributes {dimension_semantics = [#tpu.dimension_semantics<parallel>], iteration_bounds = array<i64: 2>, scalar_prefetch = 0 : i64, scratch_operands = 2 : i64, tpu.core_type = #tpu.core_type<tc>, window_params = [{transform_indices = @transform_0, window_bounds = array<i64: 1, 16, 16, 128>}, {pipeline_mode = #tpu.pipeline_mode<synchronous>, transform_indices = @transform_1, window_bounds = array<i64: 1152, 64>}, {pipeline_mode = #tpu.pipeline_mode<synchronous>, transform_indices = @transform_2, window_bounds = array<i64: 64, 128>}, {pipeline_mode = #tpu.pipeline_mode<synchronous>, transform_indices = @transform_3, window_bounds = array<i64: 1, 128>}, {pipeline_mode = #tpu.pipeline_mode<synchronous>, transform_indices = @transform_4, window_bounds = array<i64: 1, 128>}, {pipeline_mode = #tpu.pipeline_mode<synchronous>, transform_indices = @transform_5, window_bounds = array<i64: 1, 64>}, {pipeline_mode = #tpu.pipeline_mode<synchronous>, transform_indices = @transform_6, window_bounds = array<i64: 1, 64>}, {pipeline_mode = #tpu.pipeline_mode<synchronous>, transform_indices = @transform_7, window_bounds = array<i64: 128, 128>}, {pipeline_mode = #tpu.pipeline_mode<synchronous>, transform_indices = @transform_8, window_bounds = array<i64: 64, 64>}, {transform_indices = @transform_9, window_bounds = array<i64: 1, 16, 16, 128>}]} {
    %c0 = arith.constant 0 : index
    %c0_0 = arith.constant 0 : index
    %c0_1 = arith.constant 0 : index
    %c0_2 = arith.constant 0 : index
    %0 = vector.load %arg1[%c0, %c0_0, %c0_1, %c0_2] : memref<1x16x16x128xf32, #tpu.memory_space<vmem>>, vector<1x16x16x128xf32>
    %1 = vector.shape_cast %0 : vector<1x16x16x128xf32> to vector<16x16x128xf32>
    %2 = vector.shape_cast %1 : vector<16x16x128xf32> to vector<256x128xf32>
    %c0_3 = arith.constant 0 : index
    %c0_4 = arith.constant 0 : index
    %3 = vector.load %arg4[%c0_3, %c0_4] : memref<1x128xf32, #tpu.memory_space<vmem>>, vector<1x128xf32>
    %c0_5 = arith.constant 0 : index
    %c0_6 = arith.constant 0 : index
    %4 = vector.load %arg5[%c0_5, %c0_6] : memref<1x128xf32, #tpu.memory_space<vmem>>, vector<1x128xf32>
    %cst = arith.constant dense<0.000000e+00> : vector<128xf32>
    %5 = vector.multi_reduction <add>, %2, %cst [0] : vector<256x128xf32> to vector<128xf32>
    %6 = vector.shape_cast %5 : vector<128xf32> to vector<1x128xf32>
    %7 = arith.mulf %2, %2 : vector<256x128xf32>
    %cst_7 = arith.constant dense<0.000000e+00> : vector<128xf32>
    %8 = vector.multi_reduction <add>, %7, %cst_7 [0] : vector<256x128xf32> to vector<128xf32>
    %9 = vector.shape_cast %8 : vector<128xf32> to vector<1x128xf32>
    %10 = tpu.concatenate %6, %9 in 0 : vector<1x128xf32>, vector<1x128xf32> -> vector<2x128xf32>
    %c0_8 = arith.constant 0 : index
    %c0_9 = arith.constant 0 : index
    %11 = vector.load %arg8[%c0_8, %c0_9] : memref<128x128xf32, #tpu.memory_space<vmem>>, vector<128x128xf32>
    %cst_10 = arith.constant dense<0.000000e+00> : vector<2x128xf32>
    %12 = tpu.matmul %10, %11, %cst_10 {dimension_numbers = #tpu.dot_dimension_numbers<[1], [0], [0], [1], [0, 0, 1, 1], [], []>} : vector<2x128xf32>, vector<128x128xf32>, vector<2x128xf32> -> vector<2x128xf32>
    %13 = vector.extract_strided_slice %12 {offsets = [0, 0], sizes = [1, 128], strides = [1, 1]} : vector<2x128xf32> to vector<1x128xf32>
    %14 = vector.extract_strided_slice %12 {offsets = [1, 0], sizes = [1, 128], strides = [1, 1]} : vector<2x128xf32> to vector<1x128xf32>
    %cst_11 = arith.constant 9.765625E-4 : f32
    %15 = vector.broadcast %cst_11 : f32 to vector<1x128xf32>
    %16 = arith.mulf %13, %15 : vector<1x128xf32>
    %cst_12 = arith.constant 9.765625E-4 : f32
    %17 = vector.broadcast %cst_12 : f32 to vector<1x128xf32>
    %18 = arith.mulf %14, %17 : vector<1x128xf32>
    %19 = arith.mulf %16, %16 : vector<1x128xf32>
    %20 = arith.subf %18, %19 : vector<1x128xf32>
    %cst_13 = arith.constant 9.99999974E-6 : f32
    %21 = vector.broadcast %cst_13 : f32 to vector<1x128xf32>
    %22 = arith.addf %20, %21 : vector<1x128xf32>
    %23 = math.rsqrt %22 : vector<1x128xf32>
    %24 = arith.mulf %23, %3 : vector<1x128xf32>
    %25 = arith.mulf %16, %24 : vector<1x128xf32>
    %26 = arith.subf %4, %25 : vector<1x128xf32>
    %27 = vector.broadcast %24 : vector<1x128xf32> to vector<256x128xf32>
    %28 = arith.mulf %2, %27 : vector<256x128xf32>
    %29 = vector.broadcast %26 : vector<1x128xf32> to vector<256x128xf32>
    %30 = arith.addf %28, %29 : vector<256x128xf32>
    %cst_14 = arith.constant 3.000000e+00 : f32
    %31 = vector.broadcast %cst_14 : f32 to vector<256x128xf32>
    %32 = arith.addf %30, %31 : vector<256x128xf32>
    %cst_15 = arith.constant 0.000000e+00 : f32
    %cst_16 = arith.constant 6.000000e+00 : f32
    %33 = vector.broadcast %cst_15 : f32 to vector<256x128xf32>
    %34 = arith.maximumf %33, %32 : vector<256x128xf32>
    %35 = vector.broadcast %cst_16 : f32 to vector<256x128xf32>
    %36 = arith.minimumf %35, %34 : vector<256x128xf32>
    %37 = arith.mulf %30, %36 : vector<256x128xf32>
    %cst_17 = arith.constant 0.166666672 : f32
    %38 = vector.broadcast %cst_17 : f32 to vector<256x128xf32>
    %39 = arith.mulf %37, %38 : vector<256x128xf32>
    %cst_18 = arith.constant 0.000000e+00 : bf16
    %40 = vector.broadcast %cst_18 : bf16 to vector<1x18x128xbf16>
    %cst_19 = arith.constant 0.000000e+00 : bf16
    %41 = vector.broadcast %cst_19 : bf16 to vector<16x1x128xbf16>
    %c0_20 = arith.constant 0 : index
    %c0_21 = arith.constant 0 : index
    %c0_22 = arith.constant 0 : index
    %42 = vector.load %arg11[%c0_20, %c0_21, %c0_22] : memref<18x18x128xbf16, #tpu.memory_space<vmem>>, vector<1x18x128xbf16>
    tpu.vector_store %arg11[%c0_20, %c0_21, %c0_22], %40 {strides = array<i32>} : memref<18x18x128xbf16, #tpu.memory_space<vmem>>, vector<1x18x128xbf16>,
    %c17 = arith.constant 17 : index
    %c0_23 = arith.constant 0 : index
    %c0_24 = arith.constant 0 : index
    %43 = vector.load %arg11[%c17, %c0_23, %c0_24] : memref<18x18x128xbf16, #tpu.memory_space<vmem>>, vector<1x18x128xbf16>
    tpu.vector_store %arg11[%c17, %c0_23, %c0_24], %40 {strides = array<i32>} : memref<18x18x128xbf16, #tpu.memory_space<vmem>>, vector<1x18x128xbf16>,
    %c1 = arith.constant 1 : index
    %c0_25 = arith.constant 0 : index
    %c0_26 = arith.constant 0 : index
    %44 = vector.load %arg11[%c1, %c0_25, %c0_26] : memref<18x18x128xbf16, #tpu.memory_space<vmem>>, vector<16x1x128xbf16>
    tpu.vector_store %arg11[%c1, %c0_25, %c0_26], %41 {strides = array<i32>} : memref<18x18x128xbf16, #tpu.memory_space<vmem>>, vector<16x1x128xbf16>,
    %c1_27 = arith.constant 1 : index
    %c17_28 = arith.constant 17 : index
    %c0_29 = arith.constant 0 : index
    %45 = vector.load %arg11[%c1_27, %c17_28, %c0_29] : memref<18x18x128xbf16, #tpu.memory_space<vmem>>, vector<16x1x128xbf16>
    tpu.vector_store %arg11[%c1_27, %c17_28, %c0_29], %41 {strides = array<i32>} : memref<18x18x128xbf16, #tpu.memory_space<vmem>>, vector<16x1x128xbf16>,
    %46 = vector.shape_cast %39 : vector<256x128xf32> to vector<16x16x128xf32>
    %47 = arith.truncf %46 : vector<16x16x128xf32> to vector<16x16x128xbf16>
    %c1_30 = arith.constant 1 : index
    %c1_31 = arith.constant 1 : index
    %c0_32 = arith.constant 0 : index
    %48 = vector.load %arg11[%c1_30, %c1_31, %c0_32] : memref<18x18x128xbf16, #tpu.memory_space<vmem>>, vector<16x16x128xbf16>
    tpu.vector_store %arg11[%c1_30, %c1_31, %c0_32], %47 {strides = array<i32>} : memref<18x18x128xbf16, #tpu.memory_space<vmem>>, vector<16x16x128xbf16>,
    %c0_33 = arith.constant 0 : index
    %c0_34 = arith.constant 0 : index
    %c0_35 = arith.constant 0 : index
    %49 = vector.load %arg11[%c0_33, %c0_34, %c0_35] : memref<18x18x128xbf16, #tpu.memory_space<vmem>>, vector<16x16x128xbf16>
    %50 = vector.shape_cast %49 : vector<16x16x128xbf16> to vector<256x128xbf16>
    %c0_36 = arith.constant 0 : index
    %c0_37 = arith.constant 0 : index
    %51 = vector.load %arg12[%c0_36, %c0_37] : memref<256x1152xbf16, #tpu.memory_space<vmem>>, vector<256x128xbf16>
    tpu.vector_store %arg12[%c0_36, %c0_37], %50 {strides = array<i32>} : memref<256x1152xbf16, #tpu.memory_space<vmem>>, vector<256x128xbf16>,
    %c0_38 = arith.constant 0 : index
    %c1_39 = arith.constant 1 : index
    %c0_40 = arith.constant 0 : index
    %52 = vector.load %arg11[%c0_38, %c1_39, %c0_40] : memref<18x18x128xbf16, #tpu.memory_space<vmem>>, vector<16x16x128xbf16>
    %53 = vector.shape_cast %52 : vector<16x16x128xbf16> to vector<256x128xbf16>
    %c0_41 = arith.constant 0 : index
    %c128 = arith.constant 128 : index
    %54 = vector.load %arg12[%c0_41, %c128] : memref<256x1152xbf16, #tpu.memory_space<vmem>>, vector<256x128xbf16>
    tpu.vector_store %arg12[%c0_41, %c128], %53 {strides = array<i32>} : memref<256x1152xbf16, #tpu.memory_space<vmem>>, vector<256x128xbf16>,
    %c0_42 = arith.constant 0 : index
    %c2 = arith.constant 2 : index
    %c0_43 = arith.constant 0 : index
    %55 = vector.load %arg11[%c0_42, %c2, %c0_43] : memref<18x18x128xbf16, #tpu.memory_space<vmem>>, vector<16x16x128xbf16>
    %56 = vector.shape_cast %55 : vector<16x16x128xbf16> to vector<256x128xbf16>
    %c0_44 = arith.constant 0 : index
    %c256 = arith.constant 256 : index
    %57 = vector.load %arg12[%c0_44, %c256] : memref<256x1152xbf16, #tpu.memory_space<vmem>>, vector<256x128xbf16>
    tpu.vector_store %arg12[%c0_44, %c256], %56 {strides = array<i32>} : memref<256x1152xbf16, #tpu.memory_space<vmem>>, vector<256x128xbf16>,
    %c1_45 = arith.constant 1 : index
    %c0_46 = arith.constant 0 : index
    %c0_47 = arith.constant 0 : index
    %58 = vector.load %arg11[%c1_45, %c0_46, %c0_47] : memref<18x18x128xbf16, #tpu.memory_space<vmem>>, vector<16x16x128xbf16>
    %59 = vector.shape_cast %58 : vector<16x16x128xbf16> to vector<256x128xbf16>
    %c0_48 = arith.constant 0 : index
    %c384 = arith.constant 384 : index
    %60 = vector.load %arg12[%c0_48, %c384] : memref<256x1152xbf16, #tpu.memory_space<vmem>>, vector<256x128xbf16>
    tpu.vector_store %arg12[%c0_48, %c384], %59 {strides = array<i32>} : memref<256x1152xbf16, #tpu.memory_space<vmem>>, vector<256x128xbf16>,
    %c1_49 = arith.constant 1 : index
    %c1_50 = arith.constant 1 : index
    %c0_51 = arith.constant 0 : index
    %61 = vector.load %arg11[%c1_49, %c1_50, %c0_51] : memref<18x18x128xbf16, #tpu.memory_space<vmem>>, vector<16x16x128xbf16>
    %62 = vector.shape_cast %61 : vector<16x16x128xbf16> to vector<256x128xbf16>
    %c0_52 = arith.constant 0 : index
    %c512 = arith.constant 512 : index
    %63 = vector.load %arg12[%c0_52, %c512] : memref<256x1152xbf16, #tpu.memory_space<vmem>>, vector<256x128xbf16>
    tpu.vector_store %arg12[%c0_52, %c512], %62 {strides = array<i32>} : memref<256x1152xbf16, #tpu.memory_space<vmem>>, vector<256x128xbf16>,
    %c1_53 = arith.constant 1 : index
    %c2_54 = arith.constant 2 : index
    %c0_55 = arith.constant 0 : index
    %64 = vector.load %arg11[%c1_53, %c2_54, %c0_55] : memref<18x18x128xbf16, #tpu.memory_space<vmem>>, vector<16x16x128xbf16>
    %65 = vector.shape_cast %64 : vector<16x16x128xbf16> to vector<256x128xbf16>
    %c0_56 = arith.constant 0 : index
    %c640 = arith.constant 640 : index
    %66 = vector.load %arg12[%c0_56, %c640] : memref<256x1152xbf16, #tpu.memory_space<vmem>>, vector<256x128xbf16>
    tpu.vector_store %arg12[%c0_56, %c640], %65 {strides = array<i32>} : memref<256x1152xbf16, #tpu.memory_space<vmem>>, vector<256x128xbf16>,
    %c2_57 = arith.constant 2 : index
    %c0_58 = arith.constant 0 : index
    %c0_59 = arith.constant 0 : index
    %67 = vector.load %arg11[%c2_57, %c0_58, %c0_59] : memref<18x18x128xbf16, #tpu.memory_space<vmem>>, vector<16x16x128xbf16>
    %68 = vector.shape_cast %67 : vector<16x16x128xbf16> to vector<256x128xbf16>
    %c0_60 = arith.constant 0 : index
    %c768 = arith.constant 768 : index
    %69 = vector.load %arg12[%c0_60, %c768] : memref<256x1152xbf16, #tpu.memory_space<vmem>>, vector<256x128xbf16>
    tpu.vector_store %arg12[%c0_60, %c768], %68 {strides = array<i32>} : memref<256x1152xbf16, #tpu.memory_space<vmem>>, vector<256x128xbf16>,
    %c2_61 = arith.constant 2 : index
    %c1_62 = arith.constant 1 : index
    %c0_63 = arith.constant 0 : index
    %70 = vector.load %arg11[%c2_61, %c1_62, %c0_63] : memref<18x18x128xbf16, #tpu.memory_space<vmem>>, vector<16x16x128xbf16>
    %71 = vector.shape_cast %70 : vector<16x16x128xbf16> to vector<256x128xbf16>
    %c0_64 = arith.constant 0 : index
    %c896 = arith.constant 896 : index
    %72 = vector.load %arg12[%c0_64, %c896] : memref<256x1152xbf16, #tpu.memory_space<vmem>>, vector<256x128xbf16>
    tpu.vector_store %arg12[%c0_64, %c896], %71 {strides = array<i32>} : memref<256x1152xbf16, #tpu.memory_space<vmem>>, vector<256x128xbf16>,
    %c2_65 = arith.constant 2 : index
    %c2_66 = arith.constant 2 : index
    %c0_67 = arith.constant 0 : index
    %73 = vector.load %arg11[%c2_65, %c2_66, %c0_67] : memref<18x18x128xbf16, #tpu.memory_space<vmem>>, vector<16x16x128xbf16>
    %74 = vector.shape_cast %73 : vector<16x16x128xbf16> to vector<256x128xbf16>
    %c0_68 = arith.constant 0 : index
    %c1024 = arith.constant 1024 : index
    %75 = vector.load %arg12[%c0_68, %c1024] : memref<256x1152xbf16, #tpu.memory_space<vmem>>, vector<256x128xbf16>
    tpu.vector_store %arg12[%c0_68, %c1024], %74 {strides = array<i32>} : memref<256x1152xbf16, #tpu.memory_space<vmem>>, vector<256x128xbf16>,
    %c0_69 = arith.constant 0 : index
    %c0_70 = arith.constant 0 : index
    %76 = vector.load %arg12[%c0_69, %c0_70] : memref<256x1152xbf16, #tpu.memory_space<vmem>>, vector<256x1152xbf16>
    %c0_71 = arith.constant 0 : index
    %c0_72 = arith.constant 0 : index
    %77 = vector.load %arg2[%c0_71, %c0_72] : memref<1152x64xbf16, #tpu.memory_space<vmem>>, vector<1152x64xbf16>
    %cst_73 = arith.constant dense<0.000000e+00> : vector<256x64xf32>
    %78 = tpu.matmul %76, %77, %cst_73 {dimension_numbers = #tpu.dot_dimension_numbers<[1], [0], [0], [1], [0, 0, 1, 1], [], []>} : vector<256x1152xbf16>, vector<1152x64xbf16>, vector<256x64xf32> -> vector<256x64xf32>
    %c0_74 = arith.constant 0 : index
    %c0_75 = arith.constant 0 : index
    %79 = vector.load %arg6[%c0_74, %c0_75] : memref<1x64xf32, #tpu.memory_space<vmem>>, vector<1x64xf32>
    %c0_76 = arith.constant 0 : index
    %c0_77 = arith.constant 0 : index
    %80 = vector.load %arg7[%c0_76, %c0_77] : memref<1x64xf32, #tpu.memory_space<vmem>>, vector<1x64xf32>
    %cst_78 = arith.constant dense<0.000000e+00> : vector<64xf32>
    %81 = vector.multi_reduction <add>, %78, %cst_78 [0] : vector<256x64xf32> to vector<64xf32>
    %82 = vector.shape_cast %81 : vector<64xf32> to vector<1x64xf32>
    %83 = arith.mulf %78, %78 : vector<256x64xf32>
    %cst_79 = arith.constant dense<0.000000e+00> : vector<64xf32>
    %84 = vector.multi_reduction <add>, %83, %cst_79 [0] : vector<256x64xf32> to vector<64xf32>
    %85 = vector.shape_cast %84 : vector<64xf32> to vector<1x64xf32>
    %86 = tpu.concatenate %82, %85 in 0 : vector<1x64xf32>, vector<1x64xf32> -> vector<2x64xf32>
    %c0_80 = arith.constant 0 : index
    %c0_81 = arith.constant 0 : index
    %87 = vector.load %arg9[%c0_80, %c0_81] : memref<64x64xf32, #tpu.memory_space<vmem>>, vector<64x64xf32>
    %cst_82 = arith.constant dense<0.000000e+00> : vector<2x64xf32>
    %88 = tpu.matmul %86, %87, %cst_82 {dimension_numbers = #tpu.dot_dimension_numbers<[1], [0], [0], [1], [0, 0, 1, 1], [], []>} : vector<2x64xf32>, vector<64x64xf32>, vector<2x64xf32> -> vector<2x64xf32>
    %89 = vector.extract_strided_slice %88 {offsets = [0, 0], sizes = [1, 64], strides = [1, 1]} : vector<2x64xf32> to vector<1x64xf32>
    %90 = vector.extract_strided_slice %88 {offsets = [1, 0], sizes = [1, 64], strides = [1, 1]} : vector<2x64xf32> to vector<1x64xf32>
    %cst_83 = arith.constant 0.001953125 : f32
    %91 = vector.broadcast %cst_83 : f32 to vector<1x64xf32>
    %92 = arith.mulf %89, %91 : vector<1x64xf32>
    %cst_84 = arith.constant 0.001953125 : f32
    %93 = vector.broadcast %cst_84 : f32 to vector<1x64xf32>
    %94 = arith.mulf %90, %93 : vector<1x64xf32>
    %95 = arith.mulf %92, %92 : vector<1x64xf32>
    %96 = arith.subf %94, %95 : vector<1x64xf32>
    %cst_85 = arith.constant 9.99999974E-6 : f32
    %97 = vector.broadcast %cst_85 : f32 to vector<1x64xf32>
    %98 = arith.addf %96, %97 : vector<1x64xf32>
    %99 = math.rsqrt %98 : vector<1x64xf32>
    %100 = arith.mulf %99, %79 : vector<1x64xf32>
    %101 = arith.mulf %92, %100 : vector<1x64xf32>
    %102 = arith.subf %80, %101 : vector<1x64xf32>
    %103 = vector.broadcast %100 : vector<1x64xf32> to vector<256x64xf32>
    %104 = arith.mulf %78, %103 : vector<256x64xf32>
    %105 = vector.broadcast %102 : vector<1x64xf32> to vector<256x64xf32>
    %106 = arith.addf %104, %105 : vector<256x64xf32>
    %cst_86 = arith.constant 3.000000e+00 : f32
    %107 = vector.broadcast %cst_86 : f32 to vector<256x64xf32>
    %108 = arith.addf %106, %107 : vector<256x64xf32>
    %cst_87 = arith.constant 0.000000e+00 : f32
    %cst_88 = arith.constant 6.000000e+00 : f32
    %109 = vector.broadcast %cst_87 : f32 to vector<256x64xf32>
    %110 = arith.maximumf %109, %108 : vector<256x64xf32>
    %111 = vector.broadcast %cst_88 : f32 to vector<256x64xf32>
    %112 = arith.minimumf %111, %110 : vector<256x64xf32>
    %113 = arith.mulf %106, %112 : vector<256x64xf32>
    %cst_89 = arith.constant 0.166666672 : f32
    %114 = vector.broadcast %cst_89 : f32 to vector<256x64xf32>
    %115 = arith.mulf %113, %114 : vector<256x64xf32>
    %116 = arith.truncf %115 : vector<256x64xf32> to vector<256x64xbf16>
    %c0_90 = arith.constant 0 : index
    %c0_91 = arith.constant 0 : index
    %117 = vector.load %arg3[%c0_90, %c0_91] : memref<64x128xbf16, #tpu.memory_space<vmem>>, vector<64x128xbf16>
    %cst_92 = arith.constant dense<0.000000e+00> : vector<256x128xf32>
    %118 = tpu.matmul %116, %117, %cst_92 {dimension_numbers = #tpu.dot_dimension_numbers<[1], [0], [0], [1], [0, 0, 1, 1], [], []>} : vector<256x64xbf16>, vector<64x128xbf16>, vector<256x128xf32> -> vector<256x128xf32>
    %119 = arith.addf %2, %118 : vector<256x128xf32>
    %120 = vector.shape_cast %119 : vector<256x128xf32> to vector<16x16x128xf32>
    %c0_93 = arith.constant 0 : index
    %c0_94 = arith.constant 0 : index
    %c0_95 = arith.constant 0 : index
    %c0_96 = arith.constant 0 : index
    %121 = vector.load %arg10[%c0_93, %c0_94, %c0_95, %c0_96] : memref<1x16x16x128xf32, #tpu.memory_space<vmem>>, vector<1x16x16x128xf32>
    %122 = vector.shape_cast %121 : vector<1x16x16x128xf32> to vector<16x16x128xf32>
    %123 = vector.shape_cast %120 : vector<16x16x128xf32> to vector<1x16x16x128xf32>
    tpu.vector_store %arg10[%c0_93, %c0_94, %c0_95, %c0_96], %123 {strides = array<i32>} : memref<1x16x16x128xf32, #tpu.memory_space<vmem>>, vector<1x16x16x128xf32>,
    return
  }
  func.func @transform_0(%arg0: i32) -> (i32, i32, i32, i32) {
    %c0_i32 = arith.constant 0 : i32
    %c0_i32_0 = arith.constant 0 : i32
    %c0_i32_1 = arith.constant 0 : i32
    %c0_i32_2 = arith.constant 0 : i32
    return %arg0, %c0_i32, %c0_i32_0, %c0_i32_1 : i32, i32, i32, i32
  }
  func.func @transform_1(%arg0: i32) -> (i32, i32) {
    %c0_i32 = arith.constant 0 : i32
    %c0_i32_0 = arith.constant 0 : i32
    %c0_i32_1 = arith.constant 0 : i32
    return %c0_i32, %c0_i32_0 : i32, i32
  }
  func.func @transform_2(%arg0: i32) -> (i32, i32) {
    %c0_i32 = arith.constant 0 : i32
    %c0_i32_0 = arith.constant 0 : i32
    %c0_i32_1 = arith.constant 0 : i32
    return %c0_i32, %c0_i32_0 : i32, i32
  }
  func.func @transform_3(%arg0: i32) -> (i32, i32) {
    %c0_i32 = arith.constant 0 : i32
    %c0_i32_0 = arith.constant 0 : i32
    %c0_i32_1 = arith.constant 0 : i32
    return %c0_i32, %c0_i32_0 : i32, i32
  }
  func.func @transform_4(%arg0: i32) -> (i32, i32) {
    %c0_i32 = arith.constant 0 : i32
    %c0_i32_0 = arith.constant 0 : i32
    %c0_i32_1 = arith.constant 0 : i32
    return %c0_i32, %c0_i32_0 : i32, i32
  }
  func.func @transform_5(%arg0: i32) -> (i32, i32) {
    %c0_i32 = arith.constant 0 : i32
    %c0_i32_0 = arith.constant 0 : i32
    %c0_i32_1 = arith.constant 0 : i32
    return %c0_i32, %c0_i32_0 : i32, i32
  }
  func.func @transform_6(%arg0: i32) -> (i32, i32) {
    %c0_i32 = arith.constant 0 : i32
    %c0_i32_0 = arith.constant 0 : i32
    %c0_i32_1 = arith.constant 0 : i32
    return %c0_i32, %c0_i32_0 : i32, i32
  }
  func.func @transform_7(%arg0: i32) -> (i32, i32) {
    %c0_i32 = arith.constant 0 : i32
    %c0_i32_0 = arith.constant 0 : i32
    %c0_i32_1 = arith.constant 0 : i32
    return %c0_i32, %c0_i32_0 : i32, i32
  }
  func.func @transform_8(%arg0: i32) -> (i32, i32) {
    %c0_i32 = arith.constant 0 : i32
    %c0_i32_0 = arith.constant 0 : i32
    %c0_i32_1 = arith.constant 0 : i32
    return %c0_i32, %c0_i32_0 : i32, i32
  }
  func.func @transform_9(%arg0: i32) -> (i32, i32, i32, i32) {
    %c0_i32 = arith.constant 0 : i32
    %c0_i32_0 = arith.constant 0 : i32
    %c0_i32_1 = arith.constant 0 : i32
    %c0_i32_2 = arith.constant 0 : i32
    return %arg0, %c0_i32, %c0_i32_0, %c0_i32_1 : i32, i32, i32, i32
  }
}

</mosaic_0001>

<llo_original>
// kernel: tpu_custom_call.1
$region0: #{tpu_custom_call.1}
  #allocation0 [shape = 'u32[]', space=smem, size = 0x4, offset = 0x4, fixed_abs, tag = 'smem constant byte address 0x4 - core index']
  #allocation1 [shape = 'u32[144,128]{1,0:T(1,128)}', space=vmem, size = 0x12000, scoped, tag = 'internal scratch']
  #allocation2 [shape = 'bf16[18,18,128]{2,1,0:T(8,128)(2,1)}', space=vmem, size = 0x1b000, scoped, tag = 'scratch operand']
  #allocation3 [shape = 'bf16[256,1152]{1,0:T(8,128)(2,1)}', space=vmem, size = 0x90000, scoped, tag = 'scratch operand']
  %s0 = inlined_call_operand.vmem [shape: f32[2,16,16,128], index: 0, kind: input, shape index: {}]
  %s1 = inlined_call_operand.vmem [shape: bf16[1152,64], index: 1, kind: input, shape index: {}]
  %s2 = inlined_call_operand.vmem [shape: bf16[64,128], index: 2, kind: input, shape index: {}]
  %s3 = inlined_call_operand.vmem [shape: f32[1,128], index: 3, kind: input, shape index: {}]
  %s4 = inlined_call_operand.vmem [shape: f32[1,128], index: 4, kind: input, shape index: {}]
  %s5 = inlined_call_operand.vmem [shape: f32[1,64], index: 5, kind: input, shape index: {}]
  %s6 = inlined_call_operand.vmem [shape: f32[1,64], index: 6, kind: input, shape index: {}]
  %s7 = inlined_call_operand.vmem [shape: f32[128,128], index: 7, kind: input, shape index: {}]
  %s8 = inlined_call_operand.vmem [shape: f32[64,64], index: 8, kind: input, shape index: {}]
  %s9 = inlined_call_operand.hbm [shape: f32[2,16,16,128], index: 9, kind: output, shape index: {}]
  %s10 = sld [smem:[#allocation0]]
  $region69: #{tpu_custom_call.1} parent=0
    _
  %s12 = ssub.s32 1, %s10
  %s13 = scalar_select 0, %s12, %s10
  $region1: #{tpu_custom_call.1} parent=0
    #allocation4 [shape = 'u8[262144]{0}', space=vmem, size = 0x40000, scoped, tag = 'output window, operand 0']
    #allocation5 [shape = 's32[2]{0}', space=sflag, size = 0x8, scoped, tag = 'scoped memory for tpu_custom_call.1']
    %14 = vsyncpa [#allocation5], 0
    %s15 = scalar_lea.sflag [#allocation5], 1
    %16 = vsyncpa %s15, 0
    loop: start=0, step=1, limit=4
    $region2: #{tpu_custom_call.1} parent=1 // loop_pre_header
      _
    $region3: #{tpu_custom_call.1} parent=1 // loop_header
      %s18 = sphi 0, %s22
      %p19 = scmp.ge.s32.totalorder %s18, 4
      %s28 = sphi 0, %s30
      %s31 = sphi 0, %s28
      %s32 = sphi 0, %s31
      %s48 = sphi 0, %s32
      %s52 = sphi 0, %s52
      %s54 = sphi 0, %s52
      %s55 = sphi 0, %s54
      %s69 = sphi 0, %s55
      %s73 = sphi 0, %s73
      %s75 = sphi 0, %s73
      %s76 = sphi 0, %s75
      %s90 = sphi 0, %s76
      %s94 = sphi 0, %s94
      %s96 = sphi 0, %s94
      %s97 = sphi 0, %s96
      %s111 = sphi 0, %s97
      %s115 = sphi 0, %s115
      %s117 = sphi 0, %s115
      %s118 = sphi 0, %s117
      %s132 = sphi 0, %s118
      %s136 = sphi 0, %s136
      %s138 = sphi 0, %s136
      %s139 = sphi 0, %s138
      %s153 = sphi 0, %s139
      %s157 = sphi 0, %s157
      %s159 = sphi 0, %s157
      %s160 = sphi 0, %s159
      %s174 = sphi 0, %s160
      %s178 = sphi 0, %s178
      %s180 = sphi 0, %s178
      %s181 = sphi 0, %s180
      %s195 = sphi 0, %s181
      %s199 = sphi 0, %s199
      %s201 = sphi 0, %s199
      %s202 = sphi 0, %s201
      %s216 = sphi 0, %s202
      %s222 = sphi 0, %s224
      %s225 = sphi 0, %s222
      %s226 = sphi 0, %s225
      %s242 = sphi 0, %s226
    $region4: #{tpu_custom_call.1} parent=1 // loop_header_branch
      %21 = sbr.rel (%p19) target = $region8
    $region5: #{tpu_custom_call.1} parent=1 // loop_body
      %s23 = ssub.s32 %s18, 1
      %s24 = ssub.s32 %s18, 2
      %s25 = sadd.s32 %s18, 1
      %s26 = ssub.s32 %s18, %s25
      %p27 = scmp.eq.s32.totalorder %s26, 0
      %s29 = sadd.s32 %s28, 1
      %s30 = scalar_select %p27, %s28, %s29
      %p33 = pneg %p27
      %p34 = scmp.eq.s32.totalorder %s18, 1
      %p35 = por %p33, %p34
      %p36 = scmp.ne.s32.totalorder %s28, %s31
      %p37 = scmp.eq.s32.totalorder %s18, 0
      %p38 = por %p36, %p37
      %p39 = scmp.ne.s32.totalorder %s28, %s31
      %p40 = scmp.eq.s32.totalorder %s23, 1
      %p41 = por %p39, %p40
      %p42 = scmp.ne.s32.totalorder %s31, %s32
      %p43 = scmp.eq.s32.totalorder %s23, 0
      %p44 = por %p42, %p43
      %p45 = scmp.ne.s32.totalorder %s31, %s32
      %p46 = scmp.eq.s32.totalorder %s24, 1
      %p47 = por %p45, %p46
      %p49 = scmp.ne.s32.totalorder %s32, %s48
      %p50 = scmp.eq.s32.totalorder %s24, 0
      %p51 = por %p49, %p50
      %s53 = sadd.s32 %s52, 1
      %p56 = scmp.eq.s32.totalorder %s18, 1
      %p57 = scmp.ne.s32.totalorder %s52, %s54
      %p58 = scmp.eq.s32.totalorder %s18, 0
      %p59 = por %p57, %p58
      %p60 = scmp.ne.s32.totalorder %s52, %s54
      %p61 = scmp.eq.s32.totalorder %s23, 1
      %p62 = por %p60, %p61
      %p63 = scmp.ne.s32.totalorder %s54, %s55
      %p64 = scmp.eq.s32.totalorder %s23, 0
      %p65 = por %p63, %p64
      %p66 = scmp.ne.s32.totalorder %s54, %s55
      %p67 = scmp.eq.s32.totalorder %s24, 1
      %p68 = por %p66, %p67
      %p70 = scmp.ne.s32.totalorder %s55, %s69
      %p71 = scmp.eq.s32.totalorder %s24, 0
      %p72 = por %p70, %p71
      %s74 = sadd.s32 %s73, 1
      %p77 = scmp.eq.s32.totalorder %s18, 1
      %p78 = scmp.ne.s32.totalorder %s73, %s75
      %p79 = scmp.eq.s32.totalorder %s18, 0
      %p80 = por %p78, %p79
      %p81 = scmp.ne.s32.totalorder %s73, %s75
      %p82 = scmp.eq.s32.totalorder %s23, 1
      %p83 = por %p81, %p82
      %p84 = scmp.ne.s32.totalorder %s75, %s76
      %p85 = scmp.eq.s32.totalorder %s23, 0
      %p86 = por %p84, %p85
      %p87 = scmp.ne.s32.totalorder %s75, %s76
      %p88 = scmp.eq.s32.totalorder %s24, 1
      %p89 = por %p87, %p88
      %p91 = scmp.ne.s32.totalorder %s76, %s90
      %p92 = scmp.eq.s32.totalorder %s24, 0
      %p93 = por %p91, %p92
      %s95 = sadd.s32 %s94, 1
      %p98 = scmp.eq.s32.totalorder %s18, 1
      %p99 = scmp.ne.s32.totalorder %s94, %s96
      %p100 = scmp.eq.s32.totalorder %s18, 0
      %p101 = por %p99, %p100
      %p102 = scmp.ne.s32.totalorder %s94, %s96
      %p103 = scmp.eq.s32.totalorder %s23, 1
      %p104 = por %p102, %p103
      %p105 = scmp.ne.s32.totalorder %s96, %s97
      %p106 = scmp.eq.s32.totalorder %s23, 0
      %p107 = por %p105, %p106
      %p108 = scmp.ne.s32.totalorder %s96, %s97
      %p109 = scmp.eq.s32.totalorder %s24, 1
      %p110 = por %p108, %p109
      %p112 = scmp.ne.s32.totalorder %s97, %s111
      %p113 = scmp.eq.s32.totalorder %s24, 0
      %p114 = por %p112, %p113
      %s116 = sadd.s32 %s115, 1
      %p119 = scmp.eq.s32.totalorder %s18, 1
      %p120 = scmp.ne.s32.totalorder %s115, %s117
      %p121 = scmp.eq.s32.totalorder %s18, 0
      %p122 = por %p120, %p121
      %p123 = scmp.ne.s32.totalorder %s115, %s117
      %p124 = scmp.eq.s32.totalorder %s23, 1
      %p125 = por %p123, %p124
      %p126 = scmp.ne.s32.totalorder %s117, %s118
      %p127 = scmp.eq.s32.totalorder %s23, 0
      %p128 = por %p126, %p127
      %p129 = scmp.ne.s32.totalorder %s117, %s118
      %p130 = scmp.eq.s32.totalorder %s24, 1
      %p131 = por %p129, %p130
      %p133 = scmp.ne.s32.totalorder %s118, %s132
      %p134 = scmp.eq.s32.totalorder %s24, 0
      %p135 = por %p133, %p134
      %s137 = sadd.s32 %s136, 1
      %p140 = scmp.eq.s32.totalorder %s18, 1
      %p141 = scmp.ne.s32.totalorder %s136, %s138
      %p142 = scmp.eq.s32.totalorder %s18, 0
      %p143 = por %p141, %p142
      %p144 = scmp.ne.s32.totalorder %s136, %s138
      %p145 = scmp.eq.s32.totalorder %s23, 1
      %p146 = por %p144, %p145
      %p147 = scmp.ne.s32.totalorder %s138, %s139
      %p148 = scmp.eq.s32.totalorder %s23, 0
      %p149 = por %p147, %p148
      %p150 = scmp.ne.s32.totalorder %s138, %s139
      %p151 = scmp.eq.s32.totalorder %s24, 1
      %p152 = por %p150, %p151
      %p154 = scmp.ne.s32.totalorder %s139, %s153
      %p155 = scmp.eq.s32.totalorder %s24, 0
      %p156 = por %p154, %p155
      %s158 = sadd.s32 %s157, 1
      %p161 = scmp.eq.s32.totalorder %s18, 1
      %p162 = scmp.ne.s32.totalorder %s157, %s159
      %p163 = scmp.eq.s32.totalorder %s18, 0
      %p164 = por %p162, %p163
      %p165 = scmp.ne.s32.totalorder %s157, %s159
      %p166 = scmp.eq.s32.totalorder %s23, 1
      %p167 = por %p165, %p166
      %p168 = scmp.ne.s32.totalorder %s159, %s160
      %p169 = scmp.eq.s32.totalorder %s23, 0
      %p170 = por %p168, %p169
      %p171 = scmp.ne.s32.totalorder %s159, %s160
      %p172 = scmp.eq.s32.totalorder %s24, 1
      %p173 = por %p171, %p172
      %p175 = scmp.ne.s32.totalorder %s160, %s174
      %p176 = scmp.eq.s32.totalorder %s24, 0
      %p177 = por %p175, %p176
      %s179 = sadd.s32 %s178, 1
      %p182 = scmp.eq.s32.totalorder %s18, 1
      %p183 = scmp.ne.s32.totalorder %s178, %s180
      %p184 = scmp.eq.s32.totalorder %s18, 0
      %p185 = por %p183, %p184
      %p186 = scmp.ne.s32.totalorder %s178, %s180
      %p187 = scmp.eq.s32.totalorder %s23, 1
      %p188 = por %p186, %p187
      %p189 = scmp.ne.s32.totalorder %s180, %s181
      %p190 = scmp.eq.s32.totalorder %s23, 0
      %p191 = por %p189, %p190
      %p192 = scmp.ne.s32.totalorder %s180, %s181
      %p193 = scmp.eq.s32.totalorder %s24, 1
      %p194 = por %p192, %p193
      %p196 = scmp.ne.s32.totalorder %s181, %s195
      %p197 = scmp.eq.s32.totalorder %s24, 0
      %p198 = por %p196, %p197
      %s200 = sadd.s32 %s199, 1
      %p203 = scmp.eq.s32.totalorder %s18, 1
      %p204 = scmp.ne.s32.totalorder %s199, %s201
      %p205 = scmp.eq.s32.totalorder %s18, 0
      %p206 = por %p204, %p205
      %p207 = scmp.ne.s32.totalorder %s199, %s201
      %p208 = scmp.eq.s32.totalorder %s23, 1
      %p209 = por %p207, %p208
      %p210 = scmp.ne.s32.totalorder %s201, %s202
      %p211 = scmp.eq.s32.totalorder %s23, 0
      %p212 = por %p210, %p211
      %p213 = scmp.ne.s32.totalorder %s201, %s202
      %p214 = scmp.eq.s32.totalorder %s24, 1
      %p215 = por %p213, %p214
      %p217 = scmp.ne.s32.totalorder %s202, %s216
      %p218 = scmp.eq.s32.totalorder %s24, 0
      %p219 = por %p217, %p218
      %s220 = ssub.s32 %s18, %s25
      %p221 = scmp.eq.s32.totalorder %s220, 0
      %s223 = sadd.s32 %s222, 1
      %s224 = scalar_select %p221, %s222, %s223
      %p227 = pneg %p221
      %p228 = scmp.eq.s32.totalorder %s18, 1
      %p229 = por %p227, %p228
      %p230 = scmp.ne.s32.totalorder %s222, %s225
      %p231 = scmp.eq.s32.totalorder %s18, 0
      %p232 = por %p230, %p231
      %p233 = scmp.ne.s32.totalorder %s222, %s225
      %p234 = scmp.eq.s32.totalorder %s23, 1
      %p235 = por %p233, %p234
      %p236 = scmp.ne.s32.totalorder %s225, %s226
      %p237 = scmp.eq.s32.totalorder %s23, 0
      %p238 = por %p236, %p237
      %p239 = scmp.ne.s32.totalorder %s225, %s226
      %p240 = scmp.eq.s32.totalorder %s24, 1
      %p241 = por %p239, %p240
      %p243 = scmp.ne.s32.totalorder %s226, %s242
      %p244 = scmp.eq.s32.totalorder %s24, 0
      %p245 = por %p243, %p244
      %p246 = scmp.le.s32.totalorder 1, %s18
      %p247 = scmp.lt.s32.totalorder %s18, 3
      %p248 = pnand %p246, %p247
      %p249 = pneg %p248
      // Predicated region
      $region9: #{tpu_custom_call.1} parent=5 // pred_check
        _
      $region10: #{tpu_custom_call.1} parent=5 // pred_check_branch
        %251 = sbr.rel (%p248) target = $region12
      $region11: #{tpu_custom_call.1} parent=5 // pred_region
        %s252 = ssub.s32 %s18, 1
        // Predicated region
        $region13: #{tpu_custom_call.1} parent=11 // pred_check
          %p253 = pneg %p65
        $region14: #{tpu_custom_call.1} parent=11 // pred_check_branch
          %255 = sbr.rel (%p253) target = $region16
        $region15: #{tpu_custom_call.1} parent=11 // pred_region
          _
        $region16: #{tpu_custom_call.1} parent=11 // pred_fallthru
          _
        // Predicated region
        $region17: #{tpu_custom_call.1} parent=11 // pred_check
          %p256 = pneg %p86
        $region18: #{tpu_custom_call.1} parent=11 // pred_check_branch
          %258 = sbr.rel (%p256) target = $region20
        $region19: #{tpu_custom_call.1} parent=11 // pred_region
          _
        $region20: #{tpu_custom_call.1} parent=11 // pred_fallthru
          _
        // Predicated region
        $region21: #{tpu_custom_call.1} parent=11 // pred_check
          %p259 = pneg %p107
        $region22: #{tpu_custom_call.1} parent=11 // pred_check_branch
          %261 = sbr.rel (%p259) target = $region24
        $region23: #{tpu_custom_call.1} parent=11 // pred_region
          _
        $region24: #{tpu_custom_call.1} parent=11 // pred_fallthru
          _
        // Predicated region
        $region25: #{tpu_custom_call.1} parent=11 // pred_check
          %p262 = pneg %p128
        $region26: #{tpu_custom_call.1} parent=11 // pred_check_branch
          %264 = sbr.rel (%p262) target = $region28
        $region27: #{tpu_custom_call.1} parent=11 // pred_region
          _
        $region28: #{tpu_custom_call.1} parent=11 // pred_fallthru
          _
        // Predicated region
        $region29: #{tpu_custom_call.1} parent=11 // pred_check
          %p265 = pneg %p149
        $region30: #{tpu_custom_call.1} parent=11 // pred_check_branch
          %267 = sbr.rel (%p265) target = $region32
        $region31: #{tpu_custom_call.1} parent=11 // pred_region
          _
        $region32: #{tpu_custom_call.1} parent=11 // pred_fallthru
          _
        // Predicated region
        $region33: #{tpu_custom_call.1} parent=11 // pred_check
          %p268 = pneg %p170
        $region34: #{tpu_custom_call.1} parent=11 // pred_check_branch
          %270 = sbr.rel (%p268) target = $region36
        $region35: #{tpu_custom_call.1} parent=11 // pred_region
          _
        $region36: #{tpu_custom_call.1} parent=11 // pred_fallthru
          _
        // Predicated region
        $region37: #{tpu_custom_call.1} parent=11 // pred_check
          %p271 = pneg %p191
        $region38: #{tpu_custom_call.1} parent=11 // pred_check_branch
          %273 = sbr.rel (%p271) target = $region40
        $region39: #{tpu_custom_call.1} parent=11 // pred_region
          _
        $region40: #{tpu_custom_call.1} parent=11 // pred_fallthru
          _
        // Predicated region
        $region41: #{tpu_custom_call.1} parent=11 // pred_check
          %p274 = pneg %p212
        $region42: #{tpu_custom_call.1} parent=11 // pred_check_branch
          %276 = sbr.rel (%p274) target = $region44
        $region43: #{tpu_custom_call.1} parent=11 // pred_region
          _
        $region44: #{tpu_custom_call.1} parent=11 // pred_fallthru
          _
      $region12: #{tpu_custom_call.1} parent=5 // pred_fallthru
        _
      %p277 = scmp.lt.s32.totalorder %s18, 2
      // Predicated region
      $region45: #{tpu_custom_call.1} parent=5 // pred_check
        %p278 = pneg %p277
      $region46: #{tpu_custom_call.1} parent=5 // pred_check_branch
        %280 = sbr.rel (%p278) target = $region48
      $region47: #{tpu_custom_call.1} parent=5 // pred_region
        // Predicated region
        $region49: #{tpu_custom_call.1} parent=47 // pred_check
          %p281 = pneg %p38
        $region50: #{tpu_custom_call.1} parent=47 // pred_check_branch
          %283 = sbr.rel (%p281) target = $region52
        $region51: #{tpu_custom_call.1} parent=47 // pred_region
          %p284 = scmp.lt.s32.totalorder %s18, 1
          %s285 = scalar_select %p284, %s18, 1
          %s286 = smul.addr %s285, 32
          %s287 = smul.addr %s286, 8
          %s288 = scalar_lea.vmem %s0, %s287
        $region52: #{tpu_custom_call.1} parent=47 // pred_fallthru
          _
      $region48: #{tpu_custom_call.1} parent=5 // pred_fallthru
        _
      %p289 = scmp.le.s32.totalorder 1, %s18
      %p290 = scmp.lt.s32.totalorder %s18, 3
      %p291 = pnand %p289, %p290
      %p292 = pneg %p291
      // Predicated region
      $region53: #{tpu_custom_call.1} parent=5 // pred_check
        _
      $region54: #{tpu_custom_call.1} parent=5 // pred_check_branch
        %294 = sbr.rel (%p291) target = $region56
      $region55: #{tpu_custom_call.1} parent=5 // pred_region
        %s295 = ssub.s32 %s18, 1
        %p296 = scmp.lt.s32.totalorder %s23, 1
        %s297 = scalar_select %p296, %s23, 1
        %s298 = smul.addr %s297, 32
        %s299 = smul.addr %s298, 8
        %s300 = scalar_lea.vmem %s0, %s299
        %p301 = pneg %p44
        %p302 = pneg %p41
        %p303 = pneg %p65
        %p304 = pneg %p62
        %p305 = pneg %p86
        %p306 = pneg %p83
        %p307 = pneg %p107
        %p308 = pneg %p104
        %p309 = pneg %p128
        %p310 = pneg %p125
        %p311 = pneg %p149
        %p312 = pneg %p146
        %p313 = pneg %p170
        %p314 = pneg %p167
        %p315 = pneg %p191
        %p316 = pneg %p188
        %p317 = pneg %p212
        %p318 = pneg %p209
        %p319 = pneg %p238
        %p320 = pneg %p235
        %s321 = sand.u32 %s225, 1
        %s322 = scalar_lea.sflag [#allocation5], %s321
        %s323 = sand.u32 %s225, 1
        %s324 = smul.addr %s323, 256
        %s325 = scalar_lea.vmem [#allocation4], %s324
        %p326 = scmp.lt.s32.totalorder %s23, 1
        %s327 = scalar_select %p326, %s23, 1
        %s328 = smul.addr %s327, 32
        %s329 = smul.addr %s328, 8
        %s330 = scalar_lea.vmem %s0, %s329
        %v332 = vld [vmem:[%s330] sm:$0xff]
        %v333 = vld [vmem:[%s330 + $0x8] sm:$0xff]
        %v334 = vld [vmem:[%s330 + $0x10] sm:$0xff]
        %v335 = vld [vmem:[%s330 + $0x18] sm:$0xff]
        %v336 = vld [vmem:[%s330 + $0x20] sm:$0xff]
        %v337 = vld [vmem:[%s330 + $0x28] sm:$0xff]
        %v338 = vld [vmem:[%s330 + $0x30] sm:$0xff]
        %v339 = vld [vmem:[%s330 + $0x38] sm:$0xff]
        %v340 = vld [vmem:[%s330 + $0x40] sm:$0xff]
        %v341 = vld [vmem:[%s330 + $0x48] sm:$0xff]
        %v342 = vld [vmem:[%s330 + $0x50] sm:$0xff]
        %v343 = vld [vmem:[%s330 + $0x58] sm:$0xff]
        %v344 = vld [vmem:[%s330 + $0x60] sm:$0xff]
        %v345 = vld [vmem:[%s330 + $0x68] sm:$0xff]
        %v346 = vld [vmem:[%s330 + $0x70] sm:$0xff]
        %v347 = vld [vmem:[%s330 + $0x78] sm:$0xff]
        %v348 = vld [vmem:[%s330 + $0x80] sm:$0xff]
        %v349 = vld [vmem:[%s330 + $0x88] sm:$0xff]
        %v350 = vld [vmem:[%s330 + $0x90] sm:$0xff]
        %v351 = vld [vmem:[%s330 + $0x98] sm:$0xff]
        %v352 = vld [vmem:[%s330 + $0xa0] sm:$0xff]
        %v353 = vld [vmem:[%s330 + $0xa8] sm:$0xff]
        %v354 = vld [vmem:[%s330 + $0xb0] sm:$0xff]
        %v355 = vld [vmem:[%s330 + $0xb8] sm:$0xff]
        %v356 = vld [vmem:[%s330 + $0xc0] sm:$0xff]
        %v357 = vld [vmem:[%s330 + $0xc8] sm:$0xff]
        %v358 = vld [vmem:[%s330 + $0xd0] sm:$0xff]
        %v359 = vld [vmem:[%s330 + $0xd8] sm:$0xff]
        %v360 = vld [vmem:[%s330 + $0xe0] sm:$0xff]
        %v361 = vld [vmem:[%s330 + $0xe8] sm:$0xff]
        %v362 = vld [vmem:[%s330 + $0xf0] sm:$0xff]
        %v363 = vld [vmem:[%s330 + $0xf8] sm:$0xff]
        %v364 = vld [vmem:[%s3] sm:$0x1]
        %v365 = vld [vmem:[%s4] sm:$0x1]
        %v366 = vadd.f32 %v332, %v333
        %v367 = vadd.f32 %v366, %v334
        %v368 = vadd.f32 %v367, %v335
        %v369 = vadd.f32 %v368, %v336
        %v370 = vadd.f32 %v369, %v337
        %v371 = vadd.f32 %v370, %v338
        %v372 = vadd.f32 %v371, %v339
        %v373 = vadd.f32 %v372, %v340
        %v374 = vadd.f32 %v373, %v341
        %v375 = vadd.f32 %v374, %v342
        %v376 = vadd.f32 %v375, %v343
        %v377 = vadd.f32 %v376, %v344
        %v378 = vadd.f32 %v377, %v345
        %v379 = vadd.f32 %v378, %v346
        %v380 = vadd.f32 %v379, %v347
        %v381 = vadd.f32 %v380, %v348
        %v382 = vadd.f32 %v381, %v349
        %v383 = vadd.f32 %v382, %v350
        %v384 = vadd.f32 %v383, %v351
        %v385 = vadd.f32 %v384, %v352
        %v386 = vadd.f32 %v385, %v353
        %v387 = vadd.f32 %v386, %v354
        %v388 = vadd.f32 %v387, %v355
        %v389 = vadd.f32 %v388, %v356
        %v390 = vadd.f32 %v389, %v357
        %v391 = vadd.f32 %v390, %v358
        %v392 = vadd.f32 %v391, %v359
        %v393 = vadd.f32 %v392, %v360
        %v394 = vadd.f32 %v393, %v361
        %v395 = vadd.f32 %v394, %v362
        %v396 = vadd.f32 %v395, %v363
        %v397 = vrot.slane %v396, 4
        %v398 = vadd.f32 %v396, %v397
        %v399 = vrot.slane %v398, 2
        %v400 = vadd.f32 %v398, %v399
        %v401 = vrot.slane %v400, 1
        %v402 = vadd.f32 %v400, %v401
        %v403 = vmul.f32 %v332, %v332
        %v404 = vmul.f32 %v333, %v333
        %v405 = vmul.f32 %v334, %v334
        %v406 = vmul.f32 %v335, %v335
        %v407 = vmul.f32 %v336, %v336
        %v408 = vmul.f32 %v337, %v337
        %v409 = vmul.f32 %v338, %v338
        %v410 = vmul.f32 %v339, %v339
        %v411 = vmul.f32 %v340, %v340
        %v412 = vmul.f32 %v341, %v341
        %v413 = vmul.f32 %v342, %v342
        %v414 = vmul.f32 %v343, %v343
        %v415 = vmul.f32 %v344, %v344
        %v416 = vmul.f32 %v345, %v345
        %v417 = vmul.f32 %v346, %v346
        %v418 = vmul.f32 %v347, %v347
        %v419 = vmul.f32 %v348, %v348
        %v420 = vmul.f32 %v349, %v349
        %v421 = vmul.f32 %v350, %v350
        %v422 = vmul.f32 %v351, %v351
        %v423 = vmul.f32 %v352, %v352
        %v424 = vmul.f32 %v353, %v353
        %v425 = vmul.f32 %v354, %v354
        %v426 = vmul.f32 %v355, %v355
        %v427 = vmul.f32 %v356, %v356
        %v428 = vmul.f32 %v357, %v357
        %v429 = vmul.f32 %v358, %v358
        %v430 = vmul.f32 %v359, %v359
        %v431 = vmul.f32 %v360, %v360
        %v432 = vmul.f32 %v361, %v361
        %v433 = vmul.f32 %v362, %v362
        %v434 = vmul.f32 %v363, %v363
        %v435 = vadd.f32 %v403, %v404
        %v436 = vadd.f32 %v435, %v405
        %v437 = vadd.f32 %v436, %v406
        %v438 = vadd.f32 %v437, %v407
        %v439 = vadd.f32 %v438, %v408
        %v440 = vadd.f32 %v439, %v409
        %v441 = vadd.f32 %v440, %v410
        %v442 = vadd.f32 %v441, %v411
        %v443 = vadd.f32 %v442, %v412
        %v444 = vadd.f32 %v443, %v413
        %v445 = vadd.f32 %v444, %v414
        %v446 = vadd.f32 %v445, %v415
        %v447 = vadd.f32 %v446, %v416
        %v448 = vadd.f32 %v447, %v417
        %v449 = vadd.f32 %v448, %v418
        %v450 = vadd.f32 %v449, %v419
        %v451 = vadd.f32 %v450, %v420
        %v452 = vadd.f32 %v451, %v421
        %v453 = vadd.f32 %v452, %v422
        %v454 = vadd.f32 %v453, %v423
        %v455 = vadd.f32 %v454, %v424
        %v456 = vadd.f32 %v455, %v425
        %v457 = vadd.f32 %v456, %v426
        %v458 = vadd.f32 %v457, %v427
        %v459 = vadd.f32 %v458, %v428
        %v460 = vadd.f32 %v459, %v429
        %v461 = vadd.f32 %v460, %v430
        %v462 = vadd.f32 %v461, %v431
        %v463 = vadd.f32 %v462, %v432
        %v464 = vadd.f32 %v463, %v433
        %v465 = vadd.f32 %v464, %v434
        %v466 = vrot.slane %v465, 4
        %v467 = vadd.f32 %v465, %v466
        %v468 = vrot.slane %v467, 2
        %v469 = vadd.f32 %v467, %v468
        %v470 = vrot.slane %v469, 1
        %v471 = vadd.f32 %v469, %v470
        %vm472 = vcmask 1040384
        %v473 = vsel %vm472, %v402, %v471
        %v474 = vld [vmem:[%s7] sm:$0xff]
        %v475 = vld [vmem:[%s7 + $0x8] sm:$0xff]
        %v476 = vld [vmem:[%s7 + $0x10] sm:$0xff]
        %v477 = vld [vmem:[%s7 + $0x18] sm:$0xff]
        %v478 = vld [vmem:[%s7 + $0x20] sm:$0xff]
        %v479 = vld [vmem:[%s7 + $0x28] sm:$0xff]
        %v480 = vld [vmem:[%s7 + $0x30] sm:$0xff]
        %v481 = vld [vmem:[%s7 + $0x38] sm:$0xff]
        %v482 = vld [vmem:[%s7 + $0x40] sm:$0xff]
        %v483 = vld [vmem:[%s7 + $0x48] sm:$0xff]
        %v484 = vld [vmem:[%s7 + $0x50] sm:$0xff]
        %v485 = vld [vmem:[%s7 + $0x58] sm:$0xff]
        %v486 = vld [vmem:[%s7 + $0x60] sm:$0xff]
        %v487 = vld [vmem:[%s7 + $0x68] sm:$0xff]
        %v488 = vld [vmem:[%s7 + $0x70] sm:$0xff]
        %v489 = vld [vmem:[%s7 + $0x78] sm:$0xff]
        %490 = vmatprep.subr.mxu0 0.0
        %491 = vmatpush1.msra.mxu0 %v489
        %492 = vmatprep.subr.mxu0 0.0
        %493 = vmatpush1.msra.mxu0 %v488
        %494 = vmatprep.subr.mxu0 0.0
        %495 = vmatpush1.msra.mxu0 %v487
        %496 = vmatprep.subr.mxu0 0.0
        %497 = vmatpush1.msra.mxu0 %v486
        %498 = vmatprep.subr.mxu0 0.0
        %499 = vmatpush1.msra.mxu0 %v485
        %500 = vmatprep.subr.mxu0 0.0
        %501 = vmatpush1.msra.mxu0 %v484
        %502 = vmatprep.subr.mxu0 0.0
        %503 = vmatpush1.msra.mxu0 %v483
        %504 = vmatprep.subr.mxu0 0.0
        %505 = vmatpush1.msra.mxu0 %v482
        %506 = vmatprep.subr.mxu0 0.0
        %507 = vmatpush1.msra.mxu0 %v481
        %508 = vmatprep.subr.mxu0 0.0
        %509 = vmatpush1.msra.mxu0 %v480
        %510 = vmatprep.subr.mxu0 0.0
        %511 = vmatpush1.msra.mxu0 %v479
        %512 = vmatprep.subr.mxu0 0.0
        %513 = vmatpush1.msra.mxu0 %v478
        %514 = vmatprep.subr.mxu0 0.0
        %515 = vmatpush1.msra.mxu0 %v477
        %516 = vmatprep.subr.mxu0 0.0
        %517 = vmatpush1.msra.mxu0 %v476
        %518 = vmatprep.subr.mxu0 0.0
        %519 = vmatpush1.msra.mxu0 %v475
        %520 = vmatprep.subr.mxu0 0.0
        %521 = vmatpush1.msra.mxu0 %v474
        %522 = vmatprep.subr.mxu0 0.0
        %523 = vmatpush2.msra.mxu0 0.0
        %524 = vmatprep.subr.mxu0 0.0
        %525 = vmatpush2.msra.mxu0 0.0
        %526 = vmatprep.subr.mxu0 0.0
        %527 = vmatpush2.msra.mxu0 0.0
        %528 = vmatprep.subr.mxu0 0.0
        %529 = vmatpush2.msra.mxu0 0.0
        %530 = vmatprep.subr.mxu0 0.0
        %531 = vmatpush2.msra.mxu0 0.0
        %532 = vmatprep.subr.mxu0 0.0
        %533 = vmatpush2.msra.mxu0 0.0
        %534 = vmatprep.subr.mxu0 0.0
        %535 = vmatpush2.msra.mxu0 0.0
        %536 = vmatprep.subr.mxu0 0.0
        %537 = vmatpush2.msra.mxu0 0.0
        %538 = vmatprep.subr.mxu0 0.0
        %539 = vmatpush2.msra.mxu0 0.0
        %540 = vmatprep.subr.mxu0 0.0
        %541 = vmatpush2.msra.mxu0 0.0
        %542 = vmatprep.subr.mxu0 0.0
        %543 = vmatpush2.msra.mxu0 0.0
        %544 = vmatprep.subr.mxu0 0.0
        %545 = vmatpush2.msra.mxu0 0.0
        %546 = vmatprep.subr.mxu0 0.0
        %547 = vmatpush2.msra.mxu0 0.0
        %548 = vmatprep.subr.mxu0 0.0
        %549 = vmatpush2.msra.mxu0 0.0
        %550 = vmatprep.subr.mxu0 0.0
        %551 = vmatpush2.msra.mxu0 0.0
        %552 = vmatprep.subr.mxu0 0.0
        %553 = vmatpush2.msra.mxu0 0.0
        %554 = vmatprep.mubr.f32.mxu0 0.0
        %555 = vmatmul.mubr.f32.gmra.mxu0 %v473
        %v556 = vpop.f32.mrf.mxu0
        %v557 = vadd.f32 0.0, %v556
        %v558 = vpop.f32.mrf.mxu0
        %559 = vdwg.mxu0
        %v560 = vmul.f32 %v557, 0.0009765625
        %v561 = vmul.f32 %v560, %v560
        %v563 = vrot.slane %v561, 7
        %v565 = vsub.f32 %v560, %v563
        %v566 = vadd.f32 %v565, 1e-05
        %v567 = vrsqrt.pop %v566
        %v569 = vlaneseq
        %v570 = vshrl.u32 %v569, 7
        %v571 = vsub.s32 0, %v570
        %v572 = vrot.slane %v364, %v571
        %v574 = vmul.f32 %v567, %v572
        %v576 = vrot.slane %v574, 1
        %v578 = vmul.f32 %v560, %v576
        %v579 = vsub.f32 %v365, %v578
        %v580 = vlaneseq
        %v581 = vshrl.u32 %v580, 7
        %v582 = vsub.s32 1, %v581
        %v583 = vrot.slane %v574, %v582
        %v584 = vmul.f32 %v332, %v583
        %v585 = vmul.f32 %v333, %v583
        %v586 = vmul.f32 %v334, %v583
        %v587 = vmul.f32 %v335, %v583
        %v588 = vmul.f32 %v336, %v583
        %v589 = vmul.f32 %v337, %v583
        %v590 = vmul.f32 %v338, %v583
        %v591 = vmul.f32 %v339, %v583
        %v592 = vmul.f32 %v340, %v583
        %v593 = vmul.f32 %v341, %v583
        %v594 = vmul.f32 %v342, %v583
        %v595 = vmul.f32 %v343, %v583
        %v596 = vmul.f32 %v344, %v583
        %v597 = vmul.f32 %v345, %v583
        %v598 = vmul.f32 %v346, %v583
        %v599 = vmul.f32 %v347, %v583
        %v600 = vmul.f32 %v348, %v583
        %v601 = vmul.f32 %v349, %v583
        %v602 = vmul.f32 %v350, %v583
        %v603 = vmul.f32 %v351, %v583
        %v604 = vmul.f32 %v352, %v583
        %v605 = vmul.f32 %v353, %v583
        %v606 = vmul.f32 %v354, %v583
        %v607 = vmul.f32 %v355, %v583
        %v608 = vmul.f32 %v356, %v583
        %v609 = vmul.f32 %v357, %v583
        %v610 = vmul.f32 %v358, %v583
        %v611 = vmul.f32 %v359, %v583
        %v612 = vmul.f32 %v360, %v583
        %v613 = vmul.f32 %v361, %v583
        %v614 = vmul.f32 %v362, %v583
        %v615 = vmul.f32 %v363, %v583
        %v617 = vlaneseq
        %v618 = vshrl.u32 %v617, 7
        %v619 = vsub.s32 0, %v618
        %v620 = vrot.slane %v579, %v619
        %v622 = vadd.f32 %v584, %v620
        %v623 = vadd.f32 %v585, %v620
        %v624 = vadd.f32 %v586, %v620
        %v625 = vadd.f32 %v587, %v620
        %v626 = vadd.f32 %v588, %v620
        %v627 = vadd.f32 %v589, %v620
        %v628 = vadd.f32 %v590, %v620
        %v629 = vadd.f32 %v591, %v620
        %v630 = vadd.f32 %v592, %v620
        %v631 = vadd.f32 %v593, %v620
        %v632 = vadd.f32 %v594, %v620
        %v633 = vadd.f32 %v595, %v620
        %v634 = vadd.f32 %v596, %v620
        %v635 = vadd.f32 %v597, %v620
        %v636 = vadd.f32 %v598, %v620
        %v637 = vadd.f32 %v599, %v620
        %v638 = vadd.f32 %v600, %v620
        %v639 = vadd.f32 %v601, %v620
        %v640 = vadd.f32 %v602, %v620
        %v641 = vadd.f32 %v603, %v620
        %v642 = vadd.f32 %v604, %v620
        %v643 = vadd.f32 %v605, %v620
        %v644 = vadd.f32 %v606, %v620
        %v645 = vadd.f32 %v607, %v620
        %v646 = vadd.f32 %v608, %v620
        %v647 = vadd.f32 %v609, %v620
        %v648 = vadd.f32 %v610, %v620
        %v649 = vadd.f32 %v611, %v620
        %v650 = vadd.f32 %v612, %v620
        %v651 = vadd.f32 %v613, %v620
        %v652 = vadd.f32 %v614, %v620
        %v653 = vadd.f32 %v615, %v620
        %v654 = vadd.f32 %v622, 3.0
        %v655 = vadd.f32 %v623, 3.0
        %v656 = vadd.f32 %v624, 3.0
        %v657 = vadd.f32 %v625, 3.0
        %v658 = vadd.f32 %v626, 3.0
        %v659 = vadd.f32 %v627, 3.0
        %v660 = vadd.f32 %v628, 3.0
        %v661 = vadd.f32 %v629, 3.0
        %v662 = vadd.f32 %v630, 3.0
        %v663 = vadd.f32 %v631, 3.0
        %v664 = vadd.f32 %v632, 3.0
        %v665 = vadd.f32 %v633, 3.0
        %v666 = vadd.f32 %v634, 3.0
        %v667 = vadd.f32 %v635, 3.0
        %v668 = vadd.f32 %v636, 3.0
        %v669 = vadd.f32 %v637, 3.0
        %v670 = vadd.f32 %v638, 3.0
        %v671 = vadd.f32 %v639, 3.0
        %v672 = vadd.f32 %v640, 3.0
        %v673 = vadd.f32 %v641, 3.0
        %v674 = vadd.f32 %v642, 3.0
        %v675 = vadd.f32 %v643, 3.0
        %v676 = vadd.f32 %v644, 3.0
        %v677 = vadd.f32 %v645, 3.0
        %v678 = vadd.f32 %v646, 3.0
        %v679 = vadd.f32 %v647, 3.0
        %v680 = vadd.f32 %v648, 3.0
        %v681 = vadd.f32 %v649, 3.0
        %v682 = vadd.f32 %v650, 3.0
        %v683 = vadd.f32 %v651, 3.0
        %v684 = vadd.f32 %v652, 3.0
        %v685 = vadd.f32 %v653, 3.0
        %v686 = vmax.f32 %v654, 0.0
        %v687 = vmax.f32 %v655, 0.0
        %v688 = vmax.f32 %v656, 0.0
        %v689 = vmax.f32 %v657, 0.0
        %v690 = vmax.f32 %v658, 0.0
        %v691 = vmax.f32 %v659, 0.0
        %v692 = vmax.f32 %v660, 0.0
        %v693 = vmax.f32 %v661, 0.0
        %v694 = vmax.f32 %v662, 0.0
        %v695 = vmax.f32 %v663, 0.0
        %v696 = vmax.f32 %v664, 0.0
        %v697 = vmax.f32 %v665, 0.0
        %v698 = vmax.f32 %v666, 0.0
        %v699 = vmax.f32 %v667, 0.0
        %v700 = vmax.f32 %v668, 0.0
        %v701 = vmax.f32 %v669, 0.0
        %v702 = vmax.f32 %v670, 0.0
        %v703 = vmax.f32 %v671, 0.0
        %v704 = vmax.f32 %v672, 0.0
        %v705 = vmax.f32 %v673, 0.0
        %v706 = vmax.f32 %v674, 0.0
        %v707 = vmax.f32 %v675, 0.0
        %v708 = vmax.f32 %v676, 0.0
        %v709 = vmax.f32 %v677, 0.0
        %v710 = vmax.f32 %v678, 0.0
        %v711 = vmax.f32 %v679, 0.0
        %v712 = vmax.f32 %v680, 0.0
        %v713 = vmax.f32 %v681, 0.0
        %v714 = vmax.f32 %v682, 0.0
        %v715 = vmax.f32 %v683, 0.0
        %v716 = vmax.f32 %v684, 0.0
        %v717 = vmax.f32 %v685, 0.0
        %v718 = vmin.f32 %v686, 6.0
        %v719 = vmin.f32 %v687, 6.0
        %v720 = vmin.f32 %v688, 6.0
        %v721 = vmin.f32 %v689, 6.0
        %v722 = vmin.f32 %v690, 6.0
        %v723 = vmin.f32 %v691, 6.0
        %v724 = vmin.f32 %v692, 6.0
        %v725 = vmin.f32 %v693, 6.0
        %v726 = vmin.f32 %v694, 6.0
        %v727 = vmin.f32 %v695, 6.0
        %v728 = vmin.f32 %v696, 6.0
        %v729 = vmin.f32 %v697, 6.0
        %v730 = vmin.f32 %v698, 6.0
        %v731 = vmin.f32 %v699, 6.0
        %v732 = vmin.f32 %v700, 6.0
        %v733 = vmin.f32 %v701, 6.0
        %v734 = vmin.f32 %v702, 6.0
        %v735 = vmin.f32 %v703, 6.0
        %v736 = vmin.f32 %v704, 6.0
        %v737 = vmin.f32 %v705, 6.0
        %v738 = vmin.f32 %v706, 6.0
        %v739 = vmin.f32 %v707, 6.0
        %v740 = vmin.f32 %v708, 6.0
        %v741 = vmin.f32 %v709, 6.0
        %v742 = vmin.f32 %v710, 6.0
        %v743 = vmin.f32 %v711, 6.0
        %v744 = vmin.f32 %v712, 6.0
        %v745 = vmin.f32 %v713, 6.0
        %v746 = vmin.f32 %v714, 6.0
        %v747 = vmin.f32 %v715, 6.0
        %v748 = vmin.f32 %v716, 6.0
        %v749 = vmin.f32 %v717, 6.0
        %v750 = vmul.f32 %v622, %v718
        %v751 = vmul.f32 %v623, %v719
        %v752 = vmul.f32 %v624, %v720
        %v753 = vmul.f32 %v625, %v721
        %v754 = vmul.f32 %v626, %v722
        %v755 = vmul.f32 %v627, %v723
        %v756 = vmul.f32 %v628, %v724
        %v757 = vmul.f32 %v629, %v725
        %v758 = vmul.f32 %v630, %v726
        %v759 = vmul.f32 %v631, %v727
        %v760 = vmul.f32 %v632, %v728
        %v761 = vmul.f32 %v633, %v729
        %v762 = vmul.f32 %v634, %v730
        %v763 = vmul.f32 %v635, %v731
        %v764 = vmul.f32 %v636, %v732
        %v765 = vmul.f32 %v637, %v733
        %v766 = vmul.f32 %v638, %v734
        %v767 = vmul.f32 %v639, %v735
        %v768 = vmul.f32 %v640, %v736
        %v769 = vmul.f32 %v641, %v737
        %v770 = vmul.f32 %v642, %v738
        %v771 = vmul.f32 %v643, %v739
        %v772 = vmul.f32 %v644, %v740
        %v773 = vmul.f32 %v645, %v741
        %v774 = vmul.f32 %v646, %v742
        %v775 = vmul.f32 %v647, %v743
        %v776 = vmul.f32 %v648, %v744
        %v777 = vmul.f32 %v649, %v745
        %v778 = vmul.f32 %v650, %v746
        %v779 = vmul.f32 %v651, %v747
        %v780 = vmul.f32 %v652, %v748
        %v781 = vmul.f32 %v653, %v749
        %v782 = vmul.f32 %v750, 0.16666667
        %v783 = vmul.f32 %v751, 0.16666667
        %v784 = vmul.f32 %v752, 0.16666667
        %v785 = vmul.f32 %v753, 0.16666667
        %v786 = vmul.f32 %v754, 0.16666667
        %v787 = vmul.f32 %v755, 0.16666667
        %v788 = vmul.f32 %v756, 0.16666667
        %v789 = vmul.f32 %v757, 0.16666667
        %v790 = vmul.f32 %v758, 0.16666667
        %v791 = vmul.f32 %v759, 0.16666667
        %v792 = vmul.f32 %v760, 0.16666667
        %v793 = vmul.f32 %v761, 0.16666667
        %v794 = vmul.f32 %v762, 0.16666667
        %v795 = vmul.f32 %v763, 0.16666667
        %v796 = vmul.f32 %v764, 0.16666667
        %v797 = vmul.f32 %v765, 0.16666667
        %v798 = vmul.f32 %v766, 0.16666667
        %v799 = vmul.f32 %v767, 0.16666667
        %v800 = vmul.f32 %v768, 0.16666667
        %v801 = vmul.f32 %v769, 0.16666667
        %v802 = vmul.f32 %v770, 0.16666667
        %v803 = vmul.f32 %v771, 0.16666667
        %v804 = vmul.f32 %v772, 0.16666667
        %v805 = vmul.f32 %v773, 0.16666667
        %v806 = vmul.f32 %v774, 0.16666667
        %v807 = vmul.f32 %v775, 0.16666667
        %v808 = vmul.f32 %v776, 0.16666667
        %v809 = vmul.f32 %v777, 0.16666667
        %v810 = vmul.f32 %v778, 0.16666667
        %v811 = vmul.f32 %v779, 0.16666667
        %v812 = vmul.f32 %v780, 0.16666667
        %v813 = vmul.f32 %v781, 0.16666667
        %814 = vst [vmem:[#allocation2] sm:$0xf] 0
        %815 = vst [vmem:[#allocation2 + $0x4] sm:$0xf] 0
        %816 = vst [vmem:[#allocation2 + $0x8] sm:$0x1] 0
        %s817 = scalar_lea.vmem [#allocation2], 204
        %818 = vst [vmem:[%s817] sm:$0xf] 0
        %819 = vst [vmem:[%s817 + $0x4] sm:$0xf] 0
        %820 = vst [vmem:[%s817 + $0x8] sm:$0x1] 0
        %s821 = scalar_lea.vmem [#allocation2], 12
        %vm822 = vcmask 1040384
        %vm823 = vsmask.f32 256
        %vm824 = vmand %vm822, %vm823
        %v825 = vld [vmem:[%s821] sm:$0x1]
        %v826 = vsel %vm824, 0, %v825
        %827 = vst [vmem:[%s821] sm:$0x1] %v826
        %v828 = vld [vmem:[%s821 + $0xc] sm:$0x1]
        %v829 = vsel %vm824, 0, %v828
        %830 = vst [vmem:[%s821 + $0xc] sm:$0x1] %v829
        %v831 = vld [vmem:[%s821 + $0x18] sm:$0x1]
        %v832 = vsel %vm824, 0, %v831
        %833 = vst [vmem:[%s821 + $0x18] sm:$0x1] %v832
        %v834 = vld [vmem:[%s821 + $0x24] sm:$0x1]
        %v835 = vsel %vm824, 0, %v834
        %836 = vst [vmem:[%s821 + $0x24] sm:$0x1] %v835
        %v837 = vld [vmem:[%s821 + $0x30] sm:$0x1]
        %v838 = vsel %vm824, 0, %v837
        %839 = vst [vmem:[%s821 + $0x30] sm:$0x1] %v838
        %v840 = vld [vmem:[%s821 + $0x3c] sm:$0x1]
        %v841 = vsel %vm824, 0, %v840
        %842 = vst [vmem:[%s821 + $0x3c] sm:$0x1] %v841
        %v843 = vld [vmem:[%s821 + $0x48] sm:$0x1]
        %v844 = vsel %vm824, 0, %v843
        %845 = vst [vmem:[%s821 + $0x48] sm:$0x1] %v844
        %v846 = vld [vmem:[%s821 + $0x54] sm:$0x1]
        %v847 = vsel %vm824, 0, %v846
        %848 = vst [vmem:[%s821 + $0x54] sm:$0x1] %v847
        %v849 = vld [vmem:[%s821 + $0x60] sm:$0x1]
        %v850 = vsel %vm824, 0, %v849
        %851 = vst [vmem:[%s821 + $0x60] sm:$0x1] %v850
        %v852 = vld [vmem:[%s821 + $0x6c] sm:$0x1]
        %v853 = vsel %vm824, 0, %v852
        %854 = vst [vmem:[%s821 + $0x6c] sm:$0x1] %v853
        %v855 = vld [vmem:[%s821 + $0x78] sm:$0x1]
        %v856 = vsel %vm824, 0, %v855
        %857 = vst [vmem:[%s821 + $0x78] sm:$0x1] %v856
        %v858 = vld [vmem:[%s821 + $0x84] sm:$0x1]
        %v859 = vsel %vm824, 0, %v858
        %860 = vst [vmem:[%s821 + $0x84] sm:$0x1] %v859
        %v861 = vld [vmem:[%s821 + $0x90] sm:$0x1]
        %v862 = vsel %vm824, 0, %v861
        %863 = vst [vmem:[%s821 + $0x90] sm:$0x1] %v862
        %v864 = vld [vmem:[%s821 + $0x9c] sm:$0x1]
        %v865 = vsel %vm824, 0, %v864
        %866 = vst [vmem:[%s821 + $0x9c] sm:$0x1] %v865
        %v867 = vld [vmem:[%s821 + $0xa8] sm:$0x1]
        %v868 = vsel %vm824, 0, %v867
        %869 = vst [vmem:[%s821 + $0xa8] sm:$0x1] %v868
        %v870 = vld [vmem:[%s821 + $0xb4] sm:$0x1]
        %v871 = vsel %vm824, 0, %v870
        %872 = vst [vmem:[%s821 + $0xb4] sm:$0x1] %v871
        %vm873 = vsmask.f32 7938
        %vm874 = vmand %vm822, %vm873
        %v875 = vld [vmem:[%s821 + $0x8] sm:$0x1]
        %v876 = vsel %vm874, 0, %v875
        %877 = vst [vmem:[%s821 + $0x8] sm:$0x1] %v876
        %v878 = vld [vmem:[%s821 + $0x14] sm:$0x1]
        %v879 = vsel %vm874, 0, %v878
        %880 = vst [vmem:[%s821 + $0x14] sm:$0x1] %v879
        %v881 = vld [vmem:[%s821 + $0x20] sm:$0x1]
        %v882 = vsel %vm874, 0, %v881
        %883 = vst [vmem:[%s821 + $0x20] sm:$0x1] %v882
        %v884 = vld [vmem:[%s821 + $0x2c] sm:$0x1]
        %v885 = vsel %vm874, 0, %v884
        %886 = vst [vmem:[%s821 + $0x2c] sm:$0x1] %v885
        %v887 = vld [vmem:[%s821 + $0x38] sm:$0x1]
        %v888 = vsel %vm874, 0, %v887
        %889 = vst [vmem:[%s821 + $0x38] sm:$0x1] %v888
        %v890 = vld [vmem:[%s821 + $0x44] sm:$0x1]
        %v891 = vsel %vm874, 0, %v890
        %892 = vst [vmem:[%s821 + $0x44] sm:$0x1] %v891
        %v893 = vld [vmem:[%s821 + $0x50] sm:$0x1]
        %v894 = vsel %vm874, 0, %v893
        %895 = vst [vmem:[%s821 + $0x50] sm:$0x1] %v894
        %v896 = vld [vmem:[%s821 + $0x5c] sm:$0x1]
        %v897 = vsel %vm874, 0, %v896
        %898 = vst [vmem:[%s821 + $0x5c] sm:$0x1] %v897
        %v899 = vld [vmem:[%s821 + $0x68] sm:$0x1]
        %v900 = vsel %vm874, 0, %v899
        %901 = vst [vmem:[%s821 + $0x68] sm:$0x1] %v900
        %v902 = vld [vmem:[%s821 + $0x74] sm:$0x1]
        %v903 = vsel %vm874, 0, %v902
        %904 = vst [vmem:[%s821 + $0x74] sm:$0x1] %v903
        %v905 = vld [vmem:[%s821 + $0x80] sm:$0x1]
        %v906 = vsel %vm874, 0, %v905
        %907 = vst [vmem:[%s821 + $0x80] sm:$0x1] %v906
        %v908 = vld [vmem:[%s821 + $0x8c] sm:$0x1]
        %v909 = vsel %vm874, 0, %v908
        %910 = vst [vmem:[%s821 + $0x8c] sm:$0x1] %v909
        %v911 = vld [vmem:[%s821 + $0x98] sm:$0x1]
        %v912 = vsel %vm874, 0, %v911
        %913 = vst [vmem:[%s821 + $0x98] sm:$0x1] %v912
        %v914 = vld [vmem:[%s821 + $0xa4] sm:$0x1]
        %v915 = vsel %vm874, 0, %v914
        %916 = vst [vmem:[%s821 + $0xa4] sm:$0x1] %v915
        %v917 = vld [vmem:[%s821 + $0xb0] sm:$0x1]
        %v918 = vsel %vm874, 0, %v917
        %919 = vst [vmem:[%s821 + $0xb0] sm:$0x1] %v918
        %v920 = vld [vmem:[%s821 + $0xbc] sm:$0x1]
        %v921 = vsel %vm874, 0, %v920
        %922 = vst [vmem:[%s821 + $0xbc] sm:$0x1] %v921
        %v923 = vpack.c.bf16 %v783, %v782
        %v924 = vpack.c.bf16 %v785, %v784
        %v925 = vpack.c.bf16 %v787, %v786
        %v926 = vpack.c.bf16 %v789, %v788
        %v927 = vpack.c.bf16 %v791, %v790
        %v928 = vpack.c.bf16 %v793, %v792
        %v929 = vpack.c.bf16 %v795, %v794
        %v930 = vpack.c.bf16 %v797, %v796
        %v931 = vpack.c.bf16 %v799, %v798
        %v932 = vpack.c.bf16 %v801, %v800
        %v933 = vpack.c.bf16 %v803, %v802
        %v934 = vpack.c.bf16 %v805, %v804
        %v935 = vpack.c.bf16 %v807, %v806
        %v936 = vpack.c.bf16 %v809, %v808
        %v937 = vpack.c.bf16 %v811, %v810
        %v938 = vpack.c.bf16 %v813, %v812
        %v955 = vunpack.c.l.b16 %v923
        %v956 = vunpack.c.h.b16 %v923
        %v957 = vunpack.c.l.b16 %v924
        %v958 = vunpack.c.h.b16 %v924
        %v959 = vunpack.c.l.b16 %v925
        %v960 = vunpack.c.h.b16 %v925
        %v961 = vunpack.c.l.b16 %v926
        %v962 = vunpack.c.h.b16 %v926
        %v963 = vunpack.c.l.b16 %v927
        %v964 = vunpack.c.h.b16 %v927
        %v965 = vunpack.c.l.b16 %v928
        %v966 = vunpack.c.h.b16 %v928
        %v967 = vunpack.c.l.b16 %v929
        %v968 = vunpack.c.h.b16 %v929
        %v969 = vunpack.c.l.b16 %v930
        %v970 = vunpack.c.h.b16 %v930
        %v971 = vunpack.c.l.b16 %v931
        %v972 = vunpack.c.h.b16 %v931
        %v973 = vunpack.c.l.b16 %v932
        %v974 = vunpack.c.h.b16 %v932
        %v975 = vunpack.c.l.b16 %v933
        %v976 = vunpack.c.h.b16 %v933
        %v977 = vunpack.c.l.b16 %v934
        %v978 = vunpack.c.h.b16 %v934
        %v979 = vunpack.c.l.b16 %v935
        %v980 = vunpack.c.h.b16 %v935
        %v981 = vunpack.c.l.b16 %v936
        %v982 = vunpack.c.h.b16 %v936
        %v983 = vunpack.c.l.b16 %v937
        %v984 = vunpack.c.h.b16 %v937
        %v985 = vunpack.c.l.b16 %v938
        %v986 = vunpack.c.h.b16 %v938
        %v987 = vpack.c.b16 %v955, %v955
        %v988 = vpack.c.b16 %v956, %v956
        %v989 = vpack.c.b16 %v957, %v957
        %v990 = vpack.c.b16 %v958, %v958
        %v991 = vpack.c.b16 %v959, %v959
        %v992 = vpack.c.b16 %v960, %v960
        %v993 = vpack.c.b16 %v961, %v961
        %v994 = vpack.c.b16 %v962, %v962
        %v995 = vpack.c.b16 %v963, %v963
        %v996 = vpack.c.b16 %v964, %v964
        %v997 = vpack.c.b16 %v965, %v965
        %v998 = vpack.c.b16 %v966, %v966
        %v999 = vpack.c.b16 %v967, %v967
        %v1000 = vpack.c.b16 %v968, %v968
        %v1001 = vpack.c.b16 %v969, %v969
        %v1002 = vpack.c.b16 %v970, %v970
        %v1003 = vpack.c.b16 %v971, %v971
        %v1004 = vpack.c.b16 %v972, %v972
        %v1005 = vpack.c.b16 %v973, %v973
        %v1006 = vpack.c.b16 %v974, %v974
        %v1007 = vpack.c.b16 %v975, %v975
        %v1008 = vpack.c.b16 %v976, %v976
        %v1009 = vpack.c.b16 %v977, %v977
        %v1010 = vpack.c.b16 %v978, %v978
        %v1011 = vpack.c.b16 %v979, %v979
        %v1012 = vpack.c.b16 %v980, %v980
        %v1013 = vpack.c.b16 %v981, %v981
        %v1014 = vpack.c.b16 %v982, %v982
        %v1015 = vpack.c.b16 %v983, %v983
        %v1016 = vpack.c.b16 %v984, %v984
        %v1017 = vpack.c.b16 %v985, %v985
        %v1018 = vpack.c.b16 %v986, %v986
        %vm1019 = vsmask.f32 4368
        %vm1020 = vmor %vm823, %vm1019
        %v1022 = vshrl.u32 %v987, 16
        %v1024 = vrot.slane %v1022, 7
        %v1025 = vshll.u32 %v987, 16
        %v1027 = vor.u32 %v1024, %v1025
        %v1028 = vrot.slane %v1024, 4
        %v1030 = vshrl.u32 %v988, 16
        %v1032 = vrot.slane %v1030, 7
        %v1033 = vshll.u32 %v988, 16
        %v1035 = vor.u32 %v1032, %v1033
        %v1036 = vsel %vm1020, %v1028, %v1035
        %v1037 = vrot.slane %v1032, 4
        %v1039 = vshrl.u32 %v989, 16
        %v1041 = vrot.slane %v1039, 7
        %v1042 = vshll.u32 %v989, 16
        %v1044 = vor.u32 %v1041, %v1042
        %v1045 = vrot.slane %v1041, 4
        %v1047 = vshrl.u32 %v990, 16
        %v1049 = vrot.slane %v1047, 7
        %v1050 = vshll.u32 %v990, 16
        %v1052 = vor.u32 %v1049, %v1050
        %v1053 = vsel %vm1020, %v1045, %v1052
        %v1054 = vrot.slane %v1049, 4
        %v1056 = vshrl.u32 %v991, 16
        %v1058 = vrot.slane %v1056, 7
        %v1059 = vshll.u32 %v991, 16
        %v1061 = vor.u32 %v1058, %v1059
        %v1062 = vrot.slane %v1058, 4
        %v1064 = vshrl.u32 %v992, 16
        %v1066 = vrot.slane %v1064, 7
        %v1067 = vshll.u32 %v992, 16
        %v1069 = vor.u32 %v1066, %v1067
        %v1070 = vsel %vm1020, %v1062, %v1069
        %v1071 = vrot.slane %v1066, 4
        %v1073 = vshrl.u32 %v993, 16
        %v1075 = vrot.slane %v1073, 7
        %v1076 = vshll.u32 %v993, 16
        %v1078 = vor.u32 %v1075, %v1076
        %v1079 = vrot.slane %v1075, 4
        %v1081 = vshrl.u32 %v994, 16
        %v1083 = vrot.slane %v1081, 7
        %v1084 = vshll.u32 %v994, 16
        %v1086 = vor.u32 %v1083, %v1084
        %v1087 = vsel %vm1020, %v1079, %v1086
        %v1088 = vrot.slane %v1083, 4
        %v1090 = vshrl.u32 %v995, 16
        %v1092 = vrot.slane %v1090, 7
        %v1093 = vshll.u32 %v995, 16
        %v1095 = vor.u32 %v1092, %v1093
        %v1096 = vrot.slane %v1092, 4
        %v1098 = vshrl.u32 %v996, 16
        %v1100 = vrot.slane %v1098, 7
        %v1101 = vshll.u32 %v996, 16
        %v1103 = vor.u32 %v1100, %v1101
        %v1104 = vsel %vm1020, %v1096, %v1103
        %v1105 = vrot.slane %v1100, 4
        %v1107 = vshrl.u32 %v997, 16
        %v1109 = vrot.slane %v1107, 7
        %v1110 = vshll.u32 %v997, 16
        %v1112 = vor.u32 %v1109, %v1110
        %v1113 = vrot.slane %v1109, 4
        %v1115 = vshrl.u32 %v998, 16
        %v1117 = vrot.slane %v1115, 7
        %v1118 = vshll.u32 %v998, 16
        %v1120 = vor.u32 %v1117, %v1118
        %v1121 = vsel %vm1020, %v1113, %v1120
        %v1122 = vrot.slane %v1117, 4
        %v1124 = vshrl.u32 %v999, 16
        %v1126 = vrot.slane %v1124, 7
        %v1127 = vshll.u32 %v999, 16
        %v1129 = vor.u32 %v1126, %v1127
        %v1130 = vrot.slane %v1126, 4
        %v1132 = vshrl.u32 %v1000, 16
        %v1134 = vrot.slane %v1132, 7
        %v1135 = vshll.u32 %v1000, 16
        %v1137 = vor.u32 %v1134, %v1135
        %v1138 = vsel %vm1020, %v1130, %v1137
        %v1139 = vrot.slane %v1134, 4
        %v1141 = vshrl.u32 %v1001, 16
        %v1143 = vrot.slane %v1141, 7
        %v1144 = vshll.u32 %v1001, 16
        %v1146 = vor.u32 %v1143, %v1144
        %v1147 = vrot.slane %v1143, 4
        %v1149 = vshrl.u32 %v1002, 16
        %v1151 = vrot.slane %v1149, 7
        %v1152 = vshll.u32 %v1002, 16
        %v1154 = vor.u32 %v1151, %v1152
        %v1155 = vsel %vm1020, %v1147, %v1154
        %v1156 = vrot.slane %v1151, 4
        %v1158 = vshrl.u32 %v1003, 16
        %v1160 = vrot.slane %v1158, 7
        %v1161 = vshll.u32 %v1003, 16
        %v1163 = vor.u32 %v1160, %v1161
        %v1164 = vrot.slane %v1160, 4
        %v1166 = vshrl.u32 %v1004, 16
        %v1168 = vrot.slane %v1166, 7
        %v1169 = vshll.u32 %v1004, 16
        %v1171 = vor.u32 %v1168, %v1169
        %v1172 = vsel %vm1020, %v1164, %v1171
        %v1173 = vrot.slane %v1168, 4
        %v1175 = vshrl.u32 %v1005, 16
        %v1177 = vrot.slane %v1175, 7
        %v1178 = vshll.u32 %v1005, 16
        %v1180 = vor.u32 %v1177, %v1178
        %v1181 = vrot.slane %v1177, 4
        %v1183 = vshrl.u32 %v1006, 16
        %v1185 = vrot.slane %v1183, 7
        %v1186 = vshll.u32 %v1006, 16
        %v1188 = vor.u32 %v1185, %v1186
        %v1189 = vsel %vm1020, %v1181, %v1188
        %v1190 = vrot.slane %v1185, 4
        %v1192 = vshrl.u32 %v1007, 16
        %v1194 = vrot.slane %v1192, 7
        %v1195 = vshll.u32 %v1007, 16
        %v1197 = vor.u32 %v1194, %v1195
        %v1198 = vrot.slane %v1194, 4
        %v1200 = vshrl.u32 %v1008, 16
        %v1202 = vrot.slane %v1200, 7
        %v1203 = vshll.u32 %v1008, 16
        %v1205 = vor.u32 %v1202, %v1203
        %v1206 = vsel %vm1020, %v1198, %v1205
        %v1207 = vrot.slane %v1202, 4
        %v1209 = vshrl.u32 %v1009, 16
        %v1211 = vrot.slane %v1209, 7
        %v1212 = vshll.u32 %v1009, 16
        %v1214 = vor.u32 %v1211, %v1212
        %v1215 = vrot.slane %v1211, 4
        %v1217 = vshrl.u32 %v1010, 16
        %v1219 = vrot.slane %v1217, 7
        %v1220 = vshll.u32 %v1010, 16
        %v1222 = vor.u32 %v1219, %v1220
        %v1223 = vsel %vm1020, %v1215, %v1222
        %v1224 = vrot.slane %v1219, 4
        %v1226 = vshrl.u32 %v1011, 16
        %v1228 = vrot.slane %v1226, 7
        %v1229 = vshll.u32 %v1011, 16
        %v1231 = vor.u32 %v1228, %v1229
        %v1232 = vrot.slane %v1228, 4
        %v1234 = vshrl.u32 %v1012, 16
        %v1236 = vrot.slane %v1234, 7
        %v1237 = vshll.u32 %v1012, 16
        %v1239 = vor.u32 %v1236, %v1237
        %v1240 = vsel %vm1020, %v1232, %v1239
        %v1241 = vrot.slane %v1236, 4
        %v1243 = vshrl.u32 %v1013, 16
        %v1245 = vrot.slane %v1243, 7
        %v1246 = vshll.u32 %v1013, 16
        %v1248 = vor.u32 %v1245, %v1246
        %v1249 = vrot.slane %v1245, 4
        %v1251 = vshrl.u32 %v1014, 16
        %v1253 = vrot.slane %v1251, 7
        %v1254 = vshll.u32 %v1014, 16
        %v1256 = vor.u32 %v1253, %v1254
        %v1257 = vsel %vm1020, %v1249, %v1256
        %v1258 = vrot.slane %v1253, 4
        %v1260 = vshrl.u32 %v1015, 16
        %v1262 = vrot.slane %v1260, 7
        %v1263 = vshll.u32 %v1015, 16
        %v1265 = vor.u32 %v1262, %v1263
        %v1266 = vrot.slane %v1262, 4
        %v1268 = vshrl.u32 %v1016, 16
        %v1270 = vrot.slane %v1268, 7
        %v1271 = vshll.u32 %v1016, 16
        %v1273 = vor.u32 %v1270, %v1271
        %v1274 = vsel %vm1020, %v1266, %v1273
        %v1275 = vrot.slane %v1270, 4
        %v1277 = vshrl.u32 %v1017, 16
        %v1279 = vrot.slane %v1277, 7
        %v1280 = vshll.u32 %v1017, 16
        %v1282 = vor.u32 %v1279, %v1280
        %v1283 = vrot.slane %v1279, 4
        %v1285 = vshrl.u32 %v1018, 16
        %v1287 = vrot.slane %v1285, 7
        %v1288 = vshll.u32 %v1018, 16
        %v1290 = vor.u32 %v1287, %v1288
        %v1291 = vsel %vm1020, %v1283, %v1290
        %v1292 = vrot.slane %v1287, 4
        %vm1341 = vcmask 1043456
        %vm1342 = vmand %vm1341, %vm873
        %v1343 = vld [vmem:[%s821] sm:$0xf]
        %v1344 = vsel %vm1342, %v1027, %v1343
        %1345 = vst [vmem:[%s821] sm:$0xf] %v1344
        %1346 = vst [vmem:[%s821 + $0x4] sm:$0xf] %v1036
        %v1347 = vld [vmem:[%s821 + $0x8] sm:$0x1]
        %v1348 = vsel %vm824, %v1037, %v1347
        %1349 = vst [vmem:[%s821 + $0x8] sm:$0x1] %v1348
        %v1350 = vld [vmem:[%s821 + $0xc] sm:$0xf]
        %v1351 = vsel %vm1342, %v1044, %v1350
        %1352 = vst [vmem:[%s821 + $0xc] sm:$0xf] %v1351
        %1353 = vst [vmem:[%s821 + $0x10] sm:$0xf] %v1053
        %v1354 = vld [vmem:[%s821 + $0x14] sm:$0x1]
        %v1355 = vsel %vm824, %v1054, %v1354
        %1356 = vst [vmem:[%s821 + $0x14] sm:$0x1] %v1355
        %v1357 = vld [vmem:[%s821 + $0x18] sm:$0xf]
        %v1358 = vsel %vm1342, %v1061, %v1357
        %1359 = vst [vmem:[%s821 + $0x18] sm:$0xf] %v1358
        %1360 = vst [vmem:[%s821 + $0x1c] sm:$0xf] %v1070
        %v1361 = vld [vmem:[%s821 + $0x20] sm:$0x1]
        %v1362 = vsel %vm824, %v1071, %v1361
        %1363 = vst [vmem:[%s821 + $0x20] sm:$0x1] %v1362
        %v1364 = vld [vmem:[%s821 + $0x24] sm:$0xf]
        %v1365 = vsel %vm1342, %v1078, %v1364
        %1366 = vst [vmem:[%s821 + $0x24] sm:$0xf] %v1365
        %1367 = vst [vmem:[%s821 + $0x28] sm:$0xf] %v1087
        %v1368 = vld [vmem:[%s821 + $0x2c] sm:$0x1]
        %v1369 = vsel %vm824, %v1088, %v1368
        %1370 = vst [vmem:[%s821 + $0x2c] sm:$0x1] %v1369
        %v1371 = vld [vmem:[%s821 + $0x30] sm:$0xf]
        %v1372 = vsel %vm1342, %v1095, %v1371
        %1373 = vst [vmem:[%s821 + $0x30] sm:$0xf] %v1372
        %1374 = vst [vmem:[%s821 + $0x34] sm:$0xf] %v1104
        %v1375 = vld [vmem:[%s821 + $0x38] sm:$0x1]
        %v1376 = vsel %vm824, %v1105, %v1375
        %1377 = vst [vmem:[%s821 + $0x38] sm:$0x1] %v1376
        %v1378 = vld [vmem:[%s821 + $0x3c] sm:$0xf]
        %v1379 = vsel %vm1342, %v1112, %v1378
        %1380 = vst [vmem:[%s821 + $0x3c] sm:$0xf] %v1379
        %1381 = vst [vmem:[%s821 + $0x40] sm:$0xf] %v1121
        %v1382 = vld [vmem:[%s821 + $0x44] sm:$0x1]
        %v1383 = vsel %vm824, %v1122, %v1382
        %1384 = vst [vmem:[%s821 + $0x44] sm:$0x1] %v1383
        %v1385 = vld [vmem:[%s821 + $0x48] sm:$0xf]
        %v1386 = vsel %vm1342, %v1129, %v1385
        %1387 = vst [vmem:[%s821 + $0x48] sm:$0xf] %v1386
        %1388 = vst [vmem:[%s821 + $0x4c] sm:$0xf] %v1138
        %v1389 = vld [vmem:[%s821 + $0x50] sm:$0x1]
        %v1390 = vsel %vm824, %v1139, %v1389
        %1391 = vst [vmem:[%s821 + $0x50] sm:$0x1] %v1390
        %v1392 = vld [vmem:[%s821 + $0x54] sm:$0xf]
        %v1393 = vsel %vm1342, %v1146, %v1392
        %1394 = vst [vmem:[%s821 + $0x54] sm:$0xf] %v1393
        %1395 = vst [vmem:[%s821 + $0x58] sm:$0xf] %v1155
        %v1396 = vld [vmem:[%s821 + $0x5c] sm:$0x1]
        %v1397 = vsel %vm824, %v1156, %v1396
        %1398 = vst [vmem:[%s821 + $0x5c] sm:$0x1] %v1397
        %v1399 = vld [vmem:[%s821 + $0x60] sm:$0xf]
        %v1400 = vsel %vm1342, %v1163, %v1399
        %1401 = vst [vmem:[%s821 + $0x60] sm:$0xf] %v1400
        %1402 = vst [vmem:[%s821 + $0x64] sm:$0xf] %v1172
        %v1403 = vld [vmem:[%s821 + $0x68] sm:$0x1]
        %v1404 = vsel %vm824, %v1173, %v1403
        %1405 = vst [vmem:[%s821 + $0x68] sm:$0x1] %v1404
        %v1406 = vld [vmem:[%s821 + $0x6c] sm:$0xf]
        %v1407 = vsel %vm1342, %v1180, %v1406
        %1408 = vst [vmem:[%s821 + $0x6c] sm:$0xf] %v1407
        %1409 = vst [vmem:[%s821 + $0x70] sm:$0xf] %v1189
        %v1410 = vld [vmem:[%s821 + $0x74] sm:$0x1]
        %v1411 = vsel %vm824, %v1190, %v1410
        %1412 = vst [vmem:[%s821 + $0x74] sm:$0x1] %v1411
        %v1413 = vld [vmem:[%s821 + $0x78] sm:$0xf]
        %v1414 = vsel %vm1342, %v1197, %v1413
        %1415 = vst [vmem:[%s821 + $0x78] sm:$0xf] %v1414
        %1416 = vst [vmem:[%s821 + $0x7c] sm:$0xf] %v1206
        %v1417 = vld [vmem:[%s821 + $0x80] sm:$0x1]
        %v1418 = vsel %vm824, %v1207, %v1417
        %1419 = vst [vmem:[%s821 + $0x80] sm:$0x1] %v1418
        %v1420 = vld [vmem:[%s821 + $0x84] sm:$0xf]
        %v1421 = vsel %vm1342, %v1214, %v1420
        %1422 = vst [vmem:[%s821 + $0x84] sm:$0xf] %v1421
        %1423 = vst [vmem:[%s821 + $0x88] sm:$0xf] %v1223
        %v1424 = vld [vmem:[%s821 + $0x8c] sm:$0x1]
        %v1425 = vsel %vm824, %v1224, %v1424
        %1426 = vst [vmem:[%s821 + $0x8c] sm:$0x1] %v1425
        %v1427 = vld [vmem:[%s821 + $0x90] sm:$0xf]
        %v1428 = vsel %vm1342, %v1231, %v1427
        %1429 = vst [vmem:[%s821 + $0x90] sm:$0xf] %v1428
        %1430 = vst [vmem:[%s821 + $0x94] sm:$0xf] %v1240
        %v1431 = vld [vmem:[%s821 + $0x98] sm:$0x1]
        %v1432 = vsel %vm824, %v1241, %v1431
        %1433 = vst [vmem:[%s821 + $0x98] sm:$0x1] %v1432
        %v1434 = vld [vmem:[%s821 + $0x9c] sm:$0xf]
        %v1435 = vsel %vm1342, %v1248, %v1434
        %1436 = vst [vmem:[%s821 + $0x9c] sm:$0xf] %v1435
        %1437 = vst [vmem:[%s821 + $0xa0] sm:$0xf] %v1257
        %v1438 = vld [vmem:[%s821 + $0xa4] sm:$0x1]
        %v1439 = vsel %vm824, %v1258, %v1438
        %1440 = vst [vmem:[%s821 + $0xa4] sm:$0x1] %v1439
        %v1441 = vld [vmem:[%s821 + $0xa8] sm:$0xf]
        %v1442 = vsel %vm1342, %v1265, %v1441
        %1443 = vst [vmem:[%s821 + $0xa8] sm:$0xf] %v1442
        %1444 = vst [vmem:[%s821 + $0xac] sm:$0xf] %v1274
        %v1445 = vld [vmem:[%s821 + $0xb0] sm:$0x1]
        %v1446 = vsel %vm824, %v1275, %v1445
        %1447 = vst [vmem:[%s821 + $0xb0] sm:$0x1] %v1446
        %v1448 = vld [vmem:[%s821 + $0xb4] sm:$0xf]
        %v1449 = vsel %vm1342, %v1282, %v1448
        %1450 = vst [vmem:[%s821 + $0xb4] sm:$0xf] %v1449
        %1451 = vst [vmem:[%s821 + $0xb8] sm:$0xf] %v1291
        %v1452 = vld [vmem:[%s821 + $0xbc] sm:$0x1]
        %v1453 = vsel %vm824, %v1292, %v1452
        %1454 = vst [vmem:[%s821 + $0xbc] sm:$0x1] %v1453
        %v1455 = vld [vmem:[#allocation2] sm:$0xf]
        %v1456 = vld [vmem:[#allocation2 + $0x4] sm:$0xf]
        %v1457 = vld [vmem:[#allocation2 + $0xc] sm:$0xf]
        %v1458 = vld [vmem:[#allocation2 + $0x10] sm:$0xf]
        %v1459 = vld [vmem:[#allocation2 + $0x18] sm:$0xf]
        %v1460 = vld [vmem:[#allocation2 + $0x1c] sm:$0xf]
        %v1461 = vld [vmem:[#allocation2 + $0x24] sm:$0xf]
        %v1462 = vld [vmem:[#allocation2 + $0x28] sm:$0xf]
        %v1463 = vld [vmem:[#allocation2 + $0x30] sm:$0xf]
        %v1464 = vld [vmem:[#allocation2 + $0x34] sm:$0xf]
        %v1465 = vld [vmem:[#allocation2 + $0x3c] sm:$0xf]
        %v1466 = vld [vmem:[#allocation2 + $0x40] sm:$0xf]
        %v1467 = vld [vmem:[#allocation2 + $0x48] sm:$0xf]
        %v1468 = vld [vmem:[#allocation2 + $0x4c] sm:$0xf]
        %v1469 = vld [vmem:[#allocation2 + $0x54] sm:$0xf]
        %v1470 = vld [vmem:[#allocation2 + $0x58] sm:$0xf]
        %v1471 = vld [vmem:[#allocation2 + $0x60] sm:$0xf]
        %v1472 = vld [vmem:[#allocation2 + $0x64] sm:$0xf]
        %v1473 = vld [vmem:[#allocation2 + $0x6c] sm:$0xf]
        %v1474 = vld [vmem:[#allocation2 + $0x70] sm:$0xf]
        %v1475 = vld [vmem:[#allocation2 + $0x78] sm:$0xf]
        %v1476 = vld [vmem:[#allocation2 + $0x7c] sm:$0xf]
        %v1477 = vld [vmem:[#allocation2 + $0x84] sm:$0xf]
        %v1478 = vld [vmem:[#allocation2 + $0x88] sm:$0xf]
        %v1479 = vld [vmem:[#allocation2 + $0x90] sm:$0xf]
        %v1480 = vld [vmem:[#allocation2 + $0x94] sm:$0xf]
        %v1481 = vld [vmem:[#allocation2 + $0x9c] sm:$0xf]
        %v1482 = vld [vmem:[#allocation2 + $0xa0] sm:$0xf]
        %v1483 = vld [vmem:[#allocation2 + $0xa8] sm:$0xf]
        %v1484 = vld [vmem:[#allocation2 + $0xac] sm:$0xf]
        %v1485 = vld [vmem:[#allocation2 + $0xb4] sm:$0xf]
        %v1486 = vld [vmem:[#allocation2 + $0xb8] sm:$0xf]
        %1487 = vst [vmem:[#allocation3] sm:$0xf] %v1455
        %1488 = vst [vmem:[#allocation3 + $0x24] sm:$0xf] %v1456
        %1489 = vst [vmem:[#allocation3 + $0x48] sm:$0xf] %v1457
        %1490 = vst [vmem:[#allocation3 + $0x6c] sm:$0xf] %v1458
        %1491 = vst [vmem:[#allocation3 + $0x90] sm:$0xf] %v1459
        %1492 = vst [vmem:[#allocation3 + $0xb4] sm:$0xf] %v1460
        %1493 = vst [vmem:[#allocation3 + $0xd8] sm:$0xf] %v1461
        %1494 = vst [vmem:[#allocation3 + $0xfc] sm:$0xf] %v1462
        %1495 = vst [vmem:[#allocation3 + $0x120] sm:$0xf] %v1463
        %1496 = vst [vmem:[#allocation3 + $0x144] sm:$0xf] %v1464
        %1497 = vst [vmem:[#allocation3 + $0x168] sm:$0xf] %v1465
        %1498 = vst [vmem:[#allocation3 + $0x18c] sm:$0xf] %v1466
        %1499 = vst [vmem:[#allocation3 + $0x1b0] sm:$0xf] %v1467
        %1500 = vst [vmem:[#allocation3 + $0x1d4] sm:$0xf] %v1468
        %1501 = vst [vmem:[#allocation3 + $0x1f8] sm:$0xf] %v1469
        %1502 = vst [vmem:[#allocation3 + $0x21c] sm:$0xf] %v1470
        %1503 = vst [vmem:[#allocation3 + $0x240] sm:$0xf] %v1471
        %1504 = vst [vmem:[#allocation3 + $0x264] sm:$0xf] %v1472
        %1505 = vst [vmem:[#allocation3 + $0x288] sm:$0xf] %v1473
        %1506 = vst [vmem:[#allocation3 + $0x2ac] sm:$0xf] %v1474
        %1507 = vst [vmem:[#allocation3 + $0x2d0] sm:$0xf] %v1475
        %1508 = vst [vmem:[#allocation3 + $0x2f4] sm:$0xf] %v1476
        %1509 = vst [vmem:[#allocation3 + $0x318] sm:$0xf] %v1477
        %1510 = vst [vmem:[#allocation3 + $0x33c] sm:$0xf] %v1478
        %1511 = vst [vmem:[#allocation3 + $0x360] sm:$0xf] %v1479
        %1512 = vst [vmem:[#allocation3 + $0x384] sm:$0xf] %v1480
        %1513 = vst [vmem:[#allocation3 + $0x3a8] sm:$0xf] %v1481
        %1514 = vst [vmem:[#allocation3 + $0x3cc] sm:$0xf] %v1482
        %1515 = vst [vmem:[#allocation3 + $0x3f0] sm:$0xf] %v1483
        %1516 = vst [vmem:[#allocation3 + $0x414] sm:$0xf] %v1484
        %1517 = vst [vmem:[#allocation3 + $0x438] sm:$0xf] %v1485
        %1518 = vst [vmem:[#allocation3 + $0x45c] sm:$0xf] %v1486
        %v1519 = vld [vmem:[#allocation2] sm:$0xf]
        %v1520 = vld [vmem:[#allocation2 + $0x4] sm:$0xf]
        %v1521 = vld [vmem:[#allocation2 + $0x8] sm:$0x1]
        %v1522 = vld [vmem:[#allocation2 + $0xc] sm:$0xf]
        %v1523 = vld [vmem:[#allocation2 + $0x10] sm:$0xf]
        %v1524 = vld [vmem:[#allocation2 + $0x14] sm:$0x1]
        %v1525 = vld [vmem:[#allocation2 + $0x18] sm:$0xf]
        %v1526 = vld [vmem:[#allocation2 + $0x1c] sm:$0xf]
        %v1527 = vld [vmem:[#allocation2 + $0x20] sm:$0x1]
        %v1528 = vld [vmem:[#allocation2 + $0x24] sm:$0xf]
        %v1529 = vld [vmem:[#allocation2 + $0x28] sm:$0xf]
        %v1530 = vld [vmem:[#allocation2 + $0x2c] sm:$0x1]
        %v1531 = vld [vmem:[#allocation2 + $0x30] sm:$0xf]
        %v1532 = vld [vmem:[#allocation2 + $0x34] sm:$0xf]
        %v1533 = vld [vmem:[#allocation2 + $0x38] sm:$0x1]
        %v1534 = vld [vmem:[#allocation2 + $0x3c] sm:$0xf]
        %v1535 = vld [vmem:[#allocation2 + $0x40] sm:$0xf]
        %v1536 = vld [vmem:[#allocation2 + $0x44] sm:$0x1]
        %v1537 = vld [vmem:[#allocation2 + $0x48] sm:$0xf]
        %v1538 = vld [vmem:[#allocation2 + $0x4c] sm:$0xf]
        %v1539 = vld [vmem:[#allocation2 + $0x50] sm:$0x1]
        %v1540 = vld [vmem:[#allocation2 + $0x54] sm:$0xf]
        %v1541 = vld [vmem:[#allocation2 + $0x58] sm:$0xf]
        %v1542 = vld [vmem:[#allocation2 + $0x5c] sm:$0x1]
        %v1543 = vld [vmem:[#allocation2 + $0x60] sm:$0xf]
        %v1544 = vld [vmem:[#allocation2 + $0x64] sm:$0xf]
        %v1545 = vld [vmem:[#allocation2 + $0x68] sm:$0x1]
        %v1546 = vld [vmem:[#allocation2 + $0x6c] sm:$0xf]
        %v1547 = vld [vmem:[#allocation2 + $0x70] sm:$0xf]
        %v1548 = vld [vmem:[#allocation2 + $0x74] sm:$0x1]
        %v1549 = vld [vmem:[#allocation2 + $0x78] sm:$0xf]
        %v1550 = vld [vmem:[#allocation2 + $0x7c] sm:$0xf]
        %v1551 = vld [vmem:[#allocation2 + $0x80] sm:$0x1]
        %v1552 = vld [vmem:[#allocation2 + $0x84] sm:$0xf]
        %v1553 = vld [vmem:[#allocation2 + $0x88] sm:$0xf]
        %v1554 = vld [vmem:[#allocation2 + $0x8c] sm:$0x1]
        %v1555 = vld [vmem:[#allocation2 + $0x90] sm:$0xf]
        %v1556 = vld [vmem:[#allocation2 + $0x94] sm:$0xf]
        %v1557 = vld [vmem:[#allocation2 + $0x98] sm:$0x1]
        %v1558 = vld [vmem:[#allocation2 + $0x9c] sm:$0xf]
        %v1559 = vld [vmem:[#allocation2 + $0xa0] sm:$0xf]
        %v1560 = vld [vmem:[#allocation2 + $0xa4] sm:$0x1]
        %v1561 = vld [vmem:[#allocation2 + $0xa8] sm:$0xf]
        %v1562 = vld [vmem:[#allocation2 + $0xac] sm:$0xf]
        %v1563 = vld [vmem:[#allocation2 + $0xb0] sm:$0x1]
        %v1564 = vld [vmem:[#allocation2 + $0xb4] sm:$0xf]
        %v1565 = vld [vmem:[#allocation2 + $0xb8] sm:$0xf]
        %v1566 = vld [vmem:[#allocation2 + $0xbc] sm:$0x1]
        %vm1567 = vsmask.f32 3328
        %vm1568 = vsmask.f32 7440
        %vm1569 = vmor %vm1567, %vm1568
        %v1571 = vshrl.u32 %v1519, 16
        %v1573 = vrot.slane %v1571, 4
        %v1574 = vshll.u32 %v1519, 16
        %v1576 = vrot.slane %v1574, 5
        %v1577 = vor.u32 %v1573, %v1576
        %v1578 = vrot.slane %v1577, 4
        %v1580 = vshll.u32 %v1520, 16
        %v1582 = vrot.slane %v1580, 5
        %v1583 = vsel %vm1569, %v1578, %v1582
        %v1584 = vshrl.u32 %v1520, 16
        %v1586 = vrot.slane %v1584, 4
        %v1587 = vor.u32 %v1586, %v1582
        %v1588 = vrot.slane %v1587, 4
        %v1590 = vshll.u32 %v1521, 16
        %v1592 = vrot.slane %v1590, 5
        %v1593 = vsel %vm1569, %v1588, %v1592
        %v1595 = vshrl.u32 %v1522, 16
        %v1597 = vrot.slane %v1595, 4
        %v1598 = vshll.u32 %v1522, 16
        %v1600 = vrot.slane %v1598, 5
        %v1601 = vor.u32 %v1597, %v1600
        %v1602 = vrot.slane %v1601, 4
        %v1604 = vshll.u32 %v1523, 16
        %v1606 = vrot.slane %v1604, 5
        %v1607 = vsel %vm1569, %v1602, %v1606
        %v1608 = vshrl.u32 %v1523, 16
        %v1610 = vrot.slane %v1608, 4
        %v1611 = vor.u32 %v1610, %v1606
        %v1612 = vrot.slane %v1611, 4
        %v1614 = vshll.u32 %v1524, 16
        %v1616 = vrot.slane %v1614, 5
        %v1617 = vsel %vm1569, %v1612, %v1616
        %v1619 = vshrl.u32 %v1525, 16
        %v1621 = vrot.slane %v1619, 4
        %v1622 = vshll.u32 %v1525, 16
        %v1624 = vrot.slane %v1622, 5
        %v1625 = vor.u32 %v1621, %v1624
        %v1626 = vrot.slane %v1625, 4
        %v1628 = vshll.u32 %v1526, 16
        %v1630 = vrot.slane %v1628, 5
        %v1631 = vsel %vm1569, %v1626, %v1630
        %v1632 = vshrl.u32 %v1526, 16
        %v1634 = vrot.slane %v1632, 4
        %v1635 = vor.u32 %v1634, %v1630
        %v1636 = vrot.slane %v1635, 4
        %v1638 = vshll.u32 %v1527, 16
        %v1640 = vrot.slane %v1638, 5
        %v1641 = vsel %vm1569, %v1636, %v1640
        %v1643 = vshrl.u32 %v1528, 16
        %v1645 = vrot.slane %v1643, 4
        %v1646 = vshll.u32 %v1528, 16
        %v1648 = vrot.slane %v1646, 5
        %v1649 = vor.u32 %v1645, %v1648
        %v1650 = vrot.slane %v1649, 4
        %v1652 = vshll.u32 %v1529, 16
        %v1654 = vrot.slane %v1652, 5
        %v1655 = vsel %vm1569, %v1650, %v1654
        %v1656 = vshrl.u32 %v1529, 16
        %v1658 = vrot.slane %v1656, 4
        %v1659 = vor.u32 %v1658, %v1654
        %v1660 = vrot.slane %v1659, 4
        %v1662 = vshll.u32 %v1530, 16
        %v1664 = vrot.slane %v1662, 5
        %v1665 = vsel %vm1569, %v1660, %v1664
        %v1667 = vshrl.u32 %v1531, 16
        %v1669 = vrot.slane %v1667, 4
        %v1670 = vshll.u32 %v1531, 16
        %v1672 = vrot.slane %v1670, 5
        %v1673 = vor.u32 %v1669, %v1672
        %v1674 = vrot.slane %v1673, 4
        %v1676 = vshll.u32 %v1532, 16
        %v1678 = vrot.slane %v1676, 5
        %v1679 = vsel %vm1569, %v1674, %v1678
        %v1680 = vshrl.u32 %v1532, 16
        %v1682 = vrot.slane %v1680, 4
        %v1683 = vor.u32 %v1682, %v1678
        %v1684 = vrot.slane %v1683, 4
        %v1686 = vshll.u32 %v1533, 16
        %v1688 = vrot.slane %v1686, 5
        %v1689 = vsel %vm1569, %v1684, %v1688
        %v1691 = vshrl.u32 %v1534, 16
        %v1693 = vrot.slane %v1691, 4
        %v1694 = vshll.u32 %v1534, 16
        %v1696 = vrot.slane %v1694, 5
        %v1697 = vor.u32 %v1693, %v1696
        %v1698 = vrot.slane %v1697, 4
        %v1700 = vshll.u32 %v1535, 16
        %v1702 = vrot.slane %v1700, 5
        %v1703 = vsel %vm1569, %v1698, %v1702
        %v1704 = vshrl.u32 %v1535, 16
        %v1706 = vrot.slane %v1704, 4
        %v1707 = vor.u32 %v1706, %v1702
        %v1708 = vrot.slane %v1707, 4
        %v1710 = vshll.u32 %v1536, 16
        %v1712 = vrot.slane %v1710, 5
        %v1713 = vsel %vm1569, %v1708, %v1712
        %v1715 = vshrl.u32 %v1537, 16
        %v1717 = vrot.slane %v1715, 4
        %v1718 = vshll.u32 %v1537, 16
        %v1720 = vrot.slane %v1718, 5
        %v1721 = vor.u32 %v1717, %v1720
        %v1722 = vrot.slane %v1721, 4
        %v1724 = vshll.u32 %v1538, 16
        %v1726 = vrot.slane %v1724, 5
        %v1727 = vsel %vm1569, %v1722, %v1726
        %v1728 = vshrl.u32 %v1538, 16
        %v1730 = vrot.slane %v1728, 4
        %v1731 = vor.u32 %v1730, %v1726
        %v1732 = vrot.slane %v1731, 4
        %v1734 = vshll.u32 %v1539, 16
        %v1736 = vrot.slane %v1734, 5
        %v1737 = vsel %vm1569, %v1732, %v1736
        %v1739 = vshrl.u32 %v1540, 16
        %v1741 = vrot.slane %v1739, 4
        %v1742 = vshll.u32 %v1540, 16
        %v1744 = vrot.slane %v1742, 5
        %v1745 = vor.u32 %v1741, %v1744
        %v1746 = vrot.slane %v1745, 4
        %v1748 = vshll.u32 %v1541, 16
        %v1750 = vrot.slane %v1748, 5
        %v1751 = vsel %vm1569, %v1746, %v1750
        %v1752 = vshrl.u32 %v1541, 16
        %v1754 = vrot.slane %v1752, 4
        %v1755 = vor.u32 %v1754, %v1750
        %v1756 = vrot.slane %v1755, 4
        %v1758 = vshll.u32 %v1542, 16
        %v1760 = vrot.slane %v1758, 5
        %v1761 = vsel %vm1569, %v1756, %v1760
        %v1763 = vshrl.u32 %v1543, 16
        %v1765 = vrot.slane %v1763, 4
        %v1766 = vshll.u32 %v1543, 16
        %v1768 = vrot.slane %v1766, 5
        %v1769 = vor.u32 %v1765, %v1768
        %v1770 = vrot.slane %v1769, 4
        %v1772 = vshll.u32 %v1544, 16
        %v1774 = vrot.slane %v1772, 5
        %v1775 = vsel %vm1569, %v1770, %v1774
        %v1776 = vshrl.u32 %v1544, 16
        %v1778 = vrot.slane %v1776, 4
        %v1779 = vor.u32 %v1778, %v1774
        %v1780 = vrot.slane %v1779, 4
        %v1782 = vshll.u32 %v1545, 16
        %v1784 = vrot.slane %v1782, 5
        %v1785 = vsel %vm1569, %v1780, %v1784
        %v1787 = vshrl.u32 %v1546, 16
        %v1789 = vrot.slane %v1787, 4
        %v1790 = vshll.u32 %v1546, 16
        %v1792 = vrot.slane %v1790, 5
        %v1793 = vor.u32 %v1789, %v1792
        %v1794 = vrot.slane %v1793, 4
        %v1796 = vshll.u32 %v1547, 16
        %v1798 = vrot.slane %v1796, 5
        %v1799 = vsel %vm1569, %v1794, %v1798
        %v1800 = vshrl.u32 %v1547, 16
        %v1802 = vrot.slane %v1800, 4
        %v1803 = vor.u32 %v1802, %v1798
        %v1804 = vrot.slane %v1803, 4
        %v1806 = vshll.u32 %v1548, 16
        %v1808 = vrot.slane %v1806, 5
        %v1809 = vsel %vm1569, %v1804, %v1808
        %v1811 = vshrl.u32 %v1549, 16
        %v1813 = vrot.slane %v1811, 4
        %v1814 = vshll.u32 %v1549, 16
        %v1816 = vrot.slane %v1814, 5
        %v1817 = vor.u32 %v1813, %v1816
        %v1818 = vrot.slane %v1817, 4
        %v1820 = vshll.u32 %v1550, 16
        %v1822 = vrot.slane %v1820, 5
        %v1823 = vsel %vm1569, %v1818, %v1822
        %v1824 = vshrl.u32 %v1550, 16
        %v1826 = vrot.slane %v1824, 4
        %v1827 = vor.u32 %v1826, %v1822
        %v1828 = vrot.slane %v1827, 4
        %v1830 = vshll.u32 %v1551, 16
        %v1832 = vrot.slane %v1830, 5
        %v1833 = vsel %vm1569, %v1828, %v1832
        %v1835 = vshrl.u32 %v1552, 16
        %v1837 = vrot.slane %v1835, 4
        %v1838 = vshll.u32 %v1552, 16
        %v1840 = vrot.slane %v1838, 5
        %v1841 = vor.u32 %v1837, %v1840
        %v1842 = vrot.slane %v1841, 4
        %v1844 = vshll.u32 %v1553, 16
        %v1846 = vrot.slane %v1844, 5
        %v1847 = vsel %vm1569, %v1842, %v1846
        %v1848 = vshrl.u32 %v1553, 16
        %v1850 = vrot.slane %v1848, 4
        %v1851 = vor.u32 %v1850, %v1846
        %v1852 = vrot.slane %v1851, 4
        %v1854 = vshll.u32 %v1554, 16
        %v1856 = vrot.slane %v1854, 5
        %v1857 = vsel %vm1569, %v1852, %v1856
        %v1859 = vshrl.u32 %v1555, 16
        %v1861 = vrot.slane %v1859, 4
        %v1862 = vshll.u32 %v1555, 16
        %v1864 = vrot.slane %v1862, 5
        %v1865 = vor.u32 %v1861, %v1864
        %v1866 = vrot.slane %v1865, 4
        %v1868 = vshll.u32 %v1556, 16
        %v1870 = vrot.slane %v1868, 5
        %v1871 = vsel %vm1569, %v1866, %v1870
        %v1872 = vshrl.u32 %v1556, 16
        %v1874 = vrot.slane %v1872, 4
        %v1875 = vor.u32 %v1874, %v1870
        %v1876 = vrot.slane %v1875, 4
        %v1878 = vshll.u32 %v1557, 16
        %v1880 = vrot.slane %v1878, 5
        %v1881 = vsel %vm1569, %v1876, %v1880
        %v1883 = vshrl.u32 %v1558, 16
        %v1885 = vrot.slane %v1883, 4
        %v1886 = vshll.u32 %v1558, 16
        %v1888 = vrot.slane %v1886, 5
        %v1889 = vor.u32 %v1885, %v1888
        %v1890 = vrot.slane %v1889, 4
        %v1892 = vshll.u32 %v1559, 16
        %v1894 = vrot.slane %v1892, 5
        %v1895 = vsel %vm1569, %v1890, %v1894
        %v1896 = vshrl.u32 %v1559, 16
        %v1898 = vrot.slane %v1896, 4
        %v1899 = vor.u32 %v1898, %v1894
        %v1900 = vrot.slane %v1899, 4
        %v1902 = vshll.u32 %v1560, 16
        %v1904 = vrot.slane %v1902, 5
        %v1905 = vsel %vm1569, %v1900, %v1904
        %v1907 = vshrl.u32 %v1561, 16
        %v1909 = vrot.slane %v1907, 4
        %v1910 = vshll.u32 %v1561, 16
        %v1912 = vrot.slane %v1910, 5
        %v1913 = vor.u32 %v1909, %v1912
        %v1914 = vrot.slane %v1913, 4
        %v1916 = vshll.u32 %v1562, 16
        %v1918 = vrot.slane %v1916, 5
        %v1919 = vsel %vm1569, %v1914, %v1918
        %v1920 = vshrl.u32 %v1562, 16
        %v1922 = vrot.slane %v1920, 4
        %v1923 = vor.u32 %v1922, %v1918
        %v1924 = vrot.slane %v1923, 4
        %v1926 = vshll.u32 %v1563, 16
        %v1928 = vrot.slane %v1926, 5
        %v1929 = vsel %vm1569, %v1924, %v1928
        %v1931 = vshrl.u32 %v1564, 16
        %v1933 = vrot.slane %v1931, 4
        %v1934 = vshll.u32 %v1564, 16
        %v1936 = vrot.slane %v1934, 5
        %v1937 = vor.u32 %v1933, %v1936
        %v1938 = vrot.slane %v1937, 4
        %v1940 = vshll.u32 %v1565, 16
        %v1942 = vrot.slane %v1940, 5
        %v1943 = vsel %vm1569, %v1938, %v1942
        %v1944 = vshrl.u32 %v1565, 16
        %v1946 = vrot.slane %v1944, 4
        %v1947 = vor.u32 %v1946, %v1942
        %v1948 = vrot.slane %v1947, 4
        %v1950 = vshll.u32 %v1566, 16
        %v1952 = vrot.slane %v1950, 5
        %v1953 = vsel %vm1569, %v1948, %v1952
        %1986 = vst [vmem:[#allocation3 + $0x4] sm:$0xf] %v1583
        %1987 = vst [vmem:[#allocation3 + $0x28] sm:$0xf] %v1593
        %1988 = vst [vmem:[#allocation3 + $0x4c] sm:$0xf] %v1607
        %1989 = vst [vmem:[#allocation3 + $0x70] sm:$0xf] %v1617
        %1990 = vst [vmem:[#allocation3 + $0x94] sm:$0xf] %v1631
        %1991 = vst [vmem:[#allocation3 + $0xb8] sm:$0xf] %v1641
        %1992 = vst [vmem:[#allocation3 + $0xdc] sm:$0xf] %v1655
        %1993 = vst [vmem:[#allocation3 + $0x100] sm:$0xf] %v1665
        %1994 = vst [vmem:[#allocation3 + $0x124] sm:$0xf] %v1679
        %1995 = vst [vmem:[#allocation3 + $0x148] sm:$0xf] %v1689
        %1996 = vst [vmem:[#allocation3 + $0x16c] sm:$0xf] %v1703
        %1997 = vst [vmem:[#allocation3 + $0x190] sm:$0xf] %v1713
        %1998 = vst [vmem:[#allocation3 + $0x1b4] sm:$0xf] %v1727
        %1999 = vst [vmem:[#allocation3 + $0x1d8] sm:$0xf] %v1737
        %2000 = vst [vmem:[#allocation3 + $0x1fc] sm:$0xf] %v1751
        %2001 = vst [vmem:[#allocation3 + $0x220] sm:$0xf] %v1761
        %2002 = vst [vmem:[#allocation3 + $0x244] sm:$0xf] %v1775
        %2003 = vst [vmem:[#allocation3 + $0x268] sm:$0xf] %v1785
        %2004 = vst [vmem:[#allocation3 + $0x28c] sm:$0xf] %v1799
        %2005 = vst [vmem:[#allocation3 + $0x2b0] sm:$0xf] %v1809
        %2006 = vst [vmem:[#allocation3 + $0x2d4] sm:$0xf] %v1823
        %2007 = vst [vmem:[#allocation3 + $0x2f8] sm:$0xf] %v1833
        %2008 = vst [vmem:[#allocation3 + $0x31c] sm:$0xf] %v1847
        %2009 = vst [vmem:[#allocation3 + $0x340] sm:$0xf] %v1857
        %2010 = vst [vmem:[#allocation3 + $0x364] sm:$0xf] %v1871
        %2011 = vst [vmem:[#allocation3 + $0x388] sm:$0xf] %v1881
        %2012 = vst [vmem:[#allocation3 + $0x3ac] sm:$0xf] %v1895
        %2013 = vst [vmem:[#allocation3 + $0x3d0] sm:$0xf] %v1905
        %2014 = vst [vmem:[#allocation3 + $0x3f4] sm:$0xf] %v1919
        %2015 = vst [vmem:[#allocation3 + $0x418] sm:$0xf] %v1929
        %2016 = vst [vmem:[#allocation3 + $0x43c] sm:$0xf] %v1943
        %2017 = vst [vmem:[#allocation3 + $0x460] sm:$0xf] %v1953
        %v2018 = vld [vmem:[#allocation2] sm:$0xe]
        %v2019 = vld [vmem:[#allocation2 + $0x4] sm:$0xf]
        %v2020 = vld [vmem:[#allocation2 + $0x8] sm:$0x1]
        %v2021 = vld [vmem:[#allocation2 + $0xc] sm:$0xe]
        %v2022 = vld [vmem:[#allocation2 + $0x10] sm:$0xf]
        %v2023 = vld [vmem:[#allocation2 + $0x14] sm:$0x1]
        %v2024 = vld [vmem:[#allocation2 + $0x18] sm:$0xe]
        %v2025 = vld [vmem:[#allocation2 + $0x1c] sm:$0xf]
        %v2026 = vld [vmem:[#allocation2 + $0x20] sm:$0x1]
        %v2027 = vld [vmem:[#allocation2 + $0x24] sm:$0xe]
        %v2028 = vld [vmem:[#allocation2 + $0x28] sm:$0xf]
        %v2029 = vld [vmem:[#allocation2 + $0x2c] sm:$0x1]
        %v2030 = vld [vmem:[#allocation2 + $0x30] sm:$0xe]
        %v2031 = vld [vmem:[#allocation2 + $0x34] sm:$0xf]
        %v2032 = vld [vmem:[#allocation2 + $0x38] sm:$0x1]
        %v2033 = vld [vmem:[#allocation2 + $0x3c] sm:$0xe]
        %v2034 = vld [vmem:[#allocation2 + $0x40] sm:$0xf]
        %v2035 = vld [vmem:[#allocation2 + $0x44] sm:$0x1]
        %v2036 = vld [vmem:[#allocation2 + $0x48] sm:$0xe]
        %v2037 = vld [vmem:[#allocation2 + $0x4c] sm:$0xf]
        %v2038 = vld [vmem:[#allocation2 + $0x50] sm:$0x1]
        %v2039 = vld [vmem:[#allocation2 + $0x54] sm:$0xe]
        %v2040 = vld [vmem:[#allocation2 + $0x58] sm:$0xf]
        %v2041 = vld [vmem:[#allocation2 + $0x5c] sm:$0x1]
        %v2042 = vld [vmem:[#allocation2 + $0x60] sm:$0xe]
        %v2043 = vld [vmem:[#allocation2 + $0x64] sm:$0xf]
        %v2044 = vld [vmem:[#allocation2 + $0x68] sm:$0x1]
        %v2045 = vld [vmem:[#allocation2 + $0x6c] sm:$0xe]
        %v2046 = vld [vmem:[#allocation2 + $0x70] sm:$0xf]
        %v2047 = vld [vmem:[#allocation2 + $0x74] sm:$0x1]
        %v2048 = vld [vmem:[#allocation2 + $0x78] sm:$0xe]
        %v2049 = vld [vmem:[#allocation2 + $0x7c] sm:$0xf]
        %v2050 = vld [vmem:[#allocation2 + $0x80] sm:$0x1]
        %v2051 = vld [vmem:[#allocation2 + $0x84] sm:$0xe]
        %v2052 = vld [vmem:[#allocation2 + $0x88] sm:$0xf]
        %v2053 = vld [vmem:[#allocation2 + $0x8c] sm:$0x1]
        %v2054 = vld [vmem:[#allocation2 + $0x90] sm:$0xe]
        %v2055 = vld [vmem:[#allocation2 + $0x94] sm:$0xf]
        %v2056 = vld [vmem:[#allocation2 + $0x98] sm:$0x1]
        %v2057 = vld [vmem:[#allocation2 + $0x9c] sm:$0xe]
        %v2058 = vld [vmem:[#allocation2 + $0xa0] sm:$0xf]
        %v2059 = vld [vmem:[#allocation2 + $0xa4] sm:$0x1]
        %v2060 = vld [vmem:[#allocation2 + $0xa8] sm:$0xe]
        %v2061 = vld [vmem:[#allocation2 + $0xac] sm:$0xf]
        %v2062 = vld [vmem:[#allocation2 + $0xb0] sm:$0x1]
        %v2063 = vld [vmem:[#allocation2 + $0xb4] sm:$0xe]
        %v2064 = vld [vmem:[#allocation2 + $0xb8] sm:$0xf]
        %v2065 = vld [vmem:[#allocation2 + $0xbc] sm:$0x1]
        %vm2114 = vcmask 1042432
        %vm2115 = vcmask 1046532
        %vm2116 = vmor %vm2114, %vm2115
        %v2117 = vrot.slane %v2018, 5
        %v2118 = vrot.slane %v2117, 4
        %v2119 = vrot.slane %v2019, 5
        %v2120 = vsel %vm2116, %v2118, %v2119
        %v2121 = vrot.slane %v2119, 4
        %v2122 = vrot.slane %v2020, 5
        %v2123 = vsel %vm2116, %v2121, %v2122
        %v2124 = vrot.slane %v2021, 5
        %v2125 = vrot.slane %v2124, 4
        %v2126 = vrot.slane %v2022, 5
        %v2127 = vsel %vm2116, %v2125, %v2126
        %v2128 = vrot.slane %v2126, 4
        %v2129 = vrot.slane %v2023, 5
        %v2130 = vsel %vm2116, %v2128, %v2129
        %v2131 = vrot.slane %v2024, 5
        %v2132 = vrot.slane %v2131, 4
        %v2133 = vrot.slane %v2025, 5
        %v2134 = vsel %vm2116, %v2132, %v2133
        %v2135 = vrot.slane %v2133, 4
        %v2136 = vrot.slane %v2026, 5
        %v2137 = vsel %vm2116, %v2135, %v2136
        %v2138 = vrot.slane %v2027, 5
        %v2139 = vrot.slane %v2138, 4
        %v2140 = vrot.slane %v2028, 5
        %v2141 = vsel %vm2116, %v2139, %v2140
        %v2142 = vrot.slane %v2140, 4
        %v2143 = vrot.slane %v2029, 5
        %v2144 = vsel %vm2116, %v2142, %v2143
        %v2145 = vrot.slane %v2030, 5
        %v2146 = vrot.slane %v2145, 4
        %v2147 = vrot.slane %v2031, 5
        %v2148 = vsel %vm2116, %v2146, %v2147
        %v2149 = vrot.slane %v2147, 4
        %v2150 = vrot.slane %v2032, 5
        %v2151 = vsel %vm2116, %v2149, %v2150
        %v2152 = vrot.slane %v2033, 5
        %v2153 = vrot.slane %v2152, 4
        %v2154 = vrot.slane %v2034, 5
        %v2155 = vsel %vm2116, %v2153, %v2154
        %v2156 = vrot.slane %v2154, 4
        %v2157 = vrot.slane %v2035, 5
        %v2158 = vsel %vm2116, %v2156, %v2157
        %v2159 = vrot.slane %v2036, 5
        %v2160 = vrot.slane %v2159, 4
        %v2161 = vrot.slane %v2037, 5
        %v2162 = vsel %vm2116, %v2160, %v2161
        %v2163 = vrot.slane %v2161, 4
        %v2164 = vrot.slane %v2038, 5
        %v2165 = vsel %vm2116, %v2163, %v2164
        %v2166 = vrot.slane %v2039, 5
        %v2167 = vrot.slane %v2166, 4
        %v2168 = vrot.slane %v2040, 5
        %v2169 = vsel %vm2116, %v2167, %v2168
        %v2170 = vrot.slane %v2168, 4
        %v2171 = vrot.slane %v2041, 5
        %v2172 = vsel %vm2116, %v2170, %v2171
        %v2173 = vrot.slane %v2042, 5
        %v2174 = vrot.slane %v2173, 4
        %v2175 = vrot.slane %v2043, 5
        %v2176 = vsel %vm2116, %v2174, %v2175
        %v2177 = vrot.slane %v2175, 4
        %v2178 = vrot.slane %v2044, 5
        %v2179 = vsel %vm2116, %v2177, %v2178
        %v2180 = vrot.slane %v2045, 5
        %v2181 = vrot.slane %v2180, 4
        %v2182 = vrot.slane %v2046, 5
        %v2183 = vsel %vm2116, %v2181, %v2182
        %v2184 = vrot.slane %v2182, 4
        %v2185 = vrot.slane %v2047, 5
        %v2186 = vsel %vm2116, %v2184, %v2185
        %v2187 = vrot.slane %v2048, 5
        %v2188 = vrot.slane %v2187, 4
        %v2189 = vrot.slane %v2049, 5
        %v2190 = vsel %vm2116, %v2188, %v2189
        %v2191 = vrot.slane %v2189, 4
        %v2192 = vrot.slane %v2050, 5
        %v2193 = vsel %vm2116, %v2191, %v2192
        %v2194 = vrot.slane %v2051, 5
        %v2195 = vrot.slane %v2194, 4
        %v2196 = vrot.slane %v2052, 5
        %v2197 = vsel %vm2116, %v2195, %v2196
        %v2198 = vrot.slane %v2196, 4
        %v2199 = vrot.slane %v2053, 5
        %v2200 = vsel %vm2116, %v2198, %v2199
        %v2201 = vrot.slane %v2054, 5
        %v2202 = vrot.slane %v2201, 4
        %v2203 = vrot.slane %v2055, 5
        %v2204 = vsel %vm2116, %v2202, %v2203
        %v2205 = vrot.slane %v2203, 4
        %v2206 = vrot.slane %v2056, 5
        %v2207 = vsel %vm2116, %v2205, %v2206
        %v2208 = vrot.slane %v2057, 5
        %v2209 = vrot.slane %v2208, 4
        %v2210 = vrot.slane %v2058, 5
        %v2211 = vsel %vm2116, %v2209, %v2210
        %v2212 = vrot.slane %v2210, 4
        %v2213 = vrot.slane %v2059, 5
        %v2214 = vsel %vm2116, %v2212, %v2213
        %v2215 = vrot.slane %v2060, 5
        %v2216 = vrot.slane %v2215, 4
        %v2217 = vrot.slane %v2061, 5
        %v2218 = vsel %vm2116, %v2216, %v2217
        %v2219 = vrot.slane %v2217, 4
        %v2220 = vrot.slane %v2062, 5
        %v2221 = vsel %vm2116, %v2219, %v2220
        %v2222 = vrot.slane %v2063, 5
        %v2223 = vrot.slane %v2222, 4
        %v2224 = vrot.slane %v2064, 5
        %v2225 = vsel %vm2116, %v2223, %v2224
        %v2226 = vrot.slane %v2224, 4
        %v2227 = vrot.slane %v2065, 5
        %v2228 = vsel %vm2116, %v2226, %v2227
        %2261 = vst [vmem:[#allocation3 + $0x8] sm:$0xf] %v2120
        %2262 = vst [vmem:[#allocation3 + $0x2c] sm:$0xf] %v2123
        %2263 = vst [vmem:[#allocation3 + $0x50] sm:$0xf] %v2127
        %2264 = vst [vmem:[#allocation3 + $0x74] sm:$0xf] %v2130
        %2265 = vst [vmem:[#allocation3 + $0x98] sm:$0xf] %v2134
        %2266 = vst [vmem:[#allocation3 + $0xbc] sm:$0xf] %v2137
        %2267 = vst [vmem:[#allocation3 + $0xe0] sm:$0xf] %v2141
        %2268 = vst [vmem:[#allocation3 + $0x104] sm:$0xf] %v2144
        %2269 = vst [vmem:[#allocation3 + $0x128] sm:$0xf] %v2148
        %2270 = vst [vmem:[#allocation3 + $0x14c] sm:$0xf] %v2151
        %2271 = vst [vmem:[#allocation3 + $0x170] sm:$0xf] %v2155
        %2272 = vst [vmem:[#allocation3 + $0x194] sm:$0xf] %v2158
        %2273 = vst [vmem:[#allocation3 + $0x1b8] sm:$0xf] %v2162
        %2274 = vst [vmem:[#allocation3 + $0x1dc] sm:$0xf] %v2165
        %2275 = vst [vmem:[#allocation3 + $0x200] sm:$0xf] %v2169
        %2276 = vst [vmem:[#allocation3 + $0x224] sm:$0xf] %v2172
        %2277 = vst [vmem:[#allocation3 + $0x248] sm:$0xf] %v2176
        %2278 = vst [vmem:[#allocation3 + $0x26c] sm:$0xf] %v2179
        %2279 = vst [vmem:[#allocation3 + $0x290] sm:$0xf] %v2183
        %2280 = vst [vmem:[#allocation3 + $0x2b4] sm:$0xf] %v2186
        %2281 = vst [vmem:[#allocation3 + $0x2d8] sm:$0xf] %v2190
        %2282 = vst [vmem:[#allocation3 + $0x2fc] sm:$0xf] %v2193
        %2283 = vst [vmem:[#allocation3 + $0x320] sm:$0xf] %v2197
        %2284 = vst [vmem:[#allocation3 + $0x344] sm:$0xf] %v2200
        %2285 = vst [vmem:[#allocation3 + $0x368] sm:$0xf] %v2204
        %2286 = vst [vmem:[#allocation3 + $0x38c] sm:$0xf] %v2207
        %2287 = vst [vmem:[#allocation3 + $0x3b0] sm:$0xf] %v2211
        %2288 = vst [vmem:[#allocation3 + $0x3d4] sm:$0xf] %v2214
        %2289 = vst [vmem:[#allocation3 + $0x3f8] sm:$0xf] %v2218
        %2290 = vst [vmem:[#allocation3 + $0x41c] sm:$0xf] %v2221
        %2291 = vst [vmem:[#allocation3 + $0x440] sm:$0xf] %v2225
        %2292 = vst [vmem:[#allocation3 + $0x464] sm:$0xf] %v2228
        %v2293 = vld [vmem:[%s821] sm:$0xf]
        %v2294 = vld [vmem:[%s821 + $0x4] sm:$0xf]
        %v2295 = vld [vmem:[%s821 + $0xc] sm:$0xf]
        %v2296 = vld [vmem:[%s821 + $0x10] sm:$0xf]
        %v2297 = vld [vmem:[%s821 + $0x18] sm:$0xf]
        %v2298 = vld [vmem:[%s821 + $0x1c] sm:$0xf]
        %v2299 = vld [vmem:[%s821 + $0x24] sm:$0xf]
        %v2300 = vld [vmem:[%s821 + $0x28] sm:$0xf]
        %v2301 = vld [vmem:[%s821 + $0x30] sm:$0xf]
        %v2302 = vld [vmem:[%s821 + $0x34] sm:$0xf]
        %v2303 = vld [vmem:[%s821 + $0x3c] sm:$0xf]
        %v2304 = vld [vmem:[%s821 + $0x40] sm:$0xf]
        %v2305 = vld [vmem:[%s821 + $0x48] sm:$0xf]
        %v2306 = vld [vmem:[%s821 + $0x4c] sm:$0xf]
        %v2307 = vld [vmem:[%s821 + $0x54] sm:$0xf]
        %v2308 = vld [vmem:[%s821 + $0x58] sm:$0xf]
        %v2309 = vld [vmem:[%s821 + $0x60] sm:$0xf]
        %v2310 = vld [vmem:[%s821 + $0x64] sm:$0xf]
        %v2311 = vld [vmem:[%s821 + $0x6c] sm:$0xf]
        %v2312 = vld [vmem:[%s821 + $0x70] sm:$0xf]
        %v2313 = vld [vmem:[%s821 + $0x78] sm:$0xf]
        %v2314 = vld [vmem:[%s821 + $0x7c] sm:$0xf]
        %v2315 = vld [vmem:[%s821 + $0x84] sm:$0xf]
        %v2316 = vld [vmem:[%s821 + $0x88] sm:$0xf]
        %v2317 = vld [vmem:[%s821 + $0x90] sm:$0xf]
        %v2318 = vld [vmem:[%s821 + $0x94] sm:$0xf]
        %v2319 = vld [vmem:[%s821 + $0x9c] sm:$0xf]
        %v2320 = vld [vmem:[%s821 + $0xa0] sm:$0xf]
        %v2321 = vld [vmem:[%s821 + $0xa8] sm:$0xf]
        %v2322 = vld [vmem:[%s821 + $0xac] sm:$0xf]
        %v2323 = vld [vmem:[%s821 + $0xb4] sm:$0xf]
        %v2324 = vld [vmem:[%s821 + $0xb8] sm:$0xf]
        %2325 = vst [vmem:[#allocation3 + $0xc] sm:$0xf] %v2293
        %2326 = vst [vmem:[#allocation3 + $0x30] sm:$0xf] %v2294
        %2327 = vst [vmem:[#allocation3 + $0x54] sm:$0xf] %v2295
        %2328 = vst [vmem:[#allocation3 + $0x78] sm:$0xf] %v2296
        %2329 = vst [vmem:[#allocation3 + $0x9c] sm:$0xf] %v2297
        %2330 = vst [vmem:[#allocation3 + $0xc0] sm:$0xf] %v2298
        %2331 = vst [vmem:[#allocation3 + $0xe4] sm:$0xf] %v2299
        %2332 = vst [vmem:[#allocation3 + $0x108] sm:$0xf] %v2300
        %2333 = vst [vmem:[#allocation3 + $0x12c] sm:$0xf] %v2301
        %2334 = vst [vmem:[#allocation3 + $0x150] sm:$0xf] %v2302
        %2335 = vst [vmem:[#allocation3 + $0x174] sm:$0xf] %v2303
        %2336 = vst [vmem:[#allocation3 + $0x198] sm:$0xf] %v2304
        %2337 = vst [vmem:[#allocation3 + $0x1bc] sm:$0xf] %v2305
        %2338 = vst [vmem:[#allocation3 + $0x1e0] sm:$0xf] %v2306
        %2339 = vst [vmem:[#allocation3 + $0x204] sm:$0xf] %v2307
        %2340 = vst [vmem:[#allocation3 + $0x228] sm:$0xf] %v2308
        %2341 = vst [vmem:[#allocation3 + $0x24c] sm:$0xf] %v2309
        %2342 = vst [vmem:[#allocation3 + $0x270] sm:$0xf] %v2310
        %2343 = vst [vmem:[#allocation3 + $0x294] sm:$0xf] %v2311
        %2344 = vst [vmem:[#allocation3 + $0x2b8] sm:$0xf] %v2312
        %2345 = vst [vmem:[#allocation3 + $0x2dc] sm:$0xf] %v2313
        %2346 = vst [vmem:[#allocation3 + $0x300] sm:$0xf] %v2314
        %2347 = vst [vmem:[#allocation3 + $0x324] sm:$0xf] %v2315
        %2348 = vst [vmem:[#allocation3 + $0x348] sm:$0xf] %v2316
        %2349 = vst [vmem:[#allocation3 + $0x36c] sm:$0xf] %v2317
        %2350 = vst [vmem:[#allocation3 + $0x390] sm:$0xf] %v2318
        %2351 = vst [vmem:[#allocation3 + $0x3b4] sm:$0xf] %v2319
        %2352 = vst [vmem:[#allocation3 + $0x3d8] sm:$0xf] %v2320
        %2353 = vst [vmem:[#allocation3 + $0x3fc] sm:$0xf] %v2321
        %2354 = vst [vmem:[#allocation3 + $0x420] sm:$0xf] %v2322
        %2355 = vst [vmem:[#allocation3 + $0x444] sm:$0xf] %v2323
        %2356 = vst [vmem:[#allocation3 + $0x468] sm:$0xf] %v2324
        %v2357 = vld [vmem:[%s821] sm:$0xf]
        %v2358 = vld [vmem:[%s821 + $0x4] sm:$0xf]
        %v2359 = vld [vmem:[%s821 + $0x8] sm:$0x1]
        %v2360 = vld [vmem:[%s821 + $0xc] sm:$0xf]
        %v2361 = vld [vmem:[%s821 + $0x10] sm:$0xf]
        %v2362 = vld [vmem:[%s821 + $0x14] sm:$0x1]
        %v2363 = vld [vmem:[%s821 + $0x18] sm:$0xf]
        %v2364 = vld [vmem:[%s821 + $0x1c] sm:$0xf]
        %v2365 = vld [vmem:[%s821 + $0x20] sm:$0x1]
        %v2366 = vld [vmem:[%s821 + $0x24] sm:$0xf]
        %v2367 = vld [vmem:[%s821 + $0x28] sm:$0xf]
        %v2368 = vld [vmem:[%s821 + $0x2c] sm:$0x1]
        %v2369 = vld [vmem:[%s821 + $0x30] sm:$0xf]
        %v2370 = vld [vmem:[%s821 + $0x34] sm:$0xf]
        %v2371 = vld [vmem:[%s821 + $0x38] sm:$0x1]
        %v2372 = vld [vmem:[%s821 + $0x3c] sm:$0xf]
        %v2373 = vld [vmem:[%s821 + $0x40] sm:$0xf]
        %v2374 = vld [vmem:[%s821 + $0x44] sm:$0x1]
        %v2375 = vld [vmem:[%s821 + $0x48] sm:$0xf]
        %v2376 = vld [vmem:[%s821 + $0x4c] sm:$0xf]
        %v2377 = vld [vmem:[%s821 + $0x50] sm:$0x1]
        %v2378 = vld [vmem:[%s821 + $0x54] sm:$0xf]
        %v2379 = vld [vmem:[%s821 + $0x58] sm:$0xf]
        %v2380 = vld [vmem:[%s821 + $0x5c] sm:$0x1]
        %v2381 = vld [vmem:[%s821 + $0x60] sm:$0xf]
        %v2382 = vld [vmem:[%s821 + $0x64] sm:$0xf]
        %v2383 = vld [vmem:[%s821 + $0x68] sm:$0x1]
        %v2384 = vld [vmem:[%s821 + $0x6c] sm:$0xf]
        %v2385 = vld [vmem:[%s821 + $0x70] sm:$0xf]
        %v2386 = vld [vmem:[%s821 + $0x74] sm:$0x1]
        %v2387 = vld [vmem:[%s821 + $0x78] sm:$0xf]
        %v2388 = vld [vmem:[%s821 + $0x7c] sm:$0xf]
        %v2389 = vld [vmem:[%s821 + $0x80] sm:$0x1]
        %v2390 = vld [vmem:[%s821 + $0x84] sm:$0xf]
        %v2391 = vld [vmem:[%s821 + $0x88] sm:$0xf]
        %v2392 = vld [vmem:[%s821 + $0x8c] sm:$0x1]
        %v2393 = vld [vmem:[%s821 + $0x90] sm:$0xf]
        %v2394 = vld [vmem:[%s821 + $0x94] sm:$0xf]
        %v2395 = vld [vmem:[%s821 + $0x98] sm:$0x1]
        %v2396 = vld [vmem:[%s821 + $0x9c] sm:$0xf]
        %v2397 = vld [vmem:[%s821 + $0xa0] sm:$0xf]
        %v2398 = vld [vmem:[%s821 + $0xa4] sm:$0x1]
        %v2399 = vld [vmem:[%s821 + $0xa8] sm:$0xf]
        %v2400 = vld [vmem:[%s821 + $0xac] sm:$0xf]
        %v2401 = vld [vmem:[%s821 + $0xb0] sm:$0x1]
        %v2402 = vld [vmem:[%s821 + $0xb4] sm:$0xf]
        %v2403 = vld [vmem:[%s821 + $0xb8] sm:$0xf]
        %v2404 = vld [vmem:[%s821 + $0xbc] sm:$0x1]
        %v2406 = vshrl.u32 %v2357, 16
        %v2408 = vrot.slane %v2406, 4
        %v2409 = vshll.u32 %v2357, 16
        %v2411 = vrot.slane %v2409, 5
        %v2412 = vor.u32 %v2408, %v2411
        %v2413 = vrot.slane %v2412, 4
        %v2415 = vshll.u32 %v2358, 16
        %v2417 = vrot.slane %v2415, 5
        %v2418 = vsel %vm1569, %v2413, %v2417
        %v2419 = vshrl.u32 %v2358, 16
        %v2421 = vrot.slane %v2419, 4
        %v2422 = vor.u32 %v2421, %v2417
        %v2423 = vrot.slane %v2422, 4
        %v2425 = vshll.u32 %v2359, 16
        %v2427 = vrot.slane %v2425, 5
        %v2428 = vsel %vm1569, %v2423, %v2427
        %v2430 = vshrl.u32 %v2360, 16
        %v2432 = vrot.slane %v2430, 4
        %v2433 = vshll.u32 %v2360, 16
        %v2435 = vrot.slane %v2433, 5
        %v2436 = vor.u32 %v2432, %v2435
        %v2437 = vrot.slane %v2436, 4
        %v2439 = vshll.u32 %v2361, 16
        %v2441 = vrot.slane %v2439, 5
        %v2442 = vsel %vm1569, %v2437, %v2441
        %v2443 = vshrl.u32 %v2361, 16
        %v2445 = vrot.slane %v2443, 4
        %v2446 = vor.u32 %v2445, %v2441
        %v2447 = vrot.slane %v2446, 4
        %v2449 = vshll.u32 %v2362, 16
        %v2451 = vrot.slane %v2449, 5
        %v2452 = vsel %vm1569, %v2447, %v2451
        %v2454 = vshrl.u32 %v2363, 16
        %v2456 = vrot.slane %v2454, 4
        %v2457 = vshll.u32 %v2363, 16
        %v2459 = vrot.slane %v2457, 5
        %v2460 = vor.u32 %v2456, %v2459
        %v2461 = vrot.slane %v2460, 4
        %v2463 = vshll.u32 %v2364, 16
        %v2465 = vrot.slane %v2463, 5
        %v2466 = vsel %vm1569, %v2461, %v2465
        %v2467 = vshrl.u32 %v2364, 16
        %v2469 = vrot.slane %v2467, 4
        %v2470 = vor.u32 %v2469, %v2465
        %v2471 = vrot.slane %v2470, 4
        %v2473 = vshll.u32 %v2365, 16
        %v2475 = vrot.slane %v2473, 5
        %v2476 = vsel %vm1569, %v2471, %v2475
        %v2478 = vshrl.u32 %v2366, 16
        %v2480 = vrot.slane %v2478, 4
        %v2481 = vshll.u32 %v2366, 16
        %v2483 = vrot.slane %v2481, 5
        %v2484 = vor.u32 %v2480, %v2483
        %v2485 = vrot.slane %v2484, 4
        %v2487 = vshll.u32 %v2367, 16
        %v2489 = vrot.slane %v2487, 5
        %v2490 = vsel %vm1569, %v2485, %v2489
        %v2491 = vshrl.u32 %v2367, 16
        %v2493 = vrot.slane %v2491, 4
        %v2494 = vor.u32 %v2493, %v2489
        %v2495 = vrot.slane %v2494, 4
        %v2497 = vshll.u32 %v2368, 16
        %v2499 = vrot.slane %v2497, 5
        %v2500 = vsel %vm1569, %v2495, %v2499
        %v2502 = vshrl.u32 %v2369, 16
        %v2504 = vrot.slane %v2502, 4
        %v2505 = vshll.u32 %v2369, 16
        %v2507 = vrot.slane %v2505, 5
        %v2508 = vor.u32 %v2504, %v2507
        %v2509 = vrot.slane %v2508, 4
        %v2511 = vshll.u32 %v2370, 16
        %v2513 = vrot.slane %v2511, 5
        %v2514 = vsel %vm1569, %v2509, %v2513
        %v2515 = vshrl.u32 %v2370, 16
        %v2517 = vrot.slane %v2515, 4
        %v2518 = vor.u32 %v2517, %v2513
        %v2519 = vrot.slane %v2518, 4
        %v2521 = vshll.u32 %v2371, 16
        %v2523 = vrot.slane %v2521, 5
        %v2524 = vsel %vm1569, %v2519, %v2523
        %v2526 = vshrl.u32 %v2372, 16
        %v2528 = vrot.slane %v2526, 4
        %v2529 = vshll.u32 %v2372, 16
        %v2531 = vrot.slane %v2529, 5
        %v2532 = vor.u32 %v2528, %v2531
        %v2533 = vrot.slane %v2532, 4
        %v2535 = vshll.u32 %v2373, 16
        %v2537 = vrot.slane %v2535, 5
        %v2538 = vsel %vm1569, %v2533, %v2537
        %v2539 = vshrl.u32 %v2373, 16
        %v2541 = vrot.slane %v2539, 4
        %v2542 = vor.u32 %v2541, %v2537
        %v2543 = vrot.slane %v2542, 4
        %v2545 = vshll.u32 %v2374, 16
        %v2547 = vrot.slane %v2545, 5
        %v2548 = vsel %vm1569, %v2543, %v2547
        %v2550 = vshrl.u32 %v2375, 16
        %v2552 = vrot.slane %v2550, 4
        %v2553 = vshll.u32 %v2375, 16
        %v2555 = vrot.slane %v2553, 5
        %v2556 = vor.u32 %v2552, %v2555
        %v2557 = vrot.slane %v2556, 4
        %v2559 = vshll.u32 %v2376, 16
        %v2561 = vrot.slane %v2559, 5
        %v2562 = vsel %vm1569, %v2557, %v2561
        %v2563 = vshrl.u32 %v2376, 16
        %v2565 = vrot.slane %v2563, 4
        %v2566 = vor.u32 %v2565, %v2561
        %v2567 = vrot.slane %v2566, 4
        %v2569 = vshll.u32 %v2377, 16
        %v2571 = vrot.slane %v2569, 5
        %v2572 = vsel %vm1569, %v2567, %v2571
        %v2574 = vshrl.u32 %v2378, 16
        %v2576 = vrot.slane %v2574, 4
        %v2577 = vshll.u32 %v2378, 16
        %v2579 = vrot.slane %v2577, 5
        %v2580 = vor.u32 %v2576, %v2579
        %v2581 = vrot.slane %v2580, 4
        %v2583 = vshll.u32 %v2379, 16
        %v2585 = vrot.slane %v2583, 5
        %v2586 = vsel %vm1569, %v2581, %v2585
        %v2587 = vshrl.u32 %v2379, 16
        %v2589 = vrot.slane %v2587, 4
        %v2590 = vor.u32 %v2589, %v2585
        %v2591 = vrot.slane %v2590, 4
        %v2593 = vshll.u32 %v2380, 16
        %v2595 = vrot.slane %v2593, 5
        %v2596 = vsel %vm1569, %v2591, %v2595
        %v2598 = vshrl.u32 %v2381, 16
        %v2600 = vrot.slane %v2598, 4
        %v2601 = vshll.u32 %v2381, 16
        %v2603 = vrot.slane %v2601, 5
        %v2604 = vor.u32 %v2600, %v2603
        %v2605 = vrot.slane %v2604, 4
        %v2607 = vshll.u32 %v2382, 16
        %v2609 = vrot.slane %v2607, 5
        %v2610 = vsel %vm1569, %v2605, %v2609
        %v2611 = vshrl.u32 %v2382, 16
        %v2613 = vrot.slane %v2611, 4
        %v2614 = vor.u32 %v2613, %v2609
        %v2615 = vrot.slane %v2614, 4
        %v2617 = vshll.u32 %v2383, 16
        %v2619 = vrot.slane %v2617, 5
        %v2620 = vsel %vm1569, %v2615, %v2619
        %v2622 = vshrl.u32 %v2384, 16
        %v2624 = vrot.slane %v2622, 4
        %v2625 = vshll.u32 %v2384, 16
        %v2627 = vrot.slane %v2625, 5
        %v2628 = vor.u32 %v2624, %v2627
        %v2629 = vrot.slane %v2628, 4
        %v2631 = vshll.u32 %v2385, 16
        %v2633 = vrot.slane %v2631, 5
        %v2634 = vsel %vm1569, %v2629, %v2633
        %v2635 = vshrl.u32 %v2385, 16
        %v2637 = vrot.slane %v2635, 4
        %v2638 = vor.u32 %v2637, %v2633
        %v2639 = vrot.slane %v2638, 4
        %v2641 = vshll.u32 %v2386, 16
        %v2643 = vrot.slane %v2641, 5
        %v2644 = vsel %vm1569, %v2639, %v2643
        %v2646 = vshrl.u32 %v2387, 16
        %v2648 = vrot.slane %v2646, 4
        %v2649 = vshll.u32 %v2387, 16
        %v2651 = vrot.slane %v2649, 5
        %v2652 = vor.u32 %v2648, %v2651
        %v2653 = vrot.slane %v2652, 4
        %v2655 = vshll.u32 %v2388, 16
        %v2657 = vrot.slane %v2655, 5
        %v2658 = vsel %vm1569, %v2653, %v2657
        %v2659 = vshrl.u32 %v2388, 16
        %v2661 = vrot.slane %v2659, 4
        %v2662 = vor.u32 %v2661, %v2657
        %v2663 = vrot.slane %v2662, 4
        %v2665 = vshll.u32 %v2389, 16
        %v2667 = vrot.slane %v2665, 5
        %v2668 = vsel %vm1569, %v2663, %v2667
        %v2670 = vshrl.u32 %v2390, 16
        %v2672 = vrot.slane %v2670, 4
        %v2673 = vshll.u32 %v2390, 16
        %v2675 = vrot.slane %v2673, 5
        %v2676 = vor.u32 %v2672, %v2675
        %v2677 = vrot.slane %v2676, 4
        %v2679 = vshll.u32 %v2391, 16
        %v2681 = vrot.slane %v2679, 5
        %v2682 = vsel %vm1569, %v2677, %v2681
        %v2683 = vshrl.u32 %v2391, 16
        %v2685 = vrot.slane %v2683, 4
        %v2686 = vor.u32 %v2685, %v2681
        %v2687 = vrot.slane %v2686, 4
        %v2689 = vshll.u32 %v2392, 16
        %v2691 = vrot.slane %v2689, 5
        %v2692 = vsel %vm1569, %v2687, %v2691
        %v2694 = vshrl.u32 %v2393, 16
        %v2696 = vrot.slane %v2694, 4
        %v2697 = vshll.u32 %v2393, 16
        %v2699 = vrot.slane %v2697, 5
        %v2700 = vor.u32 %v2696, %v2699
        %v2701 = vrot.slane %v2700, 4
        %v2703 = vshll.u32 %v2394, 16
        %v2705 = vrot.slane %v2703, 5
        %v2706 = vsel %vm1569, %v2701, %v2705
        %v2707 = vshrl.u32 %v2394, 16
        %v2709 = vrot.slane %v2707, 4
        %v2710 = vor.u32 %v2709, %v2705
        %v2711 = vrot.slane %v2710, 4
        %v2713 = vshll.u32 %v2395, 16
        %v2715 = vrot.slane %v2713, 5
        %v2716 = vsel %vm1569, %v2711, %v2715
        %v2718 = vshrl.u32 %v2396, 16
        %v2720 = vrot.slane %v2718, 4
        %v2721 = vshll.u32 %v2396, 16
        %v2723 = vrot.slane %v2721, 5
        %v2724 = vor.u32 %v2720, %v2723
        %v2725 = vrot.slane %v2724, 4
        %v2727 = vshll.u32 %v2397, 16
        %v2729 = vrot.slane %v2727, 5
        %v2730 = vsel %vm1569, %v2725, %v2729
        %v2731 = vshrl.u32 %v2397, 16
        %v2733 = vrot.slane %v2731, 4
        %v2734 = vor.u32 %v2733, %v2729
        %v2735 = vrot.slane %v2734, 4
        %v2737 = vshll.u32 %v2398, 16
        %v2739 = vrot.slane %v2737, 5
        %v2740 = vsel %vm1569, %v2735, %v2739
        %v2742 = vshrl.u32 %v2399, 16
        %v2744 = vrot.slane %v2742, 4
        %v2745 = vshll.u32 %v2399, 16
        %v2747 = vrot.slane %v2745, 5
        %v2748 = vor.u32 %v2744, %v2747
        %v2749 = vrot.slane %v2748, 4
        %v2751 = vshll.u32 %v2400, 16
        %v2753 = vrot.slane %v2751, 5
        %v2754 = vsel %vm1569, %v2749, %v2753
        %v2755 = vshrl.u32 %v2400, 16
        %v2757 = vrot.slane %v2755, 4
        %v2758 = vor.u32 %v2757, %v2753
        %v2759 = vrot.slane %v2758, 4
        %v2761 = vshll.u32 %v2401, 16
        %v2763 = vrot.slane %v2761, 5
        %v2764 = vsel %vm1569, %v2759, %v2763
        %v2766 = vshrl.u32 %v2402, 16
        %v2768 = vrot.slane %v2766, 4
        %v2769 = vshll.u32 %v2402, 16
        %v2771 = vrot.slane %v2769, 5
        %v2772 = vor.u32 %v2768, %v2771
        %v2773 = vrot.slane %v2772, 4
        %v2775 = vshll.u32 %v2403, 16
        %v2777 = vrot.slane %v2775, 5
        %v2778 = vsel %vm1569, %v2773, %v2777
        %v2779 = vshrl.u32 %v2403, 16
        %v2781 = vrot.slane %v2779, 4
        %v2782 = vor.u32 %v2781, %v2777
        %v2783 = vrot.slane %v2782, 4
        %v2785 = vshll.u32 %v2404, 16
        %v2787 = vrot.slane %v2785, 5
        %v2788 = vsel %vm1569, %v2783, %v2787
        %2821 = vst [vmem:[#allocation3 + $0x10] sm:$0xf] %v2418
        %2822 = vst [vmem:[#allocation3 + $0x34] sm:$0xf] %v2428
        %2823 = vst [vmem:[#allocation3 + $0x58] sm:$0xf] %v2442
        %2824 = vst [vmem:[#allocation3 + $0x7c] sm:$0xf] %v2452
        %2825 = vst [vmem:[#allocation3 + $0xa0] sm:$0xf] %v2466
        %2826 = vst [vmem:[#allocation3 + $0xc4] sm:$0xf] %v2476
        %2827 = vst [vmem:[#allocation3 + $0xe8] sm:$0xf] %v2490
        %2828 = vst [vmem:[#allocation3 + $0x10c] sm:$0xf] %v2500
        %2829 = vst [vmem:[#allocation3 + $0x130] sm:$0xf] %v2514
        %2830 = vst [vmem:[#allocation3 + $0x154] sm:$0xf] %v2524
        %2831 = vst [vmem:[#allocation3 + $0x178] sm:$0xf] %v2538
        %2832 = vst [vmem:[#allocation3 + $0x19c] sm:$0xf] %v2548
        %2833 = vst [vmem:[#allocation3 + $0x1c0] sm:$0xf] %v2562
        %2834 = vst [vmem:[#allocation3 + $0x1e4] sm:$0xf] %v2572
        %2835 = vst [vmem:[#allocation3 + $0x208] sm:$0xf] %v2586
        %2836 = vst [vmem:[#allocation3 + $0x22c] sm:$0xf] %v2596
        %2837 = vst [vmem:[#allocation3 + $0x250] sm:$0xf] %v2610
        %2838 = vst [vmem:[#allocation3 + $0x274] sm:$0xf] %v2620
        %2839 = vst [vmem:[#allocation3 + $0x298] sm:$0xf] %v2634
        %2840 = vst [vmem:[#allocation3 + $0x2bc] sm:$0xf] %v2644
        %2841 = vst [vmem:[#allocation3 + $0x2e0] sm:$0xf] %v2658
        %2842 = vst [vmem:[#allocation3 + $0x304] sm:$0xf] %v2668
        %2843 = vst [vmem:[#allocation3 + $0x328] sm:$0xf] %v2682
        %2844 = vst [vmem:[#allocation3 + $0x34c] sm:$0xf] %v2692
        %2845 = vst [vmem:[#allocation3 + $0x370] sm:$0xf] %v2706
        %2846 = vst [vmem:[#allocation3 + $0x394] sm:$0xf] %v2716
        %2847 = vst [vmem:[#allocation3 + $0x3b8] sm:$0xf] %v2730
        %2848 = vst [vmem:[#allocation3 + $0x3dc] sm:$0xf] %v2740
        %2849 = vst [vmem:[#allocation3 + $0x400] sm:$0xf] %v2754
        %2850 = vst [vmem:[#allocation3 + $0x424] sm:$0xf] %v2764
        %2851 = vst [vmem:[#allocation3 + $0x448] sm:$0xf] %v2778
        %2852 = vst [vmem:[#allocation3 + $0x46c] sm:$0xf] %v2788
        %v2853 = vld [vmem:[%s821] sm:$0xe]
        %v2854 = vld [vmem:[%s821 + $0x4] sm:$0xf]
        %v2855 = vld [vmem:[%s821 + $0x8] sm:$0x1]
        %v2856 = vld [vmem:[%s821 + $0xc] sm:$0xe]
        %v2857 = vld [vmem:[%s821 + $0x10] sm:$0xf]
        %v2858 = vld [vmem:[%s821 + $0x14] sm:$0x1]
        %v2859 = vld [vmem:[%s821 + $0x18] sm:$0xe]
        %v2860 = vld [vmem:[%s821 + $0x1c] sm:$0xf]
        %v2861 = vld [vmem:[%s821 + $0x20] sm:$0x1]
        %v2862 = vld [vmem:[%s821 + $0x24] sm:$0xe]
        %v2863 = vld [vmem:[%s821 + $0x28] sm:$0xf]
        %v2864 = vld [vmem:[%s821 + $0x2c] sm:$0x1]
        %v2865 = vld [vmem:[%s821 + $0x30] sm:$0xe]
        %v2866 = vld [vmem:[%s821 + $0x34] sm:$0xf]
        %v2867 = vld [vmem:[%s821 + $0x38] sm:$0x1]
        %v2868 = vld [vmem:[%s821 + $0x3c] sm:$0xe]
        %v2869 = vld [vmem:[%s821 + $0x40] sm:$0xf]
        %v2870 = vld [vmem:[%s821 + $0x44] sm:$0x1]
        %v2871 = vld [vmem:[%s821 + $0x48] sm:$0xe]
        %v2872 = vld [vmem:[%s821 + $0x4c] sm:$0xf]
        %v2873 = vld [vmem:[%s821 + $0x50] sm:$0x1]
        %v2874 = vld [vmem:[%s821 + $0x54] sm:$0xe]
        %v2875 = vld [vmem:[%s821 + $0x58] sm:$0xf]
        %v2876 = vld [vmem:[%s821 + $0x5c] sm:$0x1]
        %v2877 = vld [vmem:[%s821 + $0x60] sm:$0xe]
        %v2878 = vld [vmem:[%s821 + $0x64] sm:$0xf]
        %v2879 = vld [vmem:[%s821 + $0x68] sm:$0x1]
        %v2880 = vld [vmem:[%s821 + $0x6c] sm:$0xe]
        %v2881 = vld [vmem:[%s821 + $0x70] sm:$0xf]
        %v2882 = vld [vmem:[%s821 + $0x74] sm:$0x1]
        %v2883 = vld [vmem:[%s821 + $0x78] sm:$0xe]
        %v2884 = vld [vmem:[%s821 + $0x7c] sm:$0xf]
        %v2885 = vld [vmem:[%s821 + $0x80] sm:$0x1]
        %v2886 = vld [vmem:[%s821 + $0x84] sm:$0xe]
        %v2887 = vld [vmem:[%s821 + $0x88] sm:$0xf]
        %v2888 = vld [vmem:[%s821 + $0x8c] sm:$0x1]
        %v2889 = vld [vmem:[%s821 + $0x90] sm:$0xe]
        %v2890 = vld [vmem:[%s821 + $0x94] sm:$0xf]
        %v2891 = vld [vmem:[%s821 + $0x98] sm:$0x1]
        %v2892 = vld [vmem:[%s821 + $0x9c] sm:$0xe]
        %v2893 = vld [vmem:[%s821 + $0xa0] sm:$0xf]
        %v2894 = vld [vmem:[%s821 + $0xa4] sm:$0x1]
        %v2895 = vld [vmem:[%s821 + $0xa8] sm:$0xe]
        %v2896 = vld [vmem:[%s821 + $0xac] sm:$0xf]
        %v2897 = vld [vmem:[%s821 + $0xb0] sm:$0x1]
        %v2898 = vld [vmem:[%s821 + $0xb4] sm:$0xe]
        %v2899 = vld [vmem:[%s821 + $0xb8] sm:$0xf]
        %v2900 = vld [vmem:[%s821 + $0xbc] sm:$0x1]
        %v2949 = vrot.slane %v2853, 5
        %v2950 = vrot.slane %v2949, 4
        %v2951 = vrot.slane %v2854, 5
        %v2952 = vsel %vm2116, %v2950, %v2951
        %v2953 = vrot.slane %v2951, 4
        %v2954 = vrot.slane %v2855, 5
        %v2955 = vsel %vm2116, %v2953, %v2954
        %v2956 = vrot.slane %v2856, 5
        %v2957 = vrot.slane %v2956, 4
        %v2958 = vrot.slane %v2857, 5
        %v2959 = vsel %vm2116, %v2957, %v2958
        %v2960 = vrot.slane %v2958, 4
        %v2961 = vrot.slane %v2858, 5
        %v2962 = vsel %vm2116, %v2960, %v2961
        %v2963 = vrot.slane %v2859, 5
        %v2964 = vrot.slane %v2963, 4
        %v2965 = vrot.slane %v2860, 5
        %v2966 = vsel %vm2116, %v2964, %v2965
        %v2967 = vrot.slane %v2965, 4
        %v2968 = vrot.slane %v2861, 5
        %v2969 = vsel %vm2116, %v2967, %v2968
        %v2970 = vrot.slane %v2862, 5
        %v2971 = vrot.slane %v2970, 4
        %v2972 = vrot.slane %v2863, 5
        %v2973 = vsel %vm2116, %v2971, %v2972
        %v2974 = vrot.slane %v2972, 4
        %v2975 = vrot.slane %v2864, 5
        %v2976 = vsel %vm2116, %v2974, %v2975
        %v2977 = vrot.slane %v2865, 5
        %v2978 = vrot.slane %v2977, 4
        %v2979 = vrot.slane %v2866, 5
        %v2980 = vsel %vm2116, %v2978, %v2979
        %v2981 = vrot.slane %v2979, 4
        %v2982 = vrot.slane %v2867, 5
        %v2983 = vsel %vm2116, %v2981, %v2982
        %v2984 = vrot.slane %v2868, 5
        %v2985 = vrot.slane %v2984, 4
        %v2986 = vrot.slane %v2869, 5
        %v2987 = vsel %vm2116, %v2985, %v2986
        %v2988 = vrot.slane %v2986, 4
        %v2989 = vrot.slane %v2870, 5
        %v2990 = vsel %vm2116, %v2988, %v2989
        %v2991 = vrot.slane %v2871, 5
        %v2992 = vrot.slane %v2991, 4
        %v2993 = vrot.slane %v2872, 5
        %v2994 = vsel %vm2116, %v2992, %v2993
        %v2995 = vrot.slane %v2993, 4
        %v2996 = vrot.slane %v2873, 5
        %v2997 = vsel %vm2116, %v2995, %v2996
        %v2998 = vrot.slane %v2874, 5
        %v2999 = vrot.slane %v2998, 4
        %v3000 = vrot.slane %v2875, 5
        %v3001 = vsel %vm2116, %v2999, %v3000
        %v3002 = vrot.slane %v3000, 4
        %v3003 = vrot.slane %v2876, 5
        %v3004 = vsel %vm2116, %v3002, %v3003
        %v3005 = vrot.slane %v2877, 5
        %v3006 = vrot.slane %v3005, 4
        %v3007 = vrot.slane %v2878, 5
        %v3008 = vsel %vm2116, %v3006, %v3007
        %v3009 = vrot.slane %v3007, 4
        %v3010 = vrot.slane %v2879, 5
        %v3011 = vsel %vm2116, %v3009, %v3010
        %v3012 = vrot.slane %v2880, 5
        %v3013 = vrot.slane %v3012, 4
        %v3014 = vrot.slane %v2881, 5
        %v3015 = vsel %vm2116, %v3013, %v3014
        %v3016 = vrot.slane %v3014, 4
        %v3017 = vrot.slane %v2882, 5
        %v3018 = vsel %vm2116, %v3016, %v3017
        %v3019 = vrot.slane %v2883, 5
        %v3020 = vrot.slane %v3019, 4
        %v3021 = vrot.slane %v2884, 5
        %v3022 = vsel %vm2116, %v3020, %v3021
        %v3023 = vrot.slane %v3021, 4
        %v3024 = vrot.slane %v2885, 5
        %v3025 = vsel %vm2116, %v3023, %v3024
        %v3026 = vrot.slane %v2886, 5
        %v3027 = vrot.slane %v3026, 4
        %v3028 = vrot.slane %v2887, 5
        %v3029 = vsel %vm2116, %v3027, %v3028
        %v3030 = vrot.slane %v3028, 4
        %v3031 = vrot.slane %v2888, 5
        %v3032 = vsel %vm2116, %v3030, %v3031
        %v3033 = vrot.slane %v2889, 5
        %v3034 = vrot.slane %v3033, 4
        %v3035 = vrot.slane %v2890, 5
        %v3036 = vsel %vm2116, %v3034, %v3035
        %v3037 = vrot.slane %v3035, 4
        %v3038 = vrot.slane %v2891, 5
        %v3039 = vsel %vm2116, %v3037, %v3038
        %v3040 = vrot.slane %v2892, 5
        %v3041 = vrot.slane %v3040, 4
        %v3042 = vrot.slane %v2893, 5
        %v3043 = vsel %vm2116, %v3041, %v3042
        %v3044 = vrot.slane %v3042, 4
        %v3045 = vrot.slane %v2894, 5
        %v3046 = vsel %vm2116, %v3044, %v3045
        %v3047 = vrot.slane %v2895, 5
        %v3048 = vrot.slane %v3047, 4
        %v3049 = vrot.slane %v2896, 5
        %v3050 = vsel %vm2116, %v3048, %v3049
        %v3051 = vrot.slane %v3049, 4
        %v3052 = vrot.slane %v2897, 5
        %v3053 = vsel %vm2116, %v3051, %v3052
        %v3054 = vrot.slane %v2898, 5
        %v3055 = vrot.slane %v3054, 4
        %v3056 = vrot.slane %v2899, 5
        %v3057 = vsel %vm2116, %v3055, %v3056
        %v3058 = vrot.slane %v3056, 4
        %v3059 = vrot.slane %v2900, 5
        %v3060 = vsel %vm2116, %v3058, %v3059
        %3093 = vst [vmem:[#allocation3 + $0x14] sm:$0xf] %v2952
        %3094 = vst [vmem:[#allocation3 + $0x38] sm:$0xf] %v2955
        %3095 = vst [vmem:[#allocation3 + $0x5c] sm:$0xf] %v2959
        %3096 = vst [vmem:[#allocation3 + $0x80] sm:$0xf] %v2962
        %3097 = vst [vmem:[#allocation3 + $0xa4] sm:$0xf] %v2966
        %3098 = vst [vmem:[#allocation3 + $0xc8] sm:$0xf] %v2969
        %3099 = vst [vmem:[#allocation3 + $0xec] sm:$0xf] %v2973
        %3100 = vst [vmem:[#allocation3 + $0x110] sm:$0xf] %v2976
        %3101 = vst [vmem:[#allocation3 + $0x134] sm:$0xf] %v2980
        %3102 = vst [vmem:[#allocation3 + $0x158] sm:$0xf] %v2983
        %3103 = vst [vmem:[#allocation3 + $0x17c] sm:$0xf] %v2987
        %3104 = vst [vmem:[#allocation3 + $0x1a0] sm:$0xf] %v2990
        %3105 = vst [vmem:[#allocation3 + $0x1c4] sm:$0xf] %v2994
        %3106 = vst [vmem:[#allocation3 + $0x1e8] sm:$0xf] %v2997
        %3107 = vst [vmem:[#allocation3 + $0x20c] sm:$0xf] %v3001
        %3108 = vst [vmem:[#allocation3 + $0x230] sm:$0xf] %v3004
        %3109 = vst [vmem:[#allocation3 + $0x254] sm:$0xf] %v3008
        %3110 = vst [vmem:[#allocation3 + $0x278] sm:$0xf] %v3011
        %3111 = vst [vmem:[#allocation3 + $0x29c] sm:$0xf] %v3015
        %3112 = vst [vmem:[#allocation3 + $0x2c0] sm:$0xf] %v3018
        %3113 = vst [vmem:[#allocation3 + $0x2e4] sm:$0xf] %v3022
        %3114 = vst [vmem:[#allocation3 + $0x308] sm:$0xf] %v3025
        %3115 = vst [vmem:[#allocation3 + $0x32c] sm:$0xf] %v3029
        %3116 = vst [vmem:[#allocation3 + $0x350] sm:$0xf] %v3032
        %3117 = vst [vmem:[#allocation3 + $0x374] sm:$0xf] %v3036
        %3118 = vst [vmem:[#allocation3 + $0x398] sm:$0xf] %v3039
        %3119 = vst [vmem:[#allocation3 + $0x3bc] sm:$0xf] %v3043
        %3120 = vst [vmem:[#allocation3 + $0x3e0] sm:$0xf] %v3046
        %3121 = vst [vmem:[#allocation3 + $0x404] sm:$0xf] %v3050
        %3122 = vst [vmem:[#allocation3 + $0x428] sm:$0xf] %v3053
        %3123 = vst [vmem:[#allocation3 + $0x44c] sm:$0xf] %v3057
        %3124 = vst [vmem:[#allocation3 + $0x470] sm:$0xf] %v3060
        %s3125 = scalar_lea.vmem [#allocation2], 24
        %v3126 = vld [vmem:[%s3125] sm:$0xf]
        %v3127 = vld [vmem:[%s3125 + $0x4] sm:$0xf]
        %v3128 = vld [vmem:[%s3125 + $0xc] sm:$0xf]
        %v3129 = vld [vmem:[%s3125 + $0x10] sm:$0xf]
        %v3130 = vld [vmem:[%s3125 + $0x18] sm:$0xf]
        %v3131 = vld [vmem:[%s3125 + $0x1c] sm:$0xf]
        %v3132 = vld [vmem:[%s3125 + $0x24] sm:$0xf]
        %v3133 = vld [vmem:[%s3125 + $0x28] sm:$0xf]
        %v3134 = vld [vmem:[%s3125 + $0x30] sm:$0xf]
        %v3135 = vld [vmem:[%s3125 + $0x34] sm:$0xf]
        %v3136 = vld [vmem:[%s3125 + $0x3c] sm:$0xf]
        %v3137 = vld [vmem:[%s3125 + $0x40] sm:$0xf]
        %v3138 = vld [vmem:[%s3125 + $0x48] sm:$0xf]
        %v3139 = vld [vmem:[%s3125 + $0x4c] sm:$0xf]
        %v3140 = vld [vmem:[%s3125 + $0x54] sm:$0xf]
        %v3141 = vld [vmem:[%s3125 + $0x58] sm:$0xf]
        %v3142 = vld [vmem:[%s3125 + $0x60] sm:$0xf]
        %v3143 = vld [vmem:[%s3125 + $0x64] sm:$0xf]
        %v3144 = vld [vmem:[%s3125 + $0x6c] sm:$0xf]
        %v3145 = vld [vmem:[%s3125 + $0x70] sm:$0xf]
        %v3146 = vld [vmem:[%s3125 + $0x78] sm:$0xf]
        %v3147 = vld [vmem:[%s3125 + $0x7c] sm:$0xf]
        %v3148 = vld [vmem:[%s3125 + $0x84] sm:$0xf]
        %v3149 = vld [vmem:[%s3125 + $0x88] sm:$0xf]
        %v3150 = vld [vmem:[%s3125 + $0x90] sm:$0xf]
        %v3151 = vld [vmem:[%s3125 + $0x94] sm:$0xf]
        %v3152 = vld [vmem:[%s3125 + $0x9c] sm:$0xf]
        %v3153 = vld [vmem:[%s3125 + $0xa0] sm:$0xf]
        %v3154 = vld [vmem:[%s3125 + $0xa8] sm:$0xf]
        %v3155 = vld [vmem:[%s3125 + $0xac] sm:$0xf]
        %v3156 = vld [vmem:[%s3125 + $0xb4] sm:$0xf]
        %v3157 = vld [vmem:[%s3125 + $0xb8] sm:$0xf]
        %3158 = vst [vmem:[#allocation3 + $0x18] sm:$0xf] %v3126
        %3159 = vst [vmem:[#allocation3 + $0x3c] sm:$0xf] %v3127
        %3160 = vst [vmem:[#allocation3 + $0x60] sm:$0xf] %v3128
        %3161 = vst [vmem:[#allocation3 + $0x84] sm:$0xf] %v3129
        %3162 = vst [vmem:[#allocation3 + $0xa8] sm:$0xf] %v3130
        %3163 = vst [vmem:[#allocation3 + $0xcc] sm:$0xf] %v3131
        %3164 = vst [vmem:[#allocation3 + $0xf0] sm:$0xf] %v3132
        %3165 = vst [vmem:[#allocation3 + $0x114] sm:$0xf] %v3133
        %3166 = vst [vmem:[#allocation3 + $0x138] sm:$0xf] %v3134
        %3167 = vst [vmem:[#allocation3 + $0x15c] sm:$0xf] %v3135
        %3168 = vst [vmem:[#allocation3 + $0x180] sm:$0xf] %v3136
        %3169 = vst [vmem:[#allocation3 + $0x1a4] sm:$0xf] %v3137
        %3170 = vst [vmem:[#allocation3 + $0x1c8] sm:$0xf] %v3138
        %3171 = vst [vmem:[#allocation3 + $0x1ec] sm:$0xf] %v3139
        %3172 = vst [vmem:[#allocation3 + $0x210] sm:$0xf] %v3140
        %3173 = vst [vmem:[#allocation3 + $0x234] sm:$0xf] %v3141
        %3174 = vst [vmem:[#allocation3 + $0x258] sm:$0xf] %v3142
        %3175 = vst [vmem:[#allocation3 + $0x27c] sm:$0xf] %v3143
        %3176 = vst [vmem:[#allocation3 + $0x2a0] sm:$0xf] %v3144
        %3177 = vst [vmem:[#allocation3 + $0x2c4] sm:$0xf] %v3145
        %3178 = vst [vmem:[#allocation3 + $0x2e8] sm:$0xf] %v3146
        %3179 = vst [vmem:[#allocation3 + $0x30c] sm:$0xf] %v3147
        %3180 = vst [vmem:[#allocation3 + $0x330] sm:$0xf] %v3148
        %3181 = vst [vmem:[#allocation3 + $0x354] sm:$0xf] %v3149
        %3182 = vst [vmem:[#allocation3 + $0x378] sm:$0xf] %v3150
        %3183 = vst [vmem:[#allocation3 + $0x39c] sm:$0xf] %v3151
        %3184 = vst [vmem:[#allocation3 + $0x3c0] sm:$0xf] %v3152
        %3185 = vst [vmem:[#allocation3 + $0x3e4] sm:$0xf] %v3153
        %3186 = vst [vmem:[#allocation3 + $0x408] sm:$0xf] %v3154
        %3187 = vst [vmem:[#allocation3 + $0x42c] sm:$0xf] %v3155
        %3188 = vst [vmem:[#allocation3 + $0x450] sm:$0xf] %v3156
        %3189 = vst [vmem:[#allocation3 + $0x474] sm:$0xf] %v3157
        %v3190 = vld [vmem:[%s3125] sm:$0xf]
        %v3191 = vld [vmem:[%s3125 + $0x4] sm:$0xf]
        %v3192 = vld [vmem:[%s3125 + $0x8] sm:$0x1]
        %v3193 = vld [vmem:[%s3125 + $0xc] sm:$0xf]
        %v3194 = vld [vmem:[%s3125 + $0x10] sm:$0xf]
        %v3195 = vld [vmem:[%s3125 + $0x14] sm:$0x1]
        %v3196 = vld [vmem:[%s3125 + $0x18] sm:$0xf]
        %v3197 = vld [vmem:[%s3125 + $0x1c] sm:$0xf]
        %v3198 = vld [vmem:[%s3125 + $0x20] sm:$0x1]
        %v3199 = vld [vmem:[%s3125 + $0x24] sm:$0xf]
        %v3200 = vld [vmem:[%s3125 + $0x28] sm:$0xf]
        %v3201 = vld [vmem:[%s3125 + $0x2c] sm:$0x1]
        %v3202 = vld [vmem:[%s3125 + $0x30] sm:$0xf]
        %v3203 = vld [vmem:[%s3125 + $0x34] sm:$0xf]
        %v3204 = vld [vmem:[%s3125 + $0x38] sm:$0x1]
        %v3205 = vld [vmem:[%s3125 + $0x3c] sm:$0xf]
        %v3206 = vld [vmem:[%s3125 + $0x40] sm:$0xf]
        %v3207 = vld [vmem:[%s3125 + $0x44] sm:$0x1]
        %v3208 = vld [vmem:[%s3125 + $0x48] sm:$0xf]
        %v3209 = vld [vmem:[%s3125 + $0x4c] sm:$0xf]
        %v3210 = vld [vmem:[%s3125 + $0x50] sm:$0x1]
        %v3211 = vld [vmem:[%s3125 + $0x54] sm:$0xf]
        %v3212 = vld [vmem:[%s3125 + $0x58] sm:$0xf]
        %v3213 = vld [vmem:[%s3125 + $0x5c] sm:$0x1]
        %v3214 = vld [vmem:[%s3125 + $0x60] sm:$0xf]
        %v3215 = vld [vmem:[%s3125 + $0x64] sm:$0xf]
        %v3216 = vld [vmem:[%s3125 + $0x68] sm:$0x1]
        %v3217 = vld [vmem:[%s3125 + $0x6c] sm:$0xf]
        %v3218 = vld [vmem:[%s3125 + $0x70] sm:$0xf]
        %v3219 = vld [vmem:[%s3125 + $0x74] sm:$0x1]
        %v3220 = vld [vmem:[%s3125 + $0x78] sm:$0xf]
        %v3221 = vld [vmem:[%s3125 + $0x7c] sm:$0xf]
        %v3222 = vld [vmem:[%s3125 + $0x80] sm:$0x1]
        %v3223 = vld [vmem:[%s3125 + $0x84] sm:$0xf]
        %v3224 = vld [vmem:[%s3125 + $0x88] sm:$0xf]
        %v3225 = vld [vmem:[%s3125 + $0x8c] sm:$0x1]
        %v3226 = vld [vmem:[%s3125 + $0x90] sm:$0xf]
        %v3227 = vld [vmem:[%s3125 + $0x94] sm:$0xf]
        %v3228 = vld [vmem:[%s3125 + $0x98] sm:$0x1]
        %v3229 = vld [vmem:[%s3125 + $0x9c] sm:$0xf]
        %v3230 = vld [vmem:[%s3125 + $0xa0] sm:$0xf]
        %v3231 = vld [vmem:[%s3125 + $0xa4] sm:$0x1]
        %v3232 = vld [vmem:[%s3125 + $0xa8] sm:$0xf]
        %v3233 = vld [vmem:[%s3125 + $0xac] sm:$0xf]
        %v3234 = vld [vmem:[%s3125 + $0xb0] sm:$0x1]
        %v3235 = vld [vmem:[%s3125 + $0xb4] sm:$0xf]
        %v3236 = vld [vmem:[%s3125 + $0xb8] sm:$0xf]
        %v3237 = vld [vmem:[%s3125 + $0xbc] sm:$0x1]
        %v3239 = vshrl.u32 %v3190, 16
        %v3241 = vrot.slane %v3239, 4
        %v3242 = vshll.u32 %v3190, 16
        %v3244 = vrot.slane %v3242, 5
        %v3245 = vor.u32 %v3241, %v3244
        %v3246 = vrot.slane %v3245, 4
        %v3248 = vshll.u32 %v3191, 16
        %v3250 = vrot.slane %v3248, 5
        %v3251 = vsel %vm1569, %v3246, %v3250
        %v3252 = vshrl.u32 %v3191, 16
        %v3254 = vrot.slane %v3252, 4
        %v3255 = vor.u32 %v3254, %v3250
        %v3256 = vrot.slane %v3255, 4
        %v3258 = vshll.u32 %v3192, 16
        %v3260 = vrot.slane %v3258, 5
        %v3261 = vsel %vm1569, %v3256, %v3260
        %v3263 = vshrl.u32 %v3193, 16
        %v3265 = vrot.slane %v3263, 4
        %v3266 = vshll.u32 %v3193, 16
        %v3268 = vrot.slane %v3266, 5
        %v3269 = vor.u32 %v3265, %v3268
        %v3270 = vrot.slane %v3269, 4
        %v3272 = vshll.u32 %v3194, 16
        %v3274 = vrot.slane %v3272, 5
        %v3275 = vsel %vm1569, %v3270, %v3274
        %v3276 = vshrl.u32 %v3194, 16
        %v3278 = vrot.slane %v3276, 4
        %v3279 = vor.u32 %v3278, %v3274
        %v3280 = vrot.slane %v3279, 4
        %v3282 = vshll.u32 %v3195, 16
        %v3284 = vrot.slane %v3282, 5
        %v3285 = vsel %vm1569, %v3280, %v3284
        %v3287 = vshrl.u32 %v3196, 16
        %v3289 = vrot.slane %v3287, 4
        %v3290 = vshll.u32 %v3196, 16
        %v3292 = vrot.slane %v3290, 5
        %v3293 = vor.u32 %v3289, %v3292
        %v3294 = vrot.slane %v3293, 4
        %v3296 = vshll.u32 %v3197, 16
        %v3298 = vrot.slane %v3296, 5
        %v3299 = vsel %vm1569, %v3294, %v3298
        %v3300 = vshrl.u32 %v3197, 16
        %v3302 = vrot.slane %v3300, 4
        %v3303 = vor.u32 %v3302, %v3298
        %v3304 = vrot.slane %v3303, 4
        %v3306 = vshll.u32 %v3198, 16
        %v3308 = vrot.slane %v3306, 5
        %v3309 = vsel %vm1569, %v3304, %v3308
        %v3311 = vshrl.u32 %v3199, 16
        %v3313 = vrot.slane %v3311, 4
        %v3314 = vshll.u32 %v3199, 16
        %v3316 = vrot.slane %v3314, 5
        %v3317 = vor.u32 %v3313, %v3316
        %v3318 = vrot.slane %v3317, 4
        %v3320 = vshll.u32 %v3200, 16
        %v3322 = vrot.slane %v3320, 5
        %v3323 = vsel %vm1569, %v3318, %v3322
        %v3324 = vshrl.u32 %v3200, 16
        %v3326 = vrot.slane %v3324, 4
        %v3327 = vor.u32 %v3326, %v3322
        %v3328 = vrot.slane %v3327, 4
        %v3330 = vshll.u32 %v3201, 16
        %v3332 = vrot.slane %v3330, 5
        %v3333 = vsel %vm1569, %v3328, %v3332
        %v3335 = vshrl.u32 %v3202, 16
        %v3337 = vrot.slane %v3335, 4
        %v3338 = vshll.u32 %v3202, 16
        %v3340 = vrot.slane %v3338, 5
        %v3341 = vor.u32 %v3337, %v3340
        %v3342 = vrot.slane %v3341, 4
        %v3344 = vshll.u32 %v3203, 16
        %v3346 = vrot.slane %v3344, 5
        %v3347 = vsel %vm1569, %v3342, %v3346
        %v3348 = vshrl.u32 %v3203, 16
        %v3350 = vrot.slane %v3348, 4
        %v3351 = vor.u32 %v3350, %v3346
        %v3352 = vrot.slane %v3351, 4
        %v3354 = vshll.u32 %v3204, 16
        %v3356 = vrot.slane %v3354, 5
        %v3357 = vsel %vm1569, %v3352, %v3356
        %v3359 = vshrl.u32 %v3205, 16
        %v3361 = vrot.slane %v3359, 4
        %v3362 = vshll.u32 %v3205, 16
        %v3364 = vrot.slane %v3362, 5
        %v3365 = vor.u32 %v3361, %v3364
        %v3366 = vrot.slane %v3365, 4
        %v3368 = vshll.u32 %v3206, 16
        %v3370 = vrot.slane %v3368, 5
        %v3371 = vsel %vm1569, %v3366, %v3370
        %v3372 = vshrl.u32 %v3206, 16
        %v3374 = vrot.slane %v3372, 4
        %v3375 = vor.u32 %v3374, %v3370
        %v3376 = vrot.slane %v3375, 4
        %v3378 = vshll.u32 %v3207, 16
        %v3380 = vrot.slane %v3378, 5
        %v3381 = vsel %vm1569, %v3376, %v3380
        %v3383 = vshrl.u32 %v3208, 16
        %v3385 = vrot.slane %v3383, 4
        %v3386 = vshll.u32 %v3208, 16
        %v3388 = vrot.slane %v3386, 5
        %v3389 = vor.u32 %v3385, %v3388
        %v3390 = vrot.slane %v3389, 4
        %v3392 = vshll.u32 %v3209, 16
        %v3394 = vrot.slane %v3392, 5
        %v3395 = vsel %vm1569, %v3390, %v3394
        %v3396 = vshrl.u32 %v3209, 16
        %v3398 = vrot.slane %v3396, 4
        %v3399 = vor.u32 %v3398, %v3394
        %v3400 = vrot.slane %v3399, 4
        %v3402 = vshll.u32 %v3210, 16
        %v3404 = vrot.slane %v3402, 5
        %v3405 = vsel %vm1569, %v3400, %v3404
        %v3407 = vshrl.u32 %v3211, 16
        %v3409 = vrot.slane %v3407, 4
        %v3410 = vshll.u32 %v3211, 16
        %v3412 = vrot.slane %v3410, 5
        %v3413 = vor.u32 %v3409, %v3412
        %v3414 = vrot.slane %v3413, 4
        %v3416 = vshll.u32 %v3212, 16
        %v3418 = vrot.slane %v3416, 5
        %v3419 = vsel %vm1569, %v3414, %v3418
        %v3420 = vshrl.u32 %v3212, 16
        %v3422 = vrot.slane %v3420, 4
        %v3423 = vor.u32 %v3422, %v3418
        %v3424 = vrot.slane %v3423, 4
        %v3426 = vshll.u32 %v3213, 16
        %v3428 = vrot.slane %v3426, 5
        %v3429 = vsel %vm1569, %v3424, %v3428
        %v3431 = vshrl.u32 %v3214, 16
        %v3433 = vrot.slane %v3431, 4
        %v3434 = vshll.u32 %v3214, 16
        %v3436 = vrot.slane %v3434, 5
        %v3437 = vor.u32 %v3433, %v3436
        %v3438 = vrot.slane %v3437, 4
        %v3440 = vshll.u32 %v3215, 16
        %v3442 = vrot.slane %v3440, 5
        %v3443 = vsel %vm1569, %v3438, %v3442
        %v3444 = vshrl.u32 %v3215, 16
        %v3446 = vrot.slane %v3444, 4
        %v3447 = vor.u32 %v3446, %v3442
        %v3448 = vrot.slane %v3447, 4
        %v3450 = vshll.u32 %v3216, 16
        %v3452 = vrot.slane %v3450, 5
        %v3453 = vsel %vm1569, %v3448, %v3452
        %v3455 = vshrl.u32 %v3217, 16
        %v3457 = vrot.slane %v3455, 4
        %v3458 = vshll.u32 %v3217, 16
        %v3460 = vrot.slane %v3458, 5
        %v3461 = vor.u32 %v3457, %v3460
        %v3462 = vrot.slane %v3461, 4
        %v3464 = vshll.u32 %v3218, 16
        %v3466 = vrot.slane %v3464, 5
        %v3467 = vsel %vm1569, %v3462, %v3466
        %v3468 = vshrl.u32 %v3218, 16
        %v3470 = vrot.slane %v3468, 4
        %v3471 = vor.u32 %v3470, %v3466
        %v3472 = vrot.slane %v3471, 4
        %v3474 = vshll.u32 %v3219, 16
        %v3476 = vrot.slane %v3474, 5
        %v3477 = vsel %vm1569, %v3472, %v3476
        %v3479 = vshrl.u32 %v3220, 16
        %v3481 = vrot.slane %v3479, 4
        %v3482 = vshll.u32 %v3220, 16
        %v3484 = vrot.slane %v3482, 5
        %v3485 = vor.u32 %v3481, %v3484
        %v3486 = vrot.slane %v3485, 4
        %v3488 = vshll.u32 %v3221, 16
        %v3490 = vrot.slane %v3488, 5
        %v3491 = vsel %vm1569, %v3486, %v3490
        %v3492 = vshrl.u32 %v3221, 16
        %v3494 = vrot.slane %v3492, 4
        %v3495 = vor.u32 %v3494, %v3490
        %v3496 = vrot.slane %v3495, 4
        %v3498 = vshll.u32 %v3222, 16
        %v3500 = vrot.slane %v3498, 5
        %v3501 = vsel %vm1569, %v3496, %v3500
        %v3503 = vshrl.u32 %v3223, 16
        %v3505 = vrot.slane %v3503, 4
        %v3506 = vshll.u32 %v3223, 16
        %v3508 = vrot.slane %v3506, 5
        %v3509 = vor.u32 %v3505, %v3508
        %v3510 = vrot.slane %v3509, 4
        %v3512 = vshll.u32 %v3224, 16
        %v3514 = vrot.slane %v3512, 5
        %v3515 = vsel %vm1569, %v3510, %v3514
        %v3516 = vshrl.u32 %v3224, 16
        %v3518 = vrot.slane %v3516, 4
        %v3519 = vor.u32 %v3518, %v3514
        %v3520 = vrot.slane %v3519, 4
        %v3522 = vshll.u32 %v3225, 16
        %v3524 = vrot.slane %v3522, 5
        %v3525 = vsel %vm1569, %v3520, %v3524
        %v3527 = vshrl.u32 %v3226, 16
        %v3529 = vrot.slane %v3527, 4
        %v3530 = vshll.u32 %v3226, 16
        %v3532 = vrot.slane %v3530, 5
        %v3533 = vor.u32 %v3529, %v3532
        %v3534 = vrot.slane %v3533, 4
        %v3536 = vshll.u32 %v3227, 16
        %v3538 = vrot.slane %v3536, 5
        %v3539 = vsel %vm1569, %v3534, %v3538
        %v3540 = vshrl.u32 %v3227, 16
        %v3542 = vrot.slane %v3540, 4
        %v3543 = vor.u32 %v3542, %v3538
        %v3544 = vrot.slane %v3543, 4
        %v3546 = vshll.u32 %v3228, 16
        %v3548 = vrot.slane %v3546, 5
        %v3549 = vsel %vm1569, %v3544, %v3548
        %v3551 = vshrl.u32 %v3229, 16
        %v3553 = vrot.slane %v3551, 4
        %v3554 = vshll.u32 %v3229, 16
        %v3556 = vrot.slane %v3554, 5
        %v3557 = vor.u32 %v3553, %v3556
        %v3558 = vrot.slane %v3557, 4
        %v3560 = vshll.u32 %v3230, 16
        %v3562 = vrot.slane %v3560, 5
        %v3563 = vsel %vm1569, %v3558, %v3562
        %v3564 = vshrl.u32 %v3230, 16
        %v3566 = vrot.slane %v3564, 4
        %v3567 = vor.u32 %v3566, %v3562
        %v3568 = vrot.slane %v3567, 4
        %v3570 = vshll.u32 %v3231, 16
        %v3572 = vrot.slane %v3570, 5
        %v3573 = vsel %vm1569, %v3568, %v3572
        %v3575 = vshrl.u32 %v3232, 16
        %v3577 = vrot.slane %v3575, 4
        %v3578 = vshll.u32 %v3232, 16
        %v3580 = vrot.slane %v3578, 5
        %v3581 = vor.u32 %v3577, %v3580
        %v3582 = vrot.slane %v3581, 4
        %v3584 = vshll.u32 %v3233, 16
        %v3586 = vrot.slane %v3584, 5
        %v3587 = vsel %vm1569, %v3582, %v3586
        %v3588 = vshrl.u32 %v3233, 16
        %v3590 = vrot.slane %v3588, 4
        %v3591 = vor.u32 %v3590, %v3586
        %v3592 = vrot.slane %v3591, 4
        %v3594 = vshll.u32 %v3234, 16
        %v3596 = vrot.slane %v3594, 5
        %v3597 = vsel %vm1569, %v3592, %v3596
        %v3599 = vshrl.u32 %v3235, 16
        %v3601 = vrot.slane %v3599, 4
        %v3602 = vshll.u32 %v3235, 16
        %v3604 = vrot.slane %v3602, 5
        %v3605 = vor.u32 %v3601, %v3604
        %v3606 = vrot.slane %v3605, 4
        %v3608 = vshll.u32 %v3236, 16
        %v3610 = vrot.slane %v3608, 5
        %v3611 = vsel %vm1569, %v3606, %v3610
        %v3612 = vshrl.u32 %v3236, 16
        %v3614 = vrot.slane %v3612, 4
        %v3615 = vor.u32 %v3614, %v3610
        %v3616 = vrot.slane %v3615, 4
        %v3618 = vshll.u32 %v3237, 16
        %v3620 = vrot.slane %v3618, 5
        %v3621 = vsel %vm1569, %v3616, %v3620
        %3654 = vst [vmem:[#allocation3 + $0x1c] sm:$0xf] %v3251
        %3655 = vst [vmem:[#allocation3 + $0x40] sm:$0xf] %v3261
        %3656 = vst [vmem:[#allocation3 + $0x64] sm:$0xf] %v3275
        %3657 = vst [vmem:[#allocation3 + $0x88] sm:$0xf] %v3285
        %3658 = vst [vmem:[#allocation3 + $0xac] sm:$0xf] %v3299
        %3659 = vst [vmem:[#allocation3 + $0xd0] sm:$0xf] %v3309
        %3660 = vst [vmem:[#allocation3 + $0xf4] sm:$0xf] %v3323
        %3661 = vst [vmem:[#allocation3 + $0x118] sm:$0xf] %v3333
        %3662 = vst [vmem:[#allocation3 + $0x13c] sm:$0xf] %v3347
        %3663 = vst [vmem:[#allocation3 + $0x160] sm:$0xf] %v3357
        %3664 = vst [vmem:[#allocation3 + $0x184] sm:$0xf] %v3371
        %3665 = vst [vmem:[#allocation3 + $0x1a8] sm:$0xf] %v3381
        %3666 = vst [vmem:[#allocation3 + $0x1cc] sm:$0xf] %v3395
        %3667 = vst [vmem:[#allocation3 + $0x1f0] sm:$0xf] %v3405
        %3668 = vst [vmem:[#allocation3 + $0x214] sm:$0xf] %v3419
        %3669 = vst [vmem:[#allocation3 + $0x238] sm:$0xf] %v3429
        %3670 = vst [vmem:[#allocation3 + $0x25c] sm:$0xf] %v3443
        %3671 = vst [vmem:[#allocation3 + $0x280] sm:$0xf] %v3453
        %3672 = vst [vmem:[#allocation3 + $0x2a4] sm:$0xf] %v3467
        %3673 = vst [vmem:[#allocation3 + $0x2c8] sm:$0xf] %v3477
        %3674 = vst [vmem:[#allocation3 + $0x2ec] sm:$0xf] %v3491
        %3675 = vst [vmem:[#allocation3 + $0x310] sm:$0xf] %v3501
        %3676 = vst [vmem:[#allocation3 + $0x334] sm:$0xf] %v3515
        %3677 = vst [vmem:[#allocation3 + $0x358] sm:$0xf] %v3525
        %3678 = vst [vmem:[#allocation3 + $0x37c] sm:$0xf] %v3539
        %3679 = vst [vmem:[#allocation3 + $0x3a0] sm:$0xf] %v3549
        %3680 = vst [vmem:[#allocation3 + $0x3c4] sm:$0xf] %v3563
        %3681 = vst [vmem:[#allocation3 + $0x3e8] sm:$0xf] %v3573
        %3682 = vst [vmem:[#allocation3 + $0x40c] sm:$0xf] %v3587
        %3683 = vst [vmem:[#allocation3 + $0x430] sm:$0xf] %v3597
        %3684 = vst [vmem:[#allocation3 + $0x454] sm:$0xf] %v3611
        %3685 = vst [vmem:[#allocation3 + $0x478] sm:$0xf] %v3621
        %v3686 = vld [vmem:[%s3125] sm:$0xe]
        %v3687 = vld [vmem:[%s3125 + $0x4] sm:$0xf]
        %v3688 = vld [vmem:[%s3125 + $0x8] sm:$0x1]
        %v3689 = vld [vmem:[%s3125 + $0xc] sm:$0xe]
        %v3690 = vld [vmem:[%s3125 + $0x10] sm:$0xf]
        %v3691 = vld [vmem:[%s3125 + $0x14] sm:$0x1]
        %v3692 = vld [vmem:[%s3125 + $0x18] sm:$0xe]
        %v3693 = vld [vmem:[%s3125 + $0x1c] sm:$0xf]
        %v3694 = vld [vmem:[%s3125 + $0x20] sm:$0x1]
        %v3695 = vld [vmem:[%s3125 + $0x24] sm:$0xe]
        %v3696 = vld [vmem:[%s3125 + $0x28] sm:$0xf]
        %v3697 = vld [vmem:[%s3125 + $0x2c] sm:$0x1]
        %v3698 = vld [vmem:[%s3125 + $0x30] sm:$0xe]
        %v3699 = vld [vmem:[%s3125 + $0x34] sm:$0xf]
        %v3700 = vld [vmem:[%s3125 + $0x38] sm:$0x1]
        %v3701 = vld [vmem:[%s3125 + $0x3c] sm:$0xe]
        %v3702 = vld [vmem:[%s3125 + $0x40] sm:$0xf]
        %v3703 = vld [vmem:[%s3125 + $0x44] sm:$0x1]
        %v3704 = vld [vmem:[%s3125 + $0x48] sm:$0xe]
        %v3705 = vld [vmem:[%s3125 + $0x4c] sm:$0xf]
        %v3706 = vld [vmem:[%s3125 + $0x50] sm:$0x1]
        %v3707 = vld [vmem:[%s3125 + $0x54] sm:$0xe]
        %v3708 = vld [vmem:[%s3125 + $0x58] sm:$0xf]
        %v3709 = vld [vmem:[%s3125 + $0x5c] sm:$0x1]
        %v3710 = vld [vmem:[%s3125 + $0x60] sm:$0xe]
        %v3711 = vld [vmem:[%s3125 + $0x64] sm:$0xf]
        %v3712 = vld [vmem:[%s3125 + $0x68] sm:$0x1]
        %v3713 = vld [vmem:[%s3125 + $0x6c] sm:$0xe]
        %v3714 = vld [vmem:[%s3125 + $0x70] sm:$0xf]
        %v3715 = vld [vmem:[%s3125 + $0x74] sm:$0x1]
        %v3716 = vld [vmem:[%s3125 + $0x78] sm:$0xe]
        %v3717 = vld [vmem:[%s3125 + $0x7c] sm:$0xf]
        %v3718 = vld [vmem:[%s3125 + $0x80] sm:$0x1]
        %v3719 = vld [vmem:[%s3125 + $0x84] sm:$0xe]
        %v3720 = vld [vmem:[%s3125 + $0x88] sm:$0xf]
        %v3721 = vld [vmem:[%s3125 + $0x8c] sm:$0x1]
        %v3722 = vld [vmem:[%s3125 + $0x90] sm:$0xe]
        %v3723 = vld [vmem:[%s3125 + $0x94] sm:$0xf]
        %v3724 = vld [vmem:[%s3125 + $0x98] sm:$0x1]
        %v3725 = vld [vmem:[%s3125 + $0x9c] sm:$0xe]
        %v3726 = vld [vmem:[%s3125 + $0xa0] sm:$0xf]
        %v3727 = vld [vmem:[%s3125 + $0xa4] sm:$0x1]
        %v3728 = vld [vmem:[%s3125 + $0xa8] sm:$0xe]
        %v3729 = vld [vmem:[%s3125 + $0xac] sm:$0xf]
        %v3730 = vld [vmem:[%s3125 + $0xb0] sm:$0x1]
        %v3731 = vld [vmem:[%s3125 + $0xb4] sm:$0xe]
        %v3732 = vld [vmem:[%s3125 + $0xb8] sm:$0xf]
        %v3733 = vld [vmem:[%s3125 + $0xbc] sm:$0x1]
        %v3782 = vrot.slane %v3686, 5
        %v3783 = vrot.slane %v3782, 4
        %v3784 = vrot.slane %v3687, 5
        %v3785 = vsel %vm2116, %v3783, %v3784
        %v3786 = vrot.slane %v3784, 4
        %v3787 = vrot.slane %v3688, 5
        %v3788 = vsel %vm2116, %v3786, %v3787
        %v3789 = vrot.slane %v3689, 5
        %v3790 = vrot.slane %v3789, 4
        %v3791 = vrot.slane %v3690, 5
        %v3792 = vsel %vm2116, %v3790, %v3791
        %v3793 = vrot.slane %v3791, 4
        %v3794 = vrot.slane %v3691, 5
        %v3795 = vsel %vm2116, %v3793, %v3794
        %v3796 = vrot.slane %v3692, 5
        %v3797 = vrot.slane %v3796, 4
        %v3798 = vrot.slane %v3693, 5
        %v3799 = vsel %vm2116, %v3797, %v3798
        %v3800 = vrot.slane %v3798, 4
        %v3801 = vrot.slane %v3694, 5
        %v3802 = vsel %vm2116, %v3800, %v3801
        %v3803 = vrot.slane %v3695, 5
        %v3804 = vrot.slane %v3803, 4
        %v3805 = vrot.slane %v3696, 5
        %v3806 = vsel %vm2116, %v3804, %v3805
        %v3807 = vrot.slane %v3805, 4
        %v3808 = vrot.slane %v3697, 5
        %v3809 = vsel %vm2116, %v3807, %v3808
        %v3810 = vrot.slane %v3698, 5
        %v3811 = vrot.slane %v3810, 4
        %v3812 = vrot.slane %v3699, 5
        %v3813 = vsel %vm2116, %v3811, %v3812
        %v3814 = vrot.slane %v3812, 4
        %v3815 = vrot.slane %v3700, 5
        %v3816 = vsel %vm2116, %v3814, %v3815
        %v3817 = vrot.slane %v3701, 5
        %v3818 = vrot.slane %v3817, 4
        %v3819 = vrot.slane %v3702, 5
        %v3820 = vsel %vm2116, %v3818, %v3819
        %v3821 = vrot.slane %v3819, 4
        %v3822 = vrot.slane %v3703, 5
        %v3823 = vsel %vm2116, %v3821, %v3822
        %v3824 = vrot.slane %v3704, 5
        %v3825 = vrot.slane %v3824, 4
        %v3826 = vrot.slane %v3705, 5
        %v3827 = vsel %vm2116, %v3825, %v3826
        %v3828 = vrot.slane %v3826, 4
        %v3829 = vrot.slane %v3706, 5
        %v3830 = vsel %vm2116, %v3828, %v3829
        %v3831 = vrot.slane %v3707, 5
        %v3832 = vrot.slane %v3831, 4
        %v3833 = vrot.slane %v3708, 5
        %v3834 = vsel %vm2116, %v3832, %v3833
        %v3835 = vrot.slane %v3833, 4
        %v3836 = vrot.slane %v3709, 5
        %v3837 = vsel %vm2116, %v3835, %v3836
        %v3838 = vrot.slane %v3710, 5
        %v3839 = vrot.slane %v3838, 4
        %v3840 = vrot.slane %v3711, 5
        %v3841 = vsel %vm2116, %v3839, %v3840
        %v3842 = vrot.slane %v3840, 4
        %v3843 = vrot.slane %v3712, 5
        %v3844 = vsel %vm2116, %v3842, %v3843
        %v3845 = vrot.slane %v3713, 5
        %v3846 = vrot.slane %v3845, 4
        %v3847 = vrot.slane %v3714, 5
        %v3848 = vsel %vm2116, %v3846, %v3847
        %v3849 = vrot.slane %v3847, 4
        %v3850 = vrot.slane %v3715, 5
        %v3851 = vsel %vm2116, %v3849, %v3850
        %v3852 = vrot.slane %v3716, 5
        %v3853 = vrot.slane %v3852, 4
        %v3854 = vrot.slane %v3717, 5
        %v3855 = vsel %vm2116, %v3853, %v3854
        %v3856 = vrot.slane %v3854, 4
        %v3857 = vrot.slane %v3718, 5
        %v3858 = vsel %vm2116, %v3856, %v3857
        %v3859 = vrot.slane %v3719, 5
        %v3860 = vrot.slane %v3859, 4
        %v3861 = vrot.slane %v3720, 5
        %v3862 = vsel %vm2116, %v3860, %v3861
        %v3863 = vrot.slane %v3861, 4
        %v3864 = vrot.slane %v3721, 5
        %v3865 = vsel %vm2116, %v3863, %v3864
        %v3866 = vrot.slane %v3722, 5
        %v3867 = vrot.slane %v3866, 4
        %v3868 = vrot.slane %v3723, 5
        %v3869 = vsel %vm2116, %v3867, %v3868
        %v3870 = vrot.slane %v3868, 4
        %v3871 = vrot.slane %v3724, 5
        %v3872 = vsel %vm2116, %v3870, %v3871
        %v3873 = vrot.slane %v3725, 5
        %v3874 = vrot.slane %v3873, 4
        %v3875 = vrot.slane %v3726, 5
        %v3876 = vsel %vm2116, %v3874, %v3875
        %v3877 = vrot.slane %v3875, 4
        %v3878 = vrot.slane %v3727, 5
        %v3879 = vsel %vm2116, %v3877, %v3878
        %v3880 = vrot.slane %v3728, 5
        %v3881 = vrot.slane %v3880, 4
        %v3882 = vrot.slane %v3729, 5
        %v3883 = vsel %vm2116, %v3881, %v3882
        %v3884 = vrot.slane %v3882, 4
        %v3885 = vrot.slane %v3730, 5
        %v3886 = vsel %vm2116, %v3884, %v3885
        %v3887 = vrot.slane %v3731, 5
        %v3888 = vrot.slane %v3887, 4
        %v3889 = vrot.slane %v3732, 5
        %v3890 = vsel %vm2116, %v3888, %v3889
        %v3891 = vrot.slane %v3889, 4
        %v3892 = vrot.slane %v3733, 5
        %v3893 = vsel %vm2116, %v3891, %v3892
        %3926 = vst [vmem:[#allocation3 + $0x20] sm:$0xf] %v3785
        %3927 = vst [vmem:[#allocation3 + $0x44] sm:$0xf] %v3788
        %3928 = vst [vmem:[#allocation3 + $0x68] sm:$0xf] %v3792
        %3929 = vst [vmem:[#allocation3 + $0x8c] sm:$0xf] %v3795
        %3930 = vst [vmem:[#allocation3 + $0xb0] sm:$0xf] %v3799
        %3931 = vst [vmem:[#allocation3 + $0xd4] sm:$0xf] %v3802
        %3932 = vst [vmem:[#allocation3 + $0xf8] sm:$0xf] %v3806
        %3933 = vst [vmem:[#allocation3 + $0x11c] sm:$0xf] %v3809
        %3934 = vst [vmem:[#allocation3 + $0x140] sm:$0xf] %v3813
        %3935 = vst [vmem:[#allocation3 + $0x164] sm:$0xf] %v3816
        %3936 = vst [vmem:[#allocation3 + $0x188] sm:$0xf] %v3820
        %3937 = vst [vmem:[#allocation3 + $0x1ac] sm:$0xf] %v3823
        %3938 = vst [vmem:[#allocation3 + $0x1d0] sm:$0xf] %v3827
        %3939 = vst [vmem:[#allocation3 + $0x1f4] sm:$0xf] %v3830
        %3940 = vst [vmem:[#allocation3 + $0x218] sm:$0xf] %v3834
        %3941 = vst [vmem:[#allocation3 + $0x23c] sm:$0xf] %v3837
        %3942 = vst [vmem:[#allocation3 + $0x260] sm:$0xf] %v3841
        %3943 = vst [vmem:[#allocation3 + $0x284] sm:$0xf] %v3844
        %3944 = vst [vmem:[#allocation3 + $0x2a8] sm:$0xf] %v3848
        %3945 = vst [vmem:[#allocation3 + $0x2cc] sm:$0xf] %v3851
        %3946 = vst [vmem:[#allocation3 + $0x2f0] sm:$0xf] %v3855
        %3947 = vst [vmem:[#allocation3 + $0x314] sm:$0xf] %v3858
        %3948 = vst [vmem:[#allocation3 + $0x338] sm:$0xf] %v3862
        %3949 = vst [vmem:[#allocation3 + $0x35c] sm:$0xf] %v3865
        %3950 = vst [vmem:[#allocation3 + $0x380] sm:$0xf] %v3869
        %3951 = vst [vmem:[#allocation3 + $0x3a4] sm:$0xf] %v3872
        %3952 = vst [vmem:[#allocation3 + $0x3c8] sm:$0xf] %v3876
        %3953 = vst [vmem:[#allocation3 + $0x3ec] sm:$0xf] %v3879
        %3954 = vst [vmem:[#allocation3 + $0x410] sm:$0xf] %v3883
        %3955 = vst [vmem:[#allocation3 + $0x434] sm:$0xf] %v3886
        %3956 = vst [vmem:[#allocation3 + $0x458] sm:$0xf] %v3890
        %3957 = vst [vmem:[#allocation3 + $0x47c] sm:$0xf] %v3893
        %v3958 = vld [vmem:[#allocation3] sm:$0xff]
        %v3959 = vld [vmem:[#allocation3 + $0x8] sm:$0xff]
        %v3960 = vld [vmem:[#allocation3 + $0x10] sm:$0xff]
        %v3961 = vld [vmem:[#allocation3 + $0x18] sm:$0xff]
        %v3962 = vld [vmem:[#allocation3 + $0x20] sm:$0xf]
        %v3963 = vld [vmem:[#allocation3 + $0x24] sm:$0xff]
        %v3964 = vld [vmem:[#allocation3 + $0x2c] sm:$0xff]
        %v3965 = vld [vmem:[#allocation3 + $0x34] sm:$0xff]
        %v3966 = vld [vmem:[#allocation3 + $0x3c] sm:$0xff]
        %v3967 = vld [vmem:[#allocation3 + $0x44] sm:$0xf]
        %v3968 = vld [vmem:[#allocation3 + $0x48] sm:$0xff]
        %v3969 = vld [vmem:[#allocation3 + $0x50] sm:$0xff]
        %v3970 = vld [vmem:[#allocation3 + $0x58] sm:$0xff]
        %v3971 = vld [vmem:[#allocation3 + $0x60] sm:$0xff]
        %v3972 = vld [vmem:[#allocation3 + $0x68] sm:$0xf]
        %v3973 = vld [vmem:[#allocation3 + $0x6c] sm:$0xff]
        %v3974 = vld [vmem:[#allocation3 + $0x74] sm:$0xff]
        %v3975 = vld [vmem:[#allocation3 + $0x7c] sm:$0xff]
        %v3976 = vld [vmem:[#allocation3 + $0x84] sm:$0xff]
        %v3977 = vld [vmem:[#allocation3 + $0x8c] sm:$0xf]
        %v3978 = vld [vmem:[#allocation3 + $0x90] sm:$0xff]
        %v3979 = vld [vmem:[#allocation3 + $0x98] sm:$0xff]
        %v3980 = vld [vmem:[#allocation3 + $0xa0] sm:$0xff]
        %v3981 = vld [vmem:[#allocation3 + $0xa8] sm:$0xff]
        %v3982 = vld [vmem:[#allocation3 + $0xb0] sm:$0xf]
        %v3983 = vld [vmem:[#allocation3 + $0xb4] sm:$0xff]
        %v3984 = vld [vmem:[#allocation3 + $0xbc] sm:$0xff]
        %v3985 = vld [vmem:[#allocation3 + $0xc4] sm:$0xff]
        %v3986 = vld [vmem:[#allocation3 + $0xcc] sm:$0xff]
        %v3987 = vld [vmem:[#allocation3 + $0xd4] sm:$0xf]
        %v3988 = vld [vmem:[#allocation3 + $0xd8] sm:$0xff]
        %v3989 = vld [vmem:[#allocation3 + $0xe0] sm:$0xff]
        %v3990 = vld [vmem:[#allocation3 + $0xe8] sm:$0xff]
        %v3991 = vld [vmem:[#allocation3 + $0xf0] sm:$0xff]
        %v3992 = vld [vmem:[#allocation3 + $0xf8] sm:$0xf]
        %v3993 = vld [vmem:[#allocation3 + $0xfc] sm:$0xff]
        %v3994 = vld [vmem:[#allocation3 + $0x104] sm:$0xff]
        %v3995 = vld [vmem:[#allocation3 + $0x10c] sm:$0xff]
        %v3996 = vld [vmem:[#allocation3 + $0x114] sm:$0xff]
        %v3997 = vld [vmem:[#allocation3 + $0x11c] sm:$0xf]
        %v3998 = vld [vmem:[#allocation3 + $0x120] sm:$0xff]
        %v3999 = vld [vmem:[#allocation3 + $0x128] sm:$0xff]
        %v4000 = vld [vmem:[#allocation3 + $0x130] sm:$0xff]
        %v4001 = vld [vmem:[#allocation3 + $0x138] sm:$0xff]
        %v4002 = vld [vmem:[#allocation3 + $0x140] sm:$0xf]
        %v4003 = vld [vmem:[#allocation3 + $0x144] sm:$0xff]
        %v4004 = vld [vmem:[#allocation3 + $0x14c] sm:$0xff]
        %v4005 = vld [vmem:[#allocation3 + $0x154] sm:$0xff]
        %v4006 = vld [vmem:[#allocation3 + $0x15c] sm:$0xff]
        %v4007 = vld [vmem:[#allocation3 + $0x164] sm:$0xf]
        %v4008 = vld [vmem:[#allocation3 + $0x168] sm:$0xff]
        %v4009 = vld [vmem:[#allocation3 + $0x170] sm:$0xff]
        %v4010 = vld [vmem:[#allocation3 + $0x178] sm:$0xff]
        %v4011 = vld [vmem:[#allocation3 + $0x180] sm:$0xff]
        %v4012 = vld [vmem:[#allocation3 + $0x188] sm:$0xf]
        %v4013 = vld [vmem:[#allocation3 + $0x18c] sm:$0xff]
        %v4014 = vld [vmem:[#allocation3 + $0x194] sm:$0xff]
        %v4015 = vld [vmem:[#allocation3 + $0x19c] sm:$0xff]
        %v4016 = vld [vmem:[#allocation3 + $0x1a4] sm:$0xff]
        %v4017 = vld [vmem:[#allocation3 + $0x1ac] sm:$0xf]
        %v4018 = vld [vmem:[#allocation3 + $0x1b0] sm:$0xff]
        %v4019 = vld [vmem:[#allocation3 + $0x1b8] sm:$0xff]
        %v4020 = vld [vmem:[#allocation3 + $0x1c0] sm:$0xff]
        %v4021 = vld [vmem:[#allocation3 + $0x1c8] sm:$0xff]
        %v4022 = vld [vmem:[#allocation3 + $0x1d0] sm:$0xf]
        %v4023 = vld [vmem:[#allocation3 + $0x1d4] sm:$0xff]
        %v4024 = vld [vmem:[#allocation3 + $0x1dc] sm:$0xff]
        %v4025 = vld [vmem:[#allocation3 + $0x1e4] sm:$0xff]
        %v4026 = vld [vmem:[#allocation3 + $0x1ec] sm:$0xff]
        %v4027 = vld [vmem:[#allocation3 + $0x1f4] sm:$0xf]
        %v4028 = vld [vmem:[#allocation3 + $0x1f8] sm:$0xff]
        %v4029 = vld [vmem:[#allocation3 + $0x200] sm:$0xff]
        %v4030 = vld [vmem:[#allocation3 + $0x208] sm:$0xff]
        %v4031 = vld [vmem:[#allocation3 + $0x210] sm:$0xff]
        %v4032 = vld [vmem:[#allocation3 + $0x218] sm:$0xf]
        %v4033 = vld [vmem:[#allocation3 + $0x21c] sm:$0xff]
        %v4034 = vld [vmem:[#allocation3 + $0x224] sm:$0xff]
        %v4035 = vld [vmem:[#allocation3 + $0x22c] sm:$0xff]
        %v4036 = vld [vmem:[#allocation3 + $0x234] sm:$0xff]
        %v4037 = vld [vmem:[#allocation3 + $0x23c] sm:$0xf]
        %v4038 = vld [vmem:[#allocation3 + $0x240] sm:$0xff]
        %v4039 = vld [vmem:[#allocation3 + $0x248] sm:$0xff]
        %v4040 = vld [vmem:[#allocation3 + $0x250] sm:$0xff]
        %v4041 = vld [vmem:[#allocation3 + $0x258] sm:$0xff]
        %v4042 = vld [vmem:[#allocation3 + $0x260] sm:$0xf]
        %v4043 = vld [vmem:[#allocation3 + $0x264] sm:$0xff]
        %v4044 = vld [vmem:[#allocation3 + $0x26c] sm:$0xff]
        %v4045 = vld [vmem:[#allocation3 + $0x274] sm:$0xff]
        %v4046 = vld [vmem:[#allocation3 + $0x27c] sm:$0xff]
        %v4047 = vld [vmem:[#allocation3 + $0x284] sm:$0xf]
        %v4048 = vld [vmem:[#allocation3 + $0x288] sm:$0xff]
        %v4049 = vld [vmem:[#allocation3 + $0x290] sm:$0xff]
        %v4050 = vld [vmem:[#allocation3 + $0x298] sm:$0xff]
        %v4051 = vld [vmem:[#allocation3 + $0x2a0] sm:$0xff]
        %v4052 = vld [vmem:[#allocation3 + $0x2a8] sm:$0xf]
        %v4053 = vld [vmem:[#allocation3 + $0x2ac] sm:$0xff]
        %v4054 = vld [vmem:[#allocation3 + $0x2b4] sm:$0xff]
        %v4055 = vld [vmem:[#allocation3 + $0x2bc] sm:$0xff]
        %v4056 = vld [vmem:[#allocation3 + $0x2c4] sm:$0xff]
        %v4057 = vld [vmem:[#allocation3 + $0x2cc] sm:$0xf]
        %v4058 = vld [vmem:[#allocation3 + $0x2d0] sm:$0xff]
        %v4059 = vld [vmem:[#allocation3 + $0x2d8] sm:$0xff]
        %v4060 = vld [vmem:[#allocation3 + $0x2e0] sm:$0xff]
        %v4061 = vld [vmem:[#allocation3 + $0x2e8] sm:$0xff]
        %v4062 = vld [vmem:[#allocation3 + $0x2f0] sm:$0xf]
        %v4063 = vld [vmem:[#allocation3 + $0x2f4] sm:$0xff]
        %v4064 = vld [vmem:[#allocation3 + $0x2fc] sm:$0xff]
        %v4065 = vld [vmem:[#allocation3 + $0x304] sm:$0xff]
        %v4066 = vld [vmem:[#allocation3 + $0x30c] sm:$0xff]
        %v4067 = vld [vmem:[#allocation3 + $0x314] sm:$0xf]
        %v4068 = vld [vmem:[#allocation3 + $0x318] sm:$0xff]
        %v4069 = vld [vmem:[#allocation3 + $0x320] sm:$0xff]
        %v4070 = vld [vmem:[#allocation3 + $0x328] sm:$0xff]
        %v4071 = vld [vmem:[#allocation3 + $0x330] sm:$0xff]
        %v4072 = vld [vmem:[#allocation3 + $0x338] sm:$0xf]
        %v4073 = vld [vmem:[#allocation3 + $0x33c] sm:$0xff]
        %v4074 = vld [vmem:[#allocation3 + $0x344] sm:$0xff]
        %v4075 = vld [vmem:[#allocation3 + $0x34c] sm:$0xff]
        %v4076 = vld [vmem:[#allocation3 + $0x354] sm:$0xff]
        %v4077 = vld [vmem:[#allocation3 + $0x35c] sm:$0xf]
        %v4078 = vld [vmem:[#allocation3 + $0x360] sm:$0xff]
        %v4079 = vld [vmem:[#allocation3 + $0x368] sm:$0xff]
        %v4080 = vld [vmem:[#allocation3 + $0x370] sm:$0xff]
        %v4081 = vld [vmem:[#allocation3 + $0x378] sm:$0xff]
        %v4082 = vld [vmem:[#allocation3 + $0x380] sm:$0xf]
        %v4083 = vld [vmem:[#allocation3 + $0x384] sm:$0xff]
        %v4084 = vld [vmem:[#allocation3 + $0x38c] sm:$0xff]
        %v4085 = vld [vmem:[#allocation3 + $0x394] sm:$0xff]
        %v4086 = vld [vmem:[#allocation3 + $0x39c] sm:$0xff]
        %v4087 = vld [vmem:[#allocation3 + $0x3a4] sm:$0xf]
        %v4088 = vld [vmem:[#allocation3 + $0x3a8] sm:$0xff]
        %v4089 = vld [vmem:[#allocation3 + $0x3b0] sm:$0xff]
        %v4090 = vld [vmem:[#allocation3 + $0x3b8] sm:$0xff]
        %v4091 = vld [vmem:[#allocation3 + $0x3c0] sm:$0xff]
        %v4092 = vld [vmem:[#allocation3 + $0x3c8] sm:$0xf]
        %v4093 = vld [vmem:[#allocation3 + $0x3cc] sm:$0xff]
        %v4094 = vld [vmem:[#allocation3 + $0x3d4] sm:$0xff]
        %v4095 = vld [vmem:[#allocation3 + $0x3dc] sm:$0xff]
        %v4096 = vld [vmem:[#allocation3 + $0x3e4] sm:$0xff]
        %v4097 = vld [vmem:[#allocation3 + $0x3ec] sm:$0xf]
        %v4098 = vld [vmem:[#allocation3 + $0x3f0] sm:$0xff]
        %v4099 = vld [vmem:[#allocation3 + $0x3f8] sm:$0xff]
        %v4100 = vld [vmem:[#allocation3 + $0x400] sm:$0xff]
        %v4101 = vld [vmem:[#allocation3 + $0x408] sm:$0xff]
        %v4102 = vld [vmem:[#allocation3 + $0x410] sm:$0xf]
        %v4103 = vld [vmem:[#allocation3 + $0x414] sm:$0xff]
        %v4104 = vld [vmem:[#allocation3 + $0x41c] sm:$0xff]
        %v4105 = vld [vmem:[#allocation3 + $0x424] sm:$0xff]
        %v4106 = vld [vmem:[#allocation3 + $0x42c] sm:$0xff]
        %v4107 = vld [vmem:[#allocation3 + $0x434] sm:$0xf]
        %v4108 = vld [vmem:[#allocation3 + $0x438] sm:$0xff]
        %v4109 = vld [vmem:[#allocation3 + $0x440] sm:$0xff]
        %v4110 = vld [vmem:[#allocation3 + $0x448] sm:$0xff]
        %v4111 = vld [vmem:[#allocation3 + $0x450] sm:$0xff]
        %v4112 = vld [vmem:[#allocation3 + $0x458] sm:$0xf]
        %v4113 = vld [vmem:[#allocation3 + $0x45c] sm:$0xff]
        %v4114 = vld [vmem:[#allocation3 + $0x464] sm:$0xff]
        %v4115 = vld [vmem:[#allocation3 + $0x46c] sm:$0xff]
        %v4116 = vld [vmem:[#allocation3 + $0x474] sm:$0xff]
        %v4117 = vld [vmem:[#allocation3 + $0x47c] sm:$0xf]
        %v4118 = vld [vmem:[%s1] sm:$0xf]
        %v4119 = vld [vmem:[%s1 + $0x4] sm:$0xf]
        %v4120 = vld [vmem:[%s1 + $0x8] sm:$0xf]
        %v4121 = vld [vmem:[%s1 + $0xc] sm:$0xf]
        %v4122 = vld [vmem:[%s1 + $0x10] sm:$0xf]
        %v4123 = vld [vmem:[%s1 + $0x14] sm:$0xf]
        %v4124 = vld [vmem:[%s1 + $0x18] sm:$0xf]
        %v4125 = vld [vmem:[%s1 + $0x1c] sm:$0xf]
        %v4126 = vld [vmem:[%s1 + $0x20] sm:$0xf]
        %v4127 = vld [vmem:[%s1 + $0x24] sm:$0xf]
        %v4128 = vld [vmem:[%s1 + $0x28] sm:$0xf]
        %v4129 = vld [vmem:[%s1 + $0x2c] sm:$0xf]
        %v4130 = vld [vmem:[%s1 + $0x30] sm:$0xf]
        %v4131 = vld [vmem:[%s1 + $0x34] sm:$0xf]
        %v4132 = vld [vmem:[%s1 + $0x38] sm:$0xf]
        %v4133 = vld [vmem:[%s1 + $0x3c] sm:$0xf]
        %v4134 = vld [vmem:[%s1 + $0x40] sm:$0xf]
        %v4135 = vld [vmem:[%s1 + $0x44] sm:$0xf]
        %v4136 = vld [vmem:[%s1 + $0x48] sm:$0xf]
        %v4137 = vld [vmem:[%s1 + $0x4c] sm:$0xf]
        %v4138 = vld [vmem:[%s1 + $0x50] sm:$0xf]
        %v4139 = vld [vmem:[%s1 + $0x54] sm:$0xf]
        %v4140 = vld [vmem:[%s1 + $0x58] sm:$0xf]
        %v4141 = vld [vmem:[%s1 + $0x5c] sm:$0xf]
        %v4142 = vld [vmem:[%s1 + $0x60] sm:$0xf]
        %v4143 = vld [vmem:[%s1 + $0x64] sm:$0xf]
        %v4144 = vld [vmem:[%s1 + $0x68] sm:$0xf]
        %v4145 = vld [vmem:[%s1 + $0x6c] sm:$0xf]
        %v4146 = vld [vmem:[%s1 + $0x70] sm:$0xf]
        %v4147 = vld [vmem:[%s1 + $0x74] sm:$0xf]
        %v4148 = vld [vmem:[%s1 + $0x78] sm:$0xf]
        %v4149 = vld [vmem:[%s1 + $0x7c] sm:$0xf]
        %v4150 = vld [vmem:[%s1 + $0x80] sm:$0xf]
        %v4151 = vld [vmem:[%s1 + $0x84] sm:$0xf]
        %v4152 = vld [vmem:[%s1 + $0x88] sm:$0xf]
        %v4153 = vld [vmem:[%s1 + $0x8c] sm:$0xf]
        %v4154 = vld [vmem:[%s1 + $0x90] sm:$0xf]
        %v4155 = vld [vmem:[%s1 + $0x94] sm:$0xf]
        %v4156 = vld [vmem:[%s1 + $0x98] sm:$0xf]
        %v4157 = vld [vmem:[%s1 + $0x9c] sm:$0xf]
        %v4158 = vld [vmem:[%s1 + $0xa0] sm:$0xf]
        %v4159 = vld [vmem:[%s1 + $0xa4] sm:$0xf]
        %v4160 = vld [vmem:[%s1 + $0xa8] sm:$0xf]
        %v4161 = vld [vmem:[%s1 + $0xac] sm:$0xf]
        %v4162 = vld [vmem:[%s1 + $0xb0] sm:$0xf]
        %v4163 = vld [vmem:[%s1 + $0xb4] sm:$0xf]
        %v4164 = vld [vmem:[%s1 + $0xb8] sm:$0xf]
        %v4165 = vld [vmem:[%s1 + $0xbc] sm:$0xf]
        %v4166 = vld [vmem:[%s1 + $0xc0] sm:$0xf]
        %v4167 = vld [vmem:[%s1 + $0xc4] sm:$0xf]
        %v4168 = vld [vmem:[%s1 + $0xc8] sm:$0xf]
        %v4169 = vld [vmem:[%s1 + $0xcc] sm:$0xf]
        %v4170 = vld [vmem:[%s1 + $0xd0] sm:$0xf]
        %v4171 = vld [vmem:[%s1 + $0xd4] sm:$0xf]
        %v4172 = vld [vmem:[%s1 + $0xd8] sm:$0xf]
        %v4173 = vld [vmem:[%s1 + $0xdc] sm:$0xf]
        %v4174 = vld [vmem:[%s1 + $0xe0] sm:$0xf]
        %v4175 = vld [vmem:[%s1 + $0xe4] sm:$0xf]
        %v4176 = vld [vmem:[%s1 + $0xe8] sm:$0xf]
        %v4177 = vld [vmem:[%s1 + $0xec] sm:$0xf]
        %v4178 = vld [vmem:[%s1 + $0xf0] sm:$0xf]
        %v4179 = vld [vmem:[%s1 + $0xf4] sm:$0xf]
        %v4180 = vld [vmem:[%s1 + $0xf8] sm:$0xf]
        %v4181 = vld [vmem:[%s1 + $0xfc] sm:$0xf]
        %v4182 = vld [vmem:[%s1 + $0x100] sm:$0xf]
        %v4183 = vld [vmem:[%s1 + $0x104] sm:$0xf]
        %v4184 = vld [vmem:[%s1 + $0x108] sm:$0xf]
        %v4185 = vld [vmem:[%s1 + $0x10c] sm:$0xf]
        %v4186 = vld [vmem:[%s1 + $0x110] sm:$0xf]
        %v4187 = vld [vmem:[%s1 + $0x114] sm:$0xf]
        %v4188 = vld [vmem:[%s1 + $0x118] sm:$0xf]
        %v4189 = vld [vmem:[%s1 + $0x11c] sm:$0xf]
        %v4190 = vld [vmem:[%s1 + $0x120] sm:$0xf]
        %v4191 = vld [vmem:[%s1 + $0x124] sm:$0xf]
        %v4192 = vld [vmem:[%s1 + $0x128] sm:$0xf]
        %v4193 = vld [vmem:[%s1 + $0x12c] sm:$0xf]
        %v4194 = vld [vmem:[%s1 + $0x130] sm:$0xf]
        %v4195 = vld [vmem:[%s1 + $0x134] sm:$0xf]
        %v4196 = vld [vmem:[%s1 + $0x138] sm:$0xf]
        %v4197 = vld [vmem:[%s1 + $0x13c] sm:$0xf]
        %v4198 = vld [vmem:[%s1 + $0x140] sm:$0xf]
        %v4199 = vld [vmem:[%s1 + $0x144] sm:$0xf]
        %v4200 = vld [vmem:[%s1 + $0x148] sm:$0xf]
        %v4201 = vld [vmem:[%s1 + $0x14c] sm:$0xf]
        %v4202 = vld [vmem:[%s1 + $0x150] sm:$0xf]
        %v4203 = vld [vmem:[%s1 + $0x154] sm:$0xf]
        %v4204 = vld [vmem:[%s1 + $0x158] sm:$0xf]
        %v4205 = vld [vmem:[%s1 + $0x15c] sm:$0xf]
        %v4206 = vld [vmem:[%s1 + $0x160] sm:$0xf]
        %v4207 = vld [vmem:[%s1 + $0x164] sm:$0xf]
        %v4208 = vld [vmem:[%s1 + $0x168] sm:$0xf]
        %v4209 = vld [vmem:[%s1 + $0x16c] sm:$0xf]
        %v4210 = vld [vmem:[%s1 + $0x170] sm:$0xf]
        %v4211 = vld [vmem:[%s1 + $0x174] sm:$0xf]
        %v4212 = vld [vmem:[%s1 + $0x178] sm:$0xf]
        %v4213 = vld [vmem:[%s1 + $0x17c] sm:$0xf]
        %v4214 = vld [vmem:[%s1 + $0x180] sm:$0xf]
        %v4215 = vld [vmem:[%s1 + $0x184] sm:$0xf]
        %v4216 = vld [vmem:[%s1 + $0x188] sm:$0xf]
        %v4217 = vld [vmem:[%s1 + $0x18c] sm:$0xf]
        %v4218 = vld [vmem:[%s1 + $0x190] sm:$0xf]
        %v4219 = vld [vmem:[%s1 + $0x194] sm:$0xf]
        %v4220 = vld [vmem:[%s1 + $0x198] sm:$0xf]
        %v4221 = vld [vmem:[%s1 + $0x19c] sm:$0xf]
        %v4222 = vld [vmem:[%s1 + $0x1a0] sm:$0xf]
        %v4223 = vld [vmem:[%s1 + $0x1a4] sm:$0xf]
        %v4224 = vld [vmem:[%s1 + $0x1a8] sm:$0xf]
        %v4225 = vld [vmem:[%s1 + $0x1ac] sm:$0xf]
        %v4226 = vld [vmem:[%s1 + $0x1b0] sm:$0xf]
        %v4227 = vld [vmem:[%s1 + $0x1b4] sm:$0xf]
        %v4228 = vld [vmem:[%s1 + $0x1b8] sm:$0xf]
        %v4229 = vld [vmem:[%s1 + $0x1bc] sm:$0xf]
        %v4230 = vld [vmem:[%s1 + $0x1c0] sm:$0xf]
        %v4231 = vld [vmem:[%s1 + $0x1c4] sm:$0xf]
        %v4232 = vld [vmem:[%s1 + $0x1c8] sm:$0xf]
        %v4233 = vld [vmem:[%s1 + $0x1cc] sm:$0xf]
        %v4234 = vld [vmem:[%s1 + $0x1d0] sm:$0xf]
        %v4235 = vld [vmem:[%s1 + $0x1d4] sm:$0xf]
        %v4236 = vld [vmem:[%s1 + $0x1d8] sm:$0xf]
        %v4237 = vld [vmem:[%s1 + $0x1dc] sm:$0xf]
        %v4238 = vld [vmem:[%s1 + $0x1e0] sm:$0xf]
        %v4239 = vld [vmem:[%s1 + $0x1e4] sm:$0xf]
        %v4240 = vld [vmem:[%s1 + $0x1e8] sm:$0xf]
        %v4241 = vld [vmem:[%s1 + $0x1ec] sm:$0xf]
        %v4242 = vld [vmem:[%s1 + $0x1f0] sm:$0xf]
        %v4243 = vld [vmem:[%s1 + $0x1f4] sm:$0xf]
        %v4244 = vld [vmem:[%s1 + $0x1f8] sm:$0xf]
        %v4245 = vld [vmem:[%s1 + $0x1fc] sm:$0xf]
        %v4246 = vld [vmem:[%s1 + $0x200] sm:$0xf]
        %v4247 = vld [vmem:[%s1 + $0x204] sm:$0xf]
        %v4248 = vld [vmem:[%s1 + $0x208] sm:$0xf]
        %v4249 = vld [vmem:[%s1 + $0x20c] sm:$0xf]
        %v4250 = vld [vmem:[%s1 + $0x210] sm:$0xf]
        %v4251 = vld [vmem:[%s1 + $0x214] sm:$0xf]
        %v4252 = vld [vmem:[%s1 + $0x218] sm:$0xf]
        %v4253 = vld [vmem:[%s1 + $0x21c] sm:$0xf]
        %v4254 = vld [vmem:[%s1 + $0x220] sm:$0xf]
        %v4255 = vld [vmem:[%s1 + $0x224] sm:$0xf]
        %v4256 = vld [vmem:[%s1 + $0x228] sm:$0xf]
        %v4257 = vld [vmem:[%s1 + $0x22c] sm:$0xf]
        %v4258 = vld [vmem:[%s1 + $0x230] sm:$0xf]
        %v4259 = vld [vmem:[%s1 + $0x234] sm:$0xf]
        %v4260 = vld [vmem:[%s1 + $0x238] sm:$0xf]
        %v4261 = vld [vmem:[%s1 + $0x23c] sm:$0xf]
        %v4422 = vunpack.c.l.b16 %v3958
        %v4423 = vunpack.c.h.b16 %v3958
        %v4424 = vunpack.c.l.b16 %v3959
        %v4425 = vunpack.c.h.b16 %v3959
        %v4426 = vunpack.c.l.b16 %v3960
        %v4427 = vunpack.c.h.b16 %v3960
        %v4428 = vunpack.c.l.b16 %v3961
        %v4429 = vunpack.c.h.b16 %v3961
        %v4430 = vunpack.c.l.b16 %v3962
        %v4431 = vunpack.c.l.b16 %v3963
        %v4432 = vunpack.c.h.b16 %v3963
        %v4433 = vunpack.c.l.b16 %v3964
        %v4434 = vunpack.c.h.b16 %v3964
        %v4435 = vunpack.c.l.b16 %v3965
        %v4436 = vunpack.c.h.b16 %v3965
        %v4437 = vunpack.c.l.b16 %v3966
        %v4438 = vunpack.c.h.b16 %v3966
        %v4439 = vunpack.c.l.b16 %v3967
        %v4440 = vunpack.c.l.b16 %v3968
        %v4441 = vunpack.c.h.b16 %v3968
        %v4442 = vunpack.c.l.b16 %v3969
        %v4443 = vunpack.c.h.b16 %v3969
        %v4444 = vunpack.c.l.b16 %v3970
        %v4445 = vunpack.c.h.b16 %v3970
        %v4446 = vunpack.c.l.b16 %v3971
        %v4447 = vunpack.c.h.b16 %v3971
        %v4448 = vunpack.c.l.b16 %v3972
        %v4449 = vunpack.c.l.b16 %v3973
        %v4450 = vunpack.c.h.b16 %v3973
        %v4451 = vunpack.c.l.b16 %v3974
        %v4452 = vunpack.c.h.b16 %v3974
        %v4453 = vunpack.c.l.b16 %v3975
        %v4454 = vunpack.c.h.b16 %v3975
        %v4455 = vunpack.c.l.b16 %v3976
        %v4456 = vunpack.c.h.b16 %v3976
        %v4457 = vunpack.c.l.b16 %v3977
        %v4458 = vunpack.c.l.b16 %v3978
        %v4459 = vunpack.c.h.b16 %v3978
        %v4460 = vunpack.c.l.b16 %v3979
        %v4461 = vunpack.c.h.b16 %v3979
        %v4462 = vunpack.c.l.b16 %v3980
        %v4463 = vunpack.c.h.b16 %v3980
        %v4464 = vunpack.c.l.b16 %v3981
        %v4465 = vunpack.c.h.b16 %v3981
        %v4466 = vunpack.c.l.b16 %v3982
        %v4467 = vunpack.c.l.b16 %v3983
        %v4468 = vunpack.c.h.b16 %v3983
        %v4469 = vunpack.c.l.b16 %v3984
        %v4470 = vunpack.c.h.b16 %v3984
        %v4471 = vunpack.c.l.b16 %v3985
        %v4472 = vunpack.c.h.b16 %v3985
        %v4473 = vunpack.c.l.b16 %v3986
        %v4474 = vunpack.c.h.b16 %v3986
        %v4475 = vunpack.c.l.b16 %v3987
        %v4476 = vunpack.c.l.b16 %v3988
        %v4477 = vunpack.c.h.b16 %v3988
        %v4478 = vunpack.c.l.b16 %v3989
        %v4479 = vunpack.c.h.b16 %v3989
        %v4480 = vunpack.c.l.b16 %v3990
        %v4481 = vunpack.c.h.b16 %v3990
        %v4482 = vunpack.c.l.b16 %v3991
        %v4483 = vunpack.c.h.b16 %v3991
        %v4484 = vunpack.c.l.b16 %v3992
        %v4485 = vunpack.c.l.b16 %v3993
        %v4486 = vunpack.c.h.b16 %v3993
        %v4487 = vunpack.c.l.b16 %v3994
        %v4488 = vunpack.c.h.b16 %v3994
        %v4489 = vunpack.c.l.b16 %v3995
        %v4490 = vunpack.c.h.b16 %v3995
        %v4491 = vunpack.c.l.b16 %v3996
        %v4492 = vunpack.c.h.b16 %v3996
        %v4493 = vunpack.c.l.b16 %v3997
        %v4494 = vunpack.c.l.b16 %v3998
        %v4495 = vunpack.c.h.b16 %v3998
        %v4496 = vunpack.c.l.b16 %v3999
        %v4497 = vunpack.c.h.b16 %v3999
        %v4498 = vunpack.c.l.b16 %v4000
        %v4499 = vunpack.c.h.b16 %v4000
        %v4500 = vunpack.c.l.b16 %v4001
        %v4501 = vunpack.c.h.b16 %v4001
        %v4502 = vunpack.c.l.b16 %v4002
        %v4503 = vunpack.c.l.b16 %v4003
        %v4504 = vunpack.c.h.b16 %v4003
        %v4505 = vunpack.c.l.b16 %v4004
        %v4506 = vunpack.c.h.b16 %v4004
        %v4507 = vunpack.c.l.b16 %v4005
        %v4508 = vunpack.c.h.b16 %v4005
        %v4509 = vunpack.c.l.b16 %v4006
        %v4510 = vunpack.c.h.b16 %v4006
        %v4511 = vunpack.c.l.b16 %v4007
        %v4512 = vunpack.c.l.b16 %v4008
        %v4513 = vunpack.c.h.b16 %v4008
        %v4514 = vunpack.c.l.b16 %v4009
        %v4515 = vunpack.c.h.b16 %v4009
        %v4516 = vunpack.c.l.b16 %v4010
        %v4517 = vunpack.c.h.b16 %v4010
        %v4518 = vunpack.c.l.b16 %v4011
        %v4519 = vunpack.c.h.b16 %v4011
        %v4520 = vunpack.c.l.b16 %v4012
        %v4521 = vunpack.c.l.b16 %v4013
        %v4522 = vunpack.c.h.b16 %v4013
        %v4523 = vunpack.c.l.b16 %v4014
        %v4524 = vunpack.c.h.b16 %v4014
        %v4525 = vunpack.c.l.b16 %v4015
        %v4526 = vunpack.c.h.b16 %v4015
        %v4527 = vunpack.c.l.b16 %v4016
        %v4528 = vunpack.c.h.b16 %v4016
        %v4529 = vunpack.c.l.b16 %v4017
        %v4530 = vunpack.c.l.b16 %v4018
        %v4531 = vunpack.c.h.b16 %v4018
        %v4532 = vunpack.c.l.b16 %v4019
        %v4533 = vunpack.c.h.b16 %v4019
        %v4534 = vunpack.c.l.b16 %v4020
        %v4535 = vunpack.c.h.b16 %v4020
        %v4536 = vunpack.c.l.b16 %v4021
        %v4537 = vunpack.c.h.b16 %v4021
        %v4538 = vunpack.c.l.b16 %v4022
        %v4539 = vunpack.c.l.b16 %v4023
        %v4540 = vunpack.c.h.b16 %v4023
        %v4541 = vunpack.c.l.b16 %v4024
        %v4542 = vunpack.c.h.b16 %v4024
        %v4543 = vunpack.c.l.b16 %v4025
        %v4544 = vunpack.c.h.b16 %v4025
        %v4545 = vunpack.c.l.b16 %v4026
        %v4546 = vunpack.c.h.b16 %v4026
        %v4547 = vunpack.c.l.b16 %v4027
        %v4548 = vunpack.c.l.b16 %v4028
        %v4549 = vunpack.c.h.b16 %v4028
        %v4550 = vunpack.c.l.b16 %v4029
        %v4551 = vunpack.c.h.b16 %v4029
        %v4552 = vunpack.c.l.b16 %v4030
        %v4553 = vunpack.c.h.b16 %v4030
        %v4554 = vunpack.c.l.b16 %v4031
        %v4555 = vunpack.c.h.b16 %v4031
        %v4556 = vunpack.c.l.b16 %v4032
        %v4557 = vunpack.c.l.b16 %v4033
        %v4558 = vunpack.c.h.b16 %v4033
        %v4559 = vunpack.c.l.b16 %v4034
        %v4560 = vunpack.c.h.b16 %v4034
        %v4561 = vunpack.c.l.b16 %v4035
        %v4562 = vunpack.c.h.b16 %v4035
        %v4563 = vunpack.c.l.b16 %v4036
        %v4564 = vunpack.c.h.b16 %v4036
        %v4565 = vunpack.c.l.b16 %v4037
        %v4566 = vunpack.c.l.b16 %v4038
        %v4567 = vunpack.c.h.b16 %v4038
        %v4568 = vunpack.c.l.b16 %v4039
        %v4569 = vunpack.c.h.b16 %v4039
        %v4570 = vunpack.c.l.b16 %v4040
        %v4571 = vunpack.c.h.b16 %v4040
        %v4572 = vunpack.c.l.b16 %v4041
        %v4573 = vunpack.c.h.b16 %v4041
        %v4574 = vunpack.c.l.b16 %v4042
        %v4575 = vunpack.c.l.b16 %v4043
        %v4576 = vunpack.c.h.b16 %v4043
        %v4577 = vunpack.c.l.b16 %v4044
        %v4578 = vunpack.c.h.b16 %v4044
        %v4579 = vunpack.c.l.b16 %v4045
        %v4580 = vunpack.c.h.b16 %v4045
        %v4581 = vunpack.c.l.b16 %v4046
        %v4582 = vunpack.c.h.b16 %v4046
        %v4583 = vunpack.c.l.b16 %v4047
        %v4584 = vunpack.c.l.b16 %v4048
        %v4585 = vunpack.c.h.b16 %v4048
        %v4586 = vunpack.c.l.b16 %v4049
        %v4587 = vunpack.c.h.b16 %v4049
        %v4588 = vunpack.c.l.b16 %v4050
        %v4589 = vunpack.c.h.b16 %v4050
        %v4590 = vunpack.c.l.b16 %v4051
        %v4591 = vunpack.c.h.b16 %v4051
        %v4592 = vunpack.c.l.b16 %v4052
        %v4593 = vunpack.c.l.b16 %v4053
        %v4594 = vunpack.c.h.b16 %v4053
        %v4595 = vunpack.c.l.b16 %v4054
        %v4596 = vunpack.c.h.b16 %v4054
        %v4597 = vunpack.c.l.b16 %v4055
        %v4598 = vunpack.c.h.b16 %v4055
        %v4599 = vunpack.c.l.b16 %v4056
        %v4600 = vunpack.c.h.b16 %v4056
        %v4601 = vunpack.c.l.b16 %v4057
        %v4602 = vunpack.c.l.b16 %v4058
        %v4603 = vunpack.c.h.b16 %v4058
        %v4604 = vunpack.c.l.b16 %v4059
        %v4605 = vunpack.c.h.b16 %v4059
        %v4606 = vunpack.c.l.b16 %v4060
        %v4607 = vunpack.c.h.b16 %v4060
        %v4608 = vunpack.c.l.b16 %v4061
        %v4609 = vunpack.c.h.b16 %v4061
        %v4610 = vunpack.c.l.b16 %v4062
        %v4611 = vunpack.c.l.b16 %v4063
        %v4612 = vunpack.c.h.b16 %v4063
        %v4613 = vunpack.c.l.b16 %v4064
        %v4614 = vunpack.c.h.b16 %v4064
        %v4615 = vunpack.c.l.b16 %v4065
        %v4616 = vunpack.c.h.b16 %v4065
        %v4617 = vunpack.c.l.b16 %v4066
        %v4618 = vunpack.c.h.b16 %v4066
        %v4619 = vunpack.c.l.b16 %v4067
        %v4620 = vunpack.c.l.b16 %v4068
        %v4621 = vunpack.c.h.b16 %v4068
        %v4622 = vunpack.c.l.b16 %v4069
        %v4623 = vunpack.c.h.b16 %v4069
        %v4624 = vunpack.c.l.b16 %v4070
        %v4625 = vunpack.c.h.b16 %v4070
        %v4626 = vunpack.c.l.b16 %v4071
        %v4627 = vunpack.c.h.b16 %v4071
        %v4628 = vunpack.c.l.b16 %v4072
        %v4629 = vunpack.c.l.b16 %v4073
        %v4630 = vunpack.c.h.b16 %v4073
        %v4631 = vunpack.c.l.b16 %v4074
        %v4632 = vunpack.c.h.b16 %v4074
        %v4633 = vunpack.c.l.b16 %v4075
        %v4634 = vunpack.c.h.b16 %v4075
        %v4635 = vunpack.c.l.b16 %v4076
        %v4636 = vunpack.c.h.b16 %v4076
        %v4637 = vunpack.c.l.b16 %v4077
        %v4638 = vunpack.c.l.b16 %v4078
        %v4639 = vunpack.c.h.b16 %v4078
        %v4640 = vunpack.c.l.b16 %v4079
        %v4641 = vunpack.c.h.b16 %v4079
        %v4642 = vunpack.c.l.b16 %v4080
        %v4643 = vunpack.c.h.b16 %v4080
        %v4644 = vunpack.c.l.b16 %v4081
        %v4645 = vunpack.c.h.b16 %v4081
        %v4646 = vunpack.c.l.b16 %v4082
        %v4647 = vunpack.c.l.b16 %v4083
        %v4648 = vunpack.c.h.b16 %v4083
        %v4649 = vunpack.c.l.b16 %v4084
        %v4650 = vunpack.c.h.b16 %v4084
        %v4651 = vunpack.c.l.b16 %v4085
        %v4652 = vunpack.c.h.b16 %v4085
        %v4653 = vunpack.c.l.b16 %v4086
        %v4654 = vunpack.c.h.b16 %v4086
        %v4655 = vunpack.c.l.b16 %v4087
        %v4656 = vunpack.c.l.b16 %v4088
        %v4657 = vunpack.c.h.b16 %v4088
        %v4658 = vunpack.c.l.b16 %v4089
        %v4659 = vunpack.c.h.b16 %v4089
        %v4660 = vunpack.c.l.b16 %v4090
        %v4661 = vunpack.c.h.b16 %v4090
        %v4662 = vunpack.c.l.b16 %v4091
        %v4663 = vunpack.c.h.b16 %v4091
        %v4664 = vunpack.c.l.b16 %v4092
        %v4665 = vunpack.c.l.b16 %v4093
        %v4666 = vunpack.c.h.b16 %v4093
        %v4667 = vunpack.c.l.b16 %v4094
        %v4668 = vunpack.c.h.b16 %v4094
        %v4669 = vunpack.c.l.b16 %v4095
        %v4670 = vunpack.c.h.b16 %v4095
        %v4671 = vunpack.c.l.b16 %v4096
        %v4672 = vunpack.c.h.b16 %v4096
        %v4673 = vunpack.c.l.b16 %v4097
        %v4674 = vunpack.c.l.b16 %v4098
        %v4675 = vunpack.c.h.b16 %v4098
        %v4676 = vunpack.c.l.b16 %v4099
        %v4677 = vunpack.c.h.b16 %v4099
        %v4678 = vunpack.c.l.b16 %v4100
        %v4679 = vunpack.c.h.b16 %v4100
        %v4680 = vunpack.c.l.b16 %v4101
        %v4681 = vunpack.c.h.b16 %v4101
        %v4682 = vunpack.c.l.b16 %v4102
        %v4683 = vunpack.c.l.b16 %v4103
        %v4684 = vunpack.c.h.b16 %v4103
        %v4685 = vunpack.c.l.b16 %v4104
        %v4686 = vunpack.c.h.b16 %v4104
        %v4687 = vunpack.c.l.b16 %v4105
        %v4688 = vunpack.c.h.b16 %v4105
        %v4689 = vunpack.c.l.b16 %v4106
        %v4690 = vunpack.c.h.b16 %v4106
        %v4691 = vunpack.c.l.b16 %v4107
        %v4692 = vunpack.c.l.b16 %v4108
        %v4693 = vunpack.c.h.b16 %v4108
        %v4694 = vunpack.c.l.b16 %v4109
        %v4695 = vunpack.c.h.b16 %v4109
        %v4696 = vunpack.c.l.b16 %v4110
        %v4697 = vunpack.c.h.b16 %v4110
        %v4698 = vunpack.c.l.b16 %v4111
        %v4699 = vunpack.c.h.b16 %v4111
        %v4700 = vunpack.c.l.b16 %v4112
        %v4701 = vunpack.c.l.b16 %v4113
        %v4702 = vunpack.c.h.b16 %v4113
        %v4703 = vunpack.c.l.b16 %v4114
        %v4704 = vunpack.c.h.b16 %v4114
        %v4705 = vunpack.c.l.b16 %v4115
        %v4706 = vunpack.c.h.b16 %v4115
        %v4707 = vunpack.c.l.b16 %v4116
        %v4708 = vunpack.c.h.b16 %v4116
        %v4709 = vunpack.c.l.b16 %v4117
        %v4710 = vpack.c.b16 %v4431, %v4422
        %v4711 = vpack.c.b16 %v4432, %v4423
        %v4712 = vpack.c.b16 %v4433, %v4424
        %v4713 = vpack.c.b16 %v4434, %v4425
        %v4714 = vpack.c.b16 %v4435, %v4426
        %v4715 = vpack.c.b16 %v4436, %v4427
        %v4716 = vpack.c.b16 %v4437, %v4428
        %v4717 = vpack.c.b16 %v4438, %v4429
        %v4718 = vpack.c.b16 %v4439, %v4430
        %v4719 = vpack.c.b16 %v4449, %v4440
        %v4720 = vpack.c.b16 %v4450, %v4441
        %v4721 = vpack.c.b16 %v4451, %v4442
        %v4722 = vpack.c.b16 %v4452, %v4443
        %v4723 = vpack.c.b16 %v4453, %v4444
        %v4724 = vpack.c.b16 %v4454, %v4445
        %v4725 = vpack.c.b16 %v4455, %v4446
        %v4726 = vpack.c.b16 %v4456, %v4447
        %v4727 = vpack.c.b16 %v4457, %v4448
        %v4728 = vpack.c.b16 %v4467, %v4458
        %v4729 = vpack.c.b16 %v4468, %v4459
        %v4730 = vpack.c.b16 %v4469, %v4460
        %v4731 = vpack.c.b16 %v4470, %v4461
        %v4732 = vpack.c.b16 %v4471, %v4462
        %v4733 = vpack.c.b16 %v4472, %v4463
        %v4734 = vpack.c.b16 %v4473, %v4464
        %v4735 = vpack.c.b16 %v4474, %v4465
        %v4736 = vpack.c.b16 %v4475, %v4466
        %v4737 = vpack.c.b16 %v4485, %v4476
        %v4738 = vpack.c.b16 %v4486, %v4477
        %v4739 = vpack.c.b16 %v4487, %v4478
        %v4740 = vpack.c.b16 %v4488, %v4479
        %v4741 = vpack.c.b16 %v4489, %v4480
        %v4742 = vpack.c.b16 %v4490, %v4481
        %v4743 = vpack.c.b16 %v4491, %v4482
        %v4744 = vpack.c.b16 %v4492, %v4483
        %v4745 = vpack.c.b16 %v4493, %v4484
        %v4746 = vpack.c.b16 %v4503, %v4494
        %v4747 = vpack.c.b16 %v4504, %v4495
        %v4748 = vpack.c.b16 %v4505, %v4496
        %v4749 = vpack.c.b16 %v4506, %v4497
        %v4750 = vpack.c.b16 %v4507, %v4498
        %v4751 = vpack.c.b16 %v4508, %v4499
        %v4752 = vpack.c.b16 %v4509, %v4500
        %v4753 = vpack.c.b16 %v4510, %v4501
        %v4754 = vpack.c.b16 %v4511, %v4502
        %v4755 = vpack.c.b16 %v4521, %v4512
        %v4756 = vpack.c.b16 %v4522, %v4513
        %v4757 = vpack.c.b16 %v4523, %v4514
        %v4758 = vpack.c.b16 %v4524, %v4515
        %v4759 = vpack.c.b16 %v4525, %v4516
        %v4760 = vpack.c.b16 %v4526, %v4517
        %v4761 = vpack.c.b16 %v4527, %v4518
        %v4762 = vpack.c.b16 %v4528, %v4519
        %v4763 = vpack.c.b16 %v4529, %v4520
        %v4764 = vpack.c.b16 %v4539, %v4530
        %v4765 = vpack.c.b16 %v4540, %v4531
        %v4766 = vpack.c.b16 %v4541, %v4532
        %v4767 = vpack.c.b16 %v4542, %v4533
        %v4768 = vpack.c.b16 %v4543, %v4534
        %v4769 = vpack.c.b16 %v4544, %v4535
        %v4770 = vpack.c.b16 %v4545, %v4536
        %v4771 = vpack.c.b16 %v4546, %v4537
        %v4772 = vpack.c.b16 %v4547, %v4538
        %v4773 = vpack.c.b16 %v4557, %v4548
        %v4774 = vpack.c.b16 %v4558, %v4549
        %v4775 = vpack.c.b16 %v4559, %v4550
        %v4776 = vpack.c.b16 %v4560, %v4551
        %v4777 = vpack.c.b16 %v4561, %v4552
        %v4778 = vpack.c.b16 %v4562, %v4553
        %v4779 = vpack.c.b16 %v4563, %v4554
        %v4780 = vpack.c.b16 %v4564, %v4555
        %v4781 = vpack.c.b16 %v4565, %v4556
        %v4782 = vpack.c.b16 %v4575, %v4566
        %v4783 = vpack.c.b16 %v4576, %v4567
        %v4784 = vpack.c.b16 %v4577, %v4568
        %v4785 = vpack.c.b16 %v4578, %v4569
        %v4786 = vpack.c.b16 %v4579, %v4570
        %v4787 = vpack.c.b16 %v4580, %v4571
        %v4788 = vpack.c.b16 %v4581, %v4572
        %v4789 = vpack.c.b16 %v4582, %v4573
        %v4790 = vpack.c.b16 %v4583, %v4574
        %v4791 = vpack.c.b16 %v4593, %v4584
        %v4792 = vpack.c.b16 %v4594, %v4585
        %v4793 = vpack.c.b16 %v4595, %v4586
        %v4794 = vpack.c.b16 %v4596, %v4587
        %v4795 = vpack.c.b16 %v4597, %v4588
        %v4796 = vpack.c.b16 %v4598, %v4589
        %v4797 = vpack.c.b16 %v4599, %v4590
        %v4798 = vpack.c.b16 %v4600, %v4591
        %v4799 = vpack.c.b16 %v4601, %v4592
        %v4800 = vpack.c.b16 %v4611, %v4602
        %v4801 = vpack.c.b16 %v4612, %v4603
        %v4802 = vpack.c.b16 %v4613, %v4604
        %v4803 = vpack.c.b16 %v4614, %v4605
        %v4804 = vpack.c.b16 %v4615, %v4606
        %v4805 = vpack.c.b16 %v4616, %v4607
        %v4806 = vpack.c.b16 %v4617, %v4608
        %v4807 = vpack.c.b16 %v4618, %v4609
        %v4808 = vpack.c.b16 %v4619, %v4610
        %v4809 = vpack.c.b16 %v4629, %v4620
        %v4810 = vpack.c.b16 %v4630, %v4621
        %v4811 = vpack.c.b16 %v4631, %v4622
        %v4812 = vpack.c.b16 %v4632, %v4623
        %v4813 = vpack.c.b16 %v4633, %v4624
        %v4814 = vpack.c.b16 %v4634, %v4625
        %v4815 = vpack.c.b16 %v4635, %v4626
        %v4816 = vpack.c.b16 %v4636, %v4627
        %v4817 = vpack.c.b16 %v4637, %v4628
        %v4818 = vpack.c.b16 %v4647, %v4638
        %v4819 = vpack.c.b16 %v4648, %v4639
        %v4820 = vpack.c.b16 %v4649, %v4640
        %v4821 = vpack.c.b16 %v4650, %v4641
        %v4822 = vpack.c.b16 %v4651, %v4642
        %v4823 = vpack.c.b16 %v4652, %v4643
        %v4824 = vpack.c.b16 %v4653, %v4644
        %v4825 = vpack.c.b16 %v4654, %v4645
        %v4826 = vpack.c.b16 %v4655, %v4646
        %v4827 = vpack.c.b16 %v4665, %v4656
        %v4828 = vpack.c.b16 %v4666, %v4657
        %v4829 = vpack.c.b16 %v4667, %v4658
        %v4830 = vpack.c.b16 %v4668, %v4659
        %v4831 = vpack.c.b16 %v4669, %v4660
        %v4832 = vpack.c.b16 %v4670, %v4661
        %v4833 = vpack.c.b16 %v4671, %v4662
        %v4834 = vpack.c.b16 %v4672, %v4663
        %v4835 = vpack.c.b16 %v4673, %v4664
        %v4836 = vpack.c.b16 %v4683, %v4674
        %v4837 = vpack.c.b16 %v4684, %v4675
        %v4838 = vpack.c.b16 %v4685, %v4676
        %v4839 = vpack.c.b16 %v4686, %v4677
        %v4840 = vpack.c.b16 %v4687, %v4678
        %v4841 = vpack.c.b16 %v4688, %v4679
        %v4842 = vpack.c.b16 %v4689, %v4680
        %v4843 = vpack.c.b16 %v4690, %v4681
        %v4844 = vpack.c.b16 %v4691, %v4682
        %v4845 = vpack.c.b16 %v4701, %v4692
        %v4846 = vpack.c.b16 %v4702, %v4693
        %v4847 = vpack.c.b16 %v4703, %v4694
        %v4848 = vpack.c.b16 %v4704, %v4695
        %v4849 = vpack.c.b16 %v4705, %v4696
        %v4850 = vpack.c.b16 %v4706, %v4697
        %v4851 = vpack.c.b16 %v4707, %v4698
        %v4852 = vpack.c.b16 %v4708, %v4699
        %v4853 = vpack.c.b16 %v4709, %v4700
        %v5142 = vunpack.c.l.b16 %v4118
        %v5143 = vunpack.c.l.b16 %v4119
        %v5144 = vunpack.c.l.b16 %v4120
        %v5145 = vunpack.c.l.b16 %v4121
        %v5146 = vunpack.c.l.b16 %v4122
        %v5147 = vunpack.c.l.b16 %v4123
        %v5148 = vunpack.c.l.b16 %v4124
        %v5149 = vunpack.c.l.b16 %v4125
        %v5150 = vunpack.c.l.b16 %v4126
        %v5151 = vunpack.c.l.b16 %v4127
        %v5152 = vunpack.c.l.b16 %v4128
        %v5153 = vunpack.c.l.b16 %v4129
        %v5154 = vunpack.c.l.b16 %v4130
        %v5155 = vunpack.c.l.b16 %v4131
        %v5156 = vunpack.c.l.b16 %v4132
        %v5157 = vunpack.c.l.b16 %v4133
        %v5158 = vunpack.c.l.b16 %v4134
        %v5159 = vunpack.c.l.b16 %v4135
        %v5160 = vunpack.c.l.b16 %v4136
        %v5161 = vunpack.c.l.b16 %v4137
        %v5162 = vunpack.c.l.b16 %v4138
        %v5163 = vunpack.c.l.b16 %v4139
        %v5164 = vunpack.c.l.b16 %v4140
        %v5165 = vunpack.c.l.b16 %v4141
        %v5166 = vunpack.c.l.b16 %v4142
        %v5167 = vunpack.c.l.b16 %v4143
        %v5168 = vunpack.c.l.b16 %v4144
        %v5169 = vunpack.c.l.b16 %v4145
        %v5170 = vunpack.c.l.b16 %v4146
        %v5171 = vunpack.c.l.b16 %v4147
        %v5172 = vunpack.c.l.b16 %v4148
        %v5173 = vunpack.c.l.b16 %v4149
        %v5174 = vunpack.c.l.b16 %v4150
        %v5175 = vunpack.c.l.b16 %v4151
        %v5176 = vunpack.c.l.b16 %v4152
        %v5177 = vunpack.c.l.b16 %v4153
        %v5178 = vunpack.c.l.b16 %v4154
        %v5179 = vunpack.c.l.b16 %v4155
        %v5180 = vunpack.c.l.b16 %v4156
        %v5181 = vunpack.c.l.b16 %v4157
        %v5182 = vunpack.c.l.b16 %v4158
        %v5183 = vunpack.c.l.b16 %v4159
        %v5184 = vunpack.c.l.b16 %v4160
        %v5185 = vunpack.c.l.b16 %v4161
        %v5186 = vunpack.c.l.b16 %v4162
        %v5187 = vunpack.c.l.b16 %v4163
        %v5188 = vunpack.c.l.b16 %v4164
        %v5189 = vunpack.c.l.b16 %v4165
        %v5190 = vunpack.c.l.b16 %v4166
        %v5191 = vunpack.c.l.b16 %v4167
        %v5192 = vunpack.c.l.b16 %v4168
        %v5193 = vunpack.c.l.b16 %v4169
        %v5194 = vunpack.c.l.b16 %v4170
        %v5195 = vunpack.c.l.b16 %v4171
        %v5196 = vunpack.c.l.b16 %v4172
        %v5197 = vunpack.c.l.b16 %v4173
        %v5198 = vunpack.c.l.b16 %v4174
        %v5199 = vunpack.c.l.b16 %v4175
        %v5200 = vunpack.c.l.b16 %v4176
        %v5201 = vunpack.c.l.b16 %v4177
        %v5202 = vunpack.c.l.b16 %v4178
        %v5203 = vunpack.c.l.b16 %v4179
        %v5204 = vunpack.c.l.b16 %v4180
        %v5205 = vunpack.c.l.b16 %v4181
        %v5206 = vunpack.c.l.b16 %v4182
        %v5207 = vunpack.c.l.b16 %v4183
        %v5208 = vunpack.c.l.b16 %v4184
        %v5209 = vunpack.c.l.b16 %v4185
        %v5210 = vunpack.c.l.b16 %v4186
        %v5211 = vunpack.c.l.b16 %v4187
        %v5212 = vunpack.c.l.b16 %v4188
        %v5213 = vunpack.c.l.b16 %v4189
        %v5214 = vunpack.c.l.b16 %v4190
        %v5215 = vunpack.c.l.b16 %v4191
        %v5216 = vunpack.c.l.b16 %v4192
        %v5217 = vunpack.c.l.b16 %v4193
        %v5218 = vunpack.c.l.b16 %v4194
        %v5219 = vunpack.c.l.b16 %v4195
        %v5220 = vunpack.c.l.b16 %v4196
        %v5221 = vunpack.c.l.b16 %v4197
        %v5222 = vunpack.c.l.b16 %v4198
        %v5223 = vunpack.c.l.b16 %v4199
        %v5224 = vunpack.c.l.b16 %v4200
        %v5225 = vunpack.c.l.b16 %v4201
        %v5226 = vunpack.c.l.b16 %v4202
        %v5227 = vunpack.c.l.b16 %v4203
        %v5228 = vunpack.c.l.b16 %v4204
        %v5229 = vunpack.c.l.b16 %v4205
        %v5230 = vunpack.c.l.b16 %v4206
        %v5231 = vunpack.c.l.b16 %v4207
        %v5232 = vunpack.c.l.b16 %v4208
        %v5233 = vunpack.c.l.b16 %v4209
        %v5234 = vunpack.c.l.b16 %v4210
        %v5235 = vunpack.c.l.b16 %v4211
        %v5236 = vunpack.c.l.b16 %v4212
        %v5237 = vunpack.c.l.b16 %v4213
        %v5238 = vunpack.c.l.b16 %v4214
        %v5239 = vunpack.c.l.b16 %v4215
        %v5240 = vunpack.c.l.b16 %v4216
        %v5241 = vunpack.c.l.b16 %v4217
        %v5242 = vunpack.c.l.b16 %v4218
        %v5243 = vunpack.c.l.b16 %v4219
        %v5244 = vunpack.c.l.b16 %v4220
        %v5245 = vunpack.c.l.b16 %v4221
        %v5246 = vunpack.c.l.b16 %v4222
        %v5247 = vunpack.c.l.b16 %v4223
        %v5248 = vunpack.c.l.b16 %v4224
        %v5249 = vunpack.c.l.b16 %v4225
        %v5250 = vunpack.c.l.b16 %v4226
        %v5251 = vunpack.c.l.b16 %v4227
        %v5252 = vunpack.c.l.b16 %v4228
        %v5253 = vunpack.c.l.b16 %v4229
        %v5254 = vunpack.c.l.b16 %v4230
        %v5255 = vunpack.c.l.b16 %v4231
        %v5256 = vunpack.c.l.b16 %v4232
        %v5257 = vunpack.c.l.b16 %v4233
        %v5258 = vunpack.c.l.b16 %v4234
        %v5259 = vunpack.c.l.b16 %v4235
        %v5260 = vunpack.c.l.b16 %v4236
        %v5261 = vunpack.c.l.b16 %v4237
        %v5262 = vunpack.c.l.b16 %v4238
        %v5263 = vunpack.c.l.b16 %v4239
        %v5264 = vunpack.c.l.b16 %v4240
        %v5265 = vunpack.c.l.b16 %v4241
        %v5266 = vunpack.c.l.b16 %v4242
        %v5267 = vunpack.c.l.b16 %v4243
        %v5268 = vunpack.c.l.b16 %v4244
        %v5269 = vunpack.c.l.b16 %v4245
        %v5270 = vunpack.c.l.b16 %v4246
        %v5271 = vunpack.c.l.b16 %v4247
        %v5272 = vunpack.c.l.b16 %v4248
        %v5273 = vunpack.c.l.b16 %v4249
        %v5274 = vunpack.c.l.b16 %v4250
        %v5275 = vunpack.c.l.b16 %v4251
        %v5276 = vunpack.c.l.b16 %v4252
        %v5277 = vunpack.c.l.b16 %v4253
        %v5278 = vunpack.c.l.b16 %v4254
        %v5279 = vunpack.c.l.b16 %v4255
        %v5280 = vunpack.c.l.b16 %v4256
        %v5281 = vunpack.c.l.b16 %v4257
        %v5282 = vunpack.c.l.b16 %v4258
        %v5283 = vunpack.c.l.b16 %v4259
        %v5284 = vunpack.c.l.b16 %v4260
        %v5285 = vunpack.c.l.b16 %v4261
        %v5286 = vpack.c.b16 %v5143, %v5142
        %v5287 = vpack.c.b16 %v5145, %v5144
        %v5288 = vpack.c.b16 %v5147, %v5146
        %v5289 = vpack.c.b16 %v5149, %v5148
        %v5290 = vpack.c.b16 %v5151, %v5150
        %v5291 = vpack.c.b16 %v5153, %v5152
        %v5292 = vpack.c.b16 %v5155, %v5154
        %v5293 = vpack.c.b16 %v5157, %v5156
        %v5294 = vpack.c.b16 %v5159, %v5158
        %v5295 = vpack.c.b16 %v5161, %v5160
        %v5296 = vpack.c.b16 %v5163, %v5162
        %v5297 = vpack.c.b16 %v5165, %v5164
        %v5298 = vpack.c.b16 %v5167, %v5166
        %v5299 = vpack.c.b16 %v5169, %v5168
        %v5300 = vpack.c.b16 %v5171, %v5170
        %v5301 = vpack.c.b16 %v5173, %v5172
        %v5302 = vpack.c.b16 %v5175, %v5174
        %v5303 = vpack.c.b16 %v5177, %v5176
        %v5304 = vpack.c.b16 %v5179, %v5178
        %v5305 = vpack.c.b16 %v5181, %v5180
        %v5306 = vpack.c.b16 %v5183, %v5182
        %v5307 = vpack.c.b16 %v5185, %v5184
        %v5308 = vpack.c.b16 %v5187, %v5186
        %v5309 = vpack.c.b16 %v5189, %v5188
        %v5310 = vpack.c.b16 %v5191, %v5190
        %v5311 = vpack.c.b16 %v5193, %v5192
        %v5312 = vpack.c.b16 %v5195, %v5194
        %v5313 = vpack.c.b16 %v5197, %v5196
        %v5314 = vpack.c.b16 %v5199, %v5198
        %v5315 = vpack.c.b16 %v5201, %v5200
        %v5316 = vpack.c.b16 %v5203, %v5202
        %v5317 = vpack.c.b16 %v5205, %v5204
        %v5318 = vpack.c.b16 %v5207, %v5206
        %v5319 = vpack.c.b16 %v5209, %v5208
        %v5320 = vpack.c.b16 %v5211, %v5210
        %v5321 = vpack.c.b16 %v5213, %v5212
        %v5322 = vpack.c.b16 %v5215, %v5214
        %v5323 = vpack.c.b16 %v5217, %v5216
        %v5324 = vpack.c.b16 %v5219, %v5218
        %v5325 = vpack.c.b16 %v5221, %v5220
        %v5326 = vpack.c.b16 %v5223, %v5222
        %v5327 = vpack.c.b16 %v5225, %v5224
        %v5328 = vpack.c.b16 %v5227, %v5226
        %v5329 = vpack.c.b16 %v5229, %v5228
        %v5330 = vpack.c.b16 %v5231, %v5230
        %v5331 = vpack.c.b16 %v5233, %v5232
        %v5332 = vpack.c.b16 %v5235, %v5234
        %v5333 = vpack.c.b16 %v5237, %v5236
        %v5334 = vpack.c.b16 %v5239, %v5238
        %v5335 = vpack.c.b16 %v5241, %v5240
        %v5336 = vpack.c.b16 %v5243, %v5242
        %v5337 = vpack.c.b16 %v5245, %v5244
        %v5338 = vpack.c.b16 %v5247, %v5246
        %v5339 = vpack.c.b16 %v5249, %v5248
        %v5340 = vpack.c.b16 %v5251, %v5250
        %v5341 = vpack.c.b16 %v5253, %v5252
        %v5342 = vpack.c.b16 %v5255, %v5254
        %v5343 = vpack.c.b16 %v5257, %v5256
        %v5344 = vpack.c.b16 %v5259, %v5258
        %v5345 = vpack.c.b16 %v5261, %v5260
        %v5346 = vpack.c.b16 %v5263, %v5262
        %v5347 = vpack.c.b16 %v5265, %v5264
        %v5348 = vpack.c.b16 %v5267, %v5266
        %v5349 = vpack.c.b16 %v5269, %v5268
        %v5350 = vpack.c.b16 %v5271, %v5270
        %v5351 = vpack.c.b16 %v5273, %v5272
        %v5352 = vpack.c.b16 %v5275, %v5274
        %v5353 = vpack.c.b16 %v5277, %v5276
        %v5354 = vpack.c.b16 %v5279, %v5278
        %v5355 = vpack.c.b16 %v5281, %v5280
        %v5356 = vpack.c.b16 %v5283, %v5282
        %v5357 = vpack.c.b16 %v5285, %v5284
        %5430 = vmatprep.subr.bf16.mxu0 0
        %5431 = vmatpush1.bf16.msra.mxu0 %v5293
        %5432 = vmatprep.subr.bf16.mxu0 0
        %5433 = vmatpush1.bf16.msra.mxu0 %v5292
        %5434 = vmatprep.subr.bf16.mxu0 0
        %5435 = vmatpush1.bf16.msra.mxu0 %v5291
        %5436 = vmatprep.subr.bf16.mxu0 0
        %5437 = vmatpush1.bf16.msra.mxu0 %v5290
        %5438 = vmatprep.subr.bf16.mxu0 0
        %5439 = vmatpush1.bf16.msra.mxu0 %v5289
        %5440 = vmatprep.subr.bf16.mxu0 0
        %5441 = vmatpush1.bf16.msra.mxu0 %v5288
        %5442 = vmatprep.subr.bf16.mxu0 0
        %5443 = vmatpush1.bf16.msra.mxu0 %v5287
        %5444 = vmatprep.subr.bf16.mxu0 0
        %5445 = vmatpush1.bf16.msra.mxu0 %v5286
        %5446 = vmatprep.subr.bf16.mxu0 0
        %5447 = vmatpush2.bf16.msra.mxu0 %v5301
        %5448 = vmatprep.subr.bf16.mxu0 0
        %5449 = vmatpush2.bf16.msra.mxu0 %v5300
        %5450 = vmatprep.subr.bf16.mxu0 0
        %5451 = vmatpush2.bf16.msra.mxu0 %v5299
        %5452 = vmatprep.subr.bf16.mxu0 0
        %5453 = vmatpush2.bf16.msra.mxu0 %v5298
        %5454 = vmatprep.subr.bf16.mxu0 0
        %5455 = vmatpush2.bf16.msra.mxu0 %v5297
        %5456 = vmatprep.subr.bf16.mxu0 0
        %5457 = vmatpush2.bf16.msra.mxu0 %v5296
        %5458 = vmatprep.subr.bf16.mxu0 0
        %5459 = vmatpush2.bf16.msra.mxu0 %v5295
        %5460 = vmatprep.subr.bf16.mxu0 0
        %5461 = vmatpush2.bf16.msra.mxu0 %v5294
        %5462 = vmatprep.mubr.bf16.mxu0 %v4711
        %5463 = vmatmul.mubr.bf16.gmra.mxu0 %v4710
        %v5464 = vpop.f32.mrf.mxu0
        %v5465 = vadd.f32 0.0, %v5464
        %v5466 = vpop.f32.mrf.mxu0
        %v5467 = vpop.f32.mrf.mxu0
        %v5468 = vadd.f32 0.0, %v5467
        %v5469 = vpop.f32.mrf.mxu0
        %5470 = vmatprep.mubr.bf16.mxu0 %v4720
        %5471 = vmatmul.mubr.bf16.gmra.mxu0 %v4719
        %v5472 = vpop.f32.mrf.mxu0
        %v5473 = vadd.f32 0.0, %v5472
        %v5474 = vpop.f32.mrf.mxu0
        %v5475 = vpop.f32.mrf.mxu0
        %v5476 = vadd.f32 0.0, %v5475
        %v5477 = vpop.f32.mrf.mxu0
        %5478 = vmatprep.mubr.bf16.mxu0 %v4729
        %5479 = vmatmul.mubr.bf16.gmra.mxu0 %v4728
        %v5480 = vpop.f32.mrf.mxu0
        %v5481 = vadd.f32 0.0, %v5480
        %v5482 = vpop.f32.mrf.mxu0
        %v5483 = vpop.f32.mrf.mxu0
        %v5484 = vadd.f32 0.0, %v5483
        %v5485 = vpop.f32.mrf.mxu0
        %5486 = vmatprep.mubr.bf16.mxu0 %v4738
        %5487 = vmatmul.mubr.bf16.gmra.mxu0 %v4737
        %v5488 = vpop.f32.mrf.mxu0
        %v5489 = vadd.f32 0.0, %v5488
        %v5490 = vpop.f32.mrf.mxu0
        %v5491 = vpop.f32.mrf.mxu0
        %v5492 = vadd.f32 0.0, %v5491
        %v5493 = vpop.f32.mrf.mxu0
        %5494 = vmatprep.mubr.bf16.mxu0 %v4747
        %5495 = vmatmul.mubr.bf16.gmra.mxu0 %v4746
        %v5496 = vpop.f32.mrf.mxu0
        %v5497 = vadd.f32 0.0, %v5496
        %v5498 = vpop.f32.mrf.mxu0
        %v5499 = vpop.f32.mrf.mxu0
        %v5500 = vadd.f32 0.0, %v5499
        %v5501 = vpop.f32.mrf.mxu0
        %5502 = vmatprep.mubr.bf16.mxu0 %v4756
        %5503 = vmatmul.mubr.bf16.gmra.mxu0 %v4755
        %v5504 = vpop.f32.mrf.mxu0
        %v5505 = vadd.f32 0.0, %v5504
        %v5506 = vpop.f32.mrf.mxu0
        %v5507 = vpop.f32.mrf.mxu0
        %v5508 = vadd.f32 0.0, %v5507
        %v5509 = vpop.f32.mrf.mxu0
        %5510 = vmatprep.mubr.bf16.mxu0 %v4765
        %5511 = vmatmul.mubr.bf16.gmra.mxu0 %v4764
        %v5512 = vpop.f32.mrf.mxu0
        %v5513 = vadd.f32 0.0, %v5512
        %v5514 = vpop.f32.mrf.mxu0
        %v5515 = vpop.f32.mrf.mxu0
        %v5516 = vadd.f32 0.0, %v5515
        %v5517 = vpop.f32.mrf.mxu0
        %5518 = vmatprep.mubr.bf16.mxu0 %v4774
        %5519 = vmatmul.mubr.bf16.gmra.mxu0 %v4773
        %v5520 = vpop.f32.mrf.mxu0
        %v5521 = vadd.f32 0.0, %v5520
        %v5522 = vpop.f32.mrf.mxu0
        %v5523 = vpop.f32.mrf.mxu0
        %v5524 = vadd.f32 0.0, %v5523
        %v5525 = vpop.f32.mrf.mxu0
        %5526 = vmatprep.mubr.bf16.mxu0 %v4783
        %5527 = vmatmul.mubr.bf16.gmra.mxu0 %v4782
        %v5528 = vpop.f32.mrf.mxu0
        %v5529 = vadd.f32 0.0, %v5528
        %v5530 = vpop.f32.mrf.mxu0
        %v5531 = vpop.f32.mrf.mxu0
        %v5532 = vadd.f32 0.0, %v5531
        %v5533 = vpop.f32.mrf.mxu0
        %5534 = vmatprep.mubr.bf16.mxu0 %v4792
        %5535 = vmatmul.mubr.bf16.gmra.mxu0 %v4791
        %v5536 = vpop.f32.mrf.mxu0
        %v5537 = vadd.f32 0.0, %v5536
        %v5538 = vpop.f32.mrf.mxu0
        %v5539 = vpop.f32.mrf.mxu0
        %v5540 = vadd.f32 0.0, %v5539
        %v5541 = vpop.f32.mrf.mxu0
        %5542 = vmatprep.mubr.bf16.mxu0 %v4801
        %5543 = vmatmul.mubr.bf16.gmra.mxu0 %v4800
        %v5544 = vpop.f32.mrf.mxu0
        %v5545 = vadd.f32 0.0, %v5544
        %v5546 = vpop.f32.mrf.mxu0
        %v5547 = vpop.f32.mrf.mxu0
        %v5548 = vadd.f32 0.0, %v5547
        %v5549 = vpop.f32.mrf.mxu0
        %5550 = vmatprep.mubr.bf16.mxu0 %v4810
        %5551 = vmatmul.mubr.bf16.gmra.mxu0 %v4809
        %v5552 = vpop.f32.mrf.mxu0
        %v5553 = vadd.f32 0.0, %v5552
        %v5554 = vpop.f32.mrf.mxu0
        %v5555 = vpop.f32.mrf.mxu0
        %v5556 = vadd.f32 0.0, %v5555
        %v5557 = vpop.f32.mrf.mxu0
        %5558 = vmatprep.mubr.bf16.mxu0 %v4819
        %5559 = vmatmul.mubr.bf16.gmra.mxu0 %v4818
        %v5560 = vpop.f32.mrf.mxu0
        %v5561 = vadd.f32 0.0, %v5560
        %v5562 = vpop.f32.mrf.mxu0
        %v5563 = vpop.f32.mrf.mxu0
        %v5564 = vadd.f32 0.0, %v5563
        %v5565 = vpop.f32.mrf.mxu0
        %5566 = vmatprep.mubr.bf16.mxu0 %v4828
        %5567 = vmatmul.mubr.bf16.gmra.mxu0 %v4827
        %v5568 = vpop.f32.mrf.mxu0
        %v5569 = vadd.f32 0.0, %v5568
        %v5570 = vpop.f32.mrf.mxu0
        %v5571 = vpop.f32.mrf.mxu0
        %v5572 = vadd.f32 0.0, %v5571
        %v5573 = vpop.f32.mrf.mxu0
        %5574 = vmatprep.mubr.bf16.mxu0 %v4837
        %5575 = vmatmul.mubr.bf16.gmra.mxu0 %v4836
        %v5576 = vpop.f32.mrf.mxu0
        %v5577 = vadd.f32 0.0, %v5576
        %v5578 = vpop.f32.mrf.mxu0
        %v5579 = vpop.f32.mrf.mxu0
        %v5580 = vadd.f32 0.0, %v5579
        %v5581 = vpop.f32.mrf.mxu0
        %5582 = vmatprep.mubr.bf16.mxu0 %v4846
        %5583 = vmatmul.mubr.bf16.gmra.mxu0 %v4845
        %v5584 = vpop.f32.mrf.mxu0
        %v5585 = vadd.f32 0.0, %v5584
        %v5586 = vpop.f32.mrf.mxu0
        %v5587 = vpop.f32.mrf.mxu0
        %v5588 = vadd.f32 0.0, %v5587
        %v5589 = vpop.f32.mrf.mxu0
        %5590 = vdwg.mxu0
        %5591 = vmatprep.subr.bf16.mxu0 0
        %5592 = vmatpush1.bf16.msra.mxu0 %v5309
        %5593 = vmatprep.subr.bf16.mxu0 0
        %5594 = vmatpush1.bf16.msra.mxu0 %v5308
        %5595 = vmatprep.subr.bf16.mxu0 0
        %5596 = vmatpush1.bf16.msra.mxu0 %v5307
        %5597 = vmatprep.subr.bf16.mxu0 0
        %5598 = vmatpush1.bf16.msra.mxu0 %v5306
        %5599 = vmatprep.subr.bf16.mxu0 0
        %5600 = vmatpush1.bf16.msra.mxu0 %v5305
        %5601 = vmatprep.subr.bf16.mxu0 0
        %5602 = vmatpush1.bf16.msra.mxu0 %v5304
        %5603 = vmatprep.subr.bf16.mxu0 0
        %5604 = vmatpush1.bf16.msra.mxu0 %v5303
        %5605 = vmatprep.subr.bf16.mxu0 0
        %5606 = vmatpush1.bf16.msra.mxu0 %v5302
        %5607 = vmatprep.subr.bf16.mxu0 0
        %5608 = vmatpush2.bf16.msra.mxu0 %v5317
        %5609 = vmatprep.subr.bf16.mxu0 0
        %5610 = vmatpush2.bf16.msra.mxu0 %v5316
        %5611 = vmatprep.subr.bf16.mxu0 0
        %5612 = vmatpush2.bf16.msra.mxu0 %v5315
        %5613 = vmatprep.subr.bf16.mxu0 0
        %5614 = vmatpush2.bf16.msra.mxu0 %v5314
        %5615 = vmatprep.subr.bf16.mxu0 0
        %5616 = vmatpush2.bf16.msra.mxu0 %v5313
        %5617 = vmatprep.subr.bf16.mxu0 0
        %5618 = vmatpush2.bf16.msra.mxu0 %v5312
        %5619 = vmatprep.subr.bf16.mxu0 0
        %5620 = vmatpush2.bf16.msra.mxu0 %v5311
        %5621 = vmatprep.subr.bf16.mxu0 0
        %5622 = vmatpush2.bf16.msra.mxu0 %v5310
        %5623 = vmatprep.mubr.bf16.mxu0 %v4713
        %5624 = vmatmul.mubr.bf16.gmra.mxu0 %v4712
        %v5625 = vpop.f32.mrf.mxu0
        %v5626 = vadd.f32 %v5465, %v5625
        %v5627 = vpop.f32.mrf.mxu0
        %v5628 = vpop.f32.mrf.mxu0
        %v5629 = vadd.f32 %v5468, %v5628
        %v5630 = vpop.f32.mrf.mxu0
        %5631 = vmatprep.mubr.bf16.mxu0 %v4722
        %5632 = vmatmul.mubr.bf16.gmra.mxu0 %v4721
        %v5633 = vpop.f32.mrf.mxu0
        %v5634 = vadd.f32 %v5473, %v5633
        %v5635 = vpop.f32.mrf.mxu0
        %v5636 = vpop.f32.mrf.mxu0
        %v5637 = vadd.f32 %v5476, %v5636
        %v5638 = vpop.f32.mrf.mxu0
        %5639 = vmatprep.mubr.bf16.mxu0 %v4731
        %5640 = vmatmul.mubr.bf16.gmra.mxu0 %v4730
        %v5641 = vpop.f32.mrf.mxu0
        %v5642 = vadd.f32 %v5481, %v5641
        %v5643 = vpop.f32.mrf.mxu0
        %v5644 = vpop.f32.mrf.mxu0
        %v5645 = vadd.f32 %v5484, %v5644
        %v5646 = vpop.f32.mrf.mxu0
        %5647 = vmatprep.mubr.bf16.mxu0 %v4740
        %5648 = vmatmul.mubr.bf16.gmra.mxu0 %v4739
        %v5649 = vpop.f32.mrf.mxu0
        %v5650 = vadd.f32 %v5489, %v5649
        %v5651 = vpop.f32.mrf.mxu0
        %v5652 = vpop.f32.mrf.mxu0
        %v5653 = vadd.f32 %v5492, %v5652
        %v5654 = vpop.f32.mrf.mxu0
        %5655 = vmatprep.mubr.bf16.mxu0 %v4749
        %5656 = vmatmul.mubr.bf16.gmra.mxu0 %v4748
        %v5657 = vpop.f32.mrf.mxu0
        %v5658 = vadd.f32 %v5497, %v5657
        %v5659 = vpop.f32.mrf.mxu0
        %v5660 = vpop.f32.mrf.mxu0
        %v5661 = vadd.f32 %v5500, %v5660
        %v5662 = vpop.f32.mrf.mxu0
        %5663 = vmatprep.mubr.bf16.mxu0 %v4758
        %5664 = vmatmul.mubr.bf16.gmra.mxu0 %v4757
        %v5665 = vpop.f32.mrf.mxu0
        %v5666 = vadd.f32 %v5505, %v5665
        %v5667 = vpop.f32.mrf.mxu0
        %v5668 = vpop.f32.mrf.mxu0
        %v5669 = vadd.f32 %v5508, %v5668
        %v5670 = vpop.f32.mrf.mxu0
        %5671 = vmatprep.mubr.bf16.mxu0 %v4767
        %5672 = vmatmul.mubr.bf16.gmra.mxu0 %v4766
        %v5673 = vpop.f32.mrf.mxu0
        %v5674 = vadd.f32 %v5513, %v5673
        %v5675 = vpop.f32.mrf.mxu0
        %v5676 = vpop.f32.mrf.mxu0
        %v5677 = vadd.f32 %v5516, %v5676
        %v5678 = vpop.f32.mrf.mxu0
        %5679 = vmatprep.mubr.bf16.mxu0 %v4776
        %5680 = vmatmul.mubr.bf16.gmra.mxu0 %v4775
        %v5681 = vpop.f32.mrf.mxu0
        %v5682 = vadd.f32 %v5521, %v5681
        %v5683 = vpop.f32.mrf.mxu0
        %v5684 = vpop.f32.mrf.mxu0
        %v5685 = vadd.f32 %v5524, %v5684
        %v5686 = vpop.f32.mrf.mxu0
        %5687 = vmatprep.mubr.bf16.mxu0 %v4785
        %5688 = vmatmul.mubr.bf16.gmra.mxu0 %v4784
        %v5689 = vpop.f32.mrf.mxu0
        %v5690 = vadd.f32 %v5529, %v5689
        %v5691 = vpop.f32.mrf.mxu0
        %v5692 = vpop.f32.mrf.mxu0
        %v5693 = vadd.f32 %v5532, %v5692
        %v5694 = vpop.f32.mrf.mxu0
        %5695 = vmatprep.mubr.bf16.mxu0 %v4794
        %5696 = vmatmul.mubr.bf16.gmra.mxu0 %v4793
        %v5697 = vpop.f32.mrf.mxu0
        %v5698 = vadd.f32 %v5537, %v5697
        %v5699 = vpop.f32.mrf.mxu0
        %v5700 = vpop.f32.mrf.mxu0
        %v5701 = vadd.f32 %v5540, %v5700
        %v5702 = vpop.f32.mrf.mxu0
        %5703 = vmatprep.mubr.bf16.mxu0 %v4803
        %5704 = vmatmul.mubr.bf16.gmra.mxu0 %v4802
        %v5705 = vpop.f32.mrf.mxu0
        %v5706 = vadd.f32 %v5545, %v5705
        %v5707 = vpop.f32.mrf.mxu0
        %v5708 = vpop.f32.mrf.mxu0
        %v5709 = vadd.f32 %v5548, %v5708
        %v5710 = vpop.f32.mrf.mxu0
        %5711 = vmatprep.mubr.bf16.mxu0 %v4812
        %5712 = vmatmul.mubr.bf16.gmra.mxu0 %v4811
        %v5713 = vpop.f32.mrf.mxu0
        %v5714 = vadd.f32 %v5553, %v5713
        %v5715 = vpop.f32.mrf.mxu0
        %v5716 = vpop.f32.mrf.mxu0
        %v5717 = vadd.f32 %v5556, %v5716
        %v5718 = vpop.f32.mrf.mxu0
        %5719 = vmatprep.mubr.bf16.mxu0 %v4821
        %5720 = vmatmul.mubr.bf16.gmra.mxu0 %v4820
        %v5721 = vpop.f32.mrf.mxu0
        %v5722 = vadd.f32 %v5561, %v5721
        %v5723 = vpop.f32.mrf.mxu0
        %v5724 = vpop.f32.mrf.mxu0
        %v5725 = vadd.f32 %v5564, %v5724
        %v5726 = vpop.f32.mrf.mxu0
        %5727 = vmatprep.mubr.bf16.mxu0 %v4830
        %5728 = vmatmul.mubr.bf16.gmra.mxu0 %v4829
        %v5729 = vpop.f32.mrf.mxu0
        %v5730 = vadd.f32 %v5569, %v5729
        %v5731 = vpop.f32.mrf.mxu0
        %v5732 = vpop.f32.mrf.mxu0
        %v5733 = vadd.f32 %v5572, %v5732
        %v5734 = vpop.f32.mrf.mxu0
        %5735 = vmatprep.mubr.bf16.mxu0 %v4839
        %5736 = vmatmul.mubr.bf16.gmra.mxu0 %v4838
        %v5737 = vpop.f32.mrf.mxu0
        %v5738 = vadd.f32 %v5577, %v5737
        %v5739 = vpop.f32.mrf.mxu0
        %v5740 = vpop.f32.mrf.mxu0
        %v5741 = vadd.f32 %v5580, %v5740
        %v5742 = vpop.f32.mrf.mxu0
        %5743 = vmatprep.mubr.bf16.mxu0 %v4848
        %5744 = vmatmul.mubr.bf16.gmra.mxu0 %v4847
        %v5745 = vpop.f32.mrf.mxu0
        %v5746 = vadd.f32 %v5585, %v5745
        %v5747 = vpop.f32.mrf.mxu0
        %v5748 = vpop.f32.mrf.mxu0
        %v5749 = vadd.f32 %v5588, %v5748
        %v5750 = vpop.f32.mrf.mxu0
        %5751 = vdwg.mxu0
        %5752 = vmatprep.subr.bf16.mxu0 0
        %5753 = vmatpush1.bf16.msra.mxu0 %v5325
        %5754 = vmatprep.subr.bf16.mxu0 0
        %5755 = vmatpush1.bf16.msra.mxu0 %v5324
        %5756 = vmatprep.subr.bf16.mxu0 0
        %5757 = vmatpush1.bf16.msra.mxu0 %v5323
        %5758 = vmatprep.subr.bf16.mxu0 0
        %5759 = vmatpush1.bf16.msra.mxu0 %v5322
        %5760 = vmatprep.subr.bf16.mxu0 0
        %5761 = vmatpush1.bf16.msra.mxu0 %v5321
        %5762 = vmatprep.subr.bf16.mxu0 0
        %5763 = vmatpush1.bf16.msra.mxu0 %v5320
        %5764 = vmatprep.subr.bf16.mxu0 0
        %5765 = vmatpush1.bf16.msra.mxu0 %v5319
        %5766 = vmatprep.subr.bf16.mxu0 0
        %5767 = vmatpush1.bf16.msra.mxu0 %v5318
        %5768 = vmatprep.subr.bf16.mxu0 0
        %5769 = vmatpush2.bf16.msra.mxu0 %v5333
        %5770 = vmatprep.subr.bf16.mxu0 0
        %5771 = vmatpush2.bf16.msra.mxu0 %v5332
        %5772 = vmatprep.subr.bf16.mxu0 0
        %5773 = vmatpush2.bf16.msra.mxu0 %v5331
        %5774 = vmatprep.subr.bf16.mxu0 0
        %5775 = vmatpush2.bf16.msra.mxu0 %v5330
        %5776 = vmatprep.subr.bf16.mxu0 0
        %5777 = vmatpush2.bf16.msra.mxu0 %v5329
        %5778 = vmatprep.subr.bf16.mxu0 0
        %5779 = vmatpush2.bf16.msra.mxu0 %v5328
        %5780 = vmatprep.subr.bf16.mxu0 0
        %5781 = vmatpush2.bf16.msra.mxu0 %v5327
        %5782 = vmatprep.subr.bf16.mxu0 0
        %5783 = vmatpush2.bf16.msra.mxu0 %v5326
        %5784 = vmatprep.mubr.bf16.mxu0 %v4715
        %5785 = vmatmul.mubr.bf16.gmra.mxu0 %v4714
        %v5786 = vpop.f32.mrf.mxu0
        %v5787 = vadd.f32 %v5626, %v5786
        %v5788 = vpop.f32.mrf.mxu0
        %v5789 = vpop.f32.mrf.mxu0
        %v5790 = vadd.f32 %v5629, %v5789
        %v5791 = vpop.f32.mrf.mxu0
        %5792 = vmatprep.mubr.bf16.mxu0 %v4724
        %5793 = vmatmul.mubr.bf16.gmra.mxu0 %v4723
        %v5794 = vpop.f32.mrf.mxu0
        %v5795 = vadd.f32 %v5634, %v5794
        %v5796 = vpop.f32.mrf.mxu0
        %v5797 = vpop.f32.mrf.mxu0
        %v5798 = vadd.f32 %v5637, %v5797
        %v5799 = vpop.f32.mrf.mxu0
        %5800 = vmatprep.mubr.bf16.mxu0 %v4733
        %5801 = vmatmul.mubr.bf16.gmra.mxu0 %v4732
        %v5802 = vpop.f32.mrf.mxu0
        %v5803 = vadd.f32 %v5642, %v5802
        %v5804 = vpop.f32.mrf.mxu0
        %v5805 = vpop.f32.mrf.mxu0
        %v5806 = vadd.f32 %v5645, %v5805
        %v5807 = vpop.f32.mrf.mxu0
        %5808 = vmatprep.mubr.bf16.mxu0 %v4742
        %5809 = vmatmul.mubr.bf16.gmra.mxu0 %v4741
        %v5810 = vpop.f32.mrf.mxu0
        %v5811 = vadd.f32 %v5650, %v5810
        %v5812 = vpop.f32.mrf.mxu0
        %v5813 = vpop.f32.mrf.mxu0
        %v5814 = vadd.f32 %v5653, %v5813
        %v5815 = vpop.f32.mrf.mxu0
        %5816 = vmatprep.mubr.bf16.mxu0 %v4751
        %5817 = vmatmul.mubr.bf16.gmra.mxu0 %v4750
        %v5818 = vpop.f32.mrf.mxu0
        %v5819 = vadd.f32 %v5658, %v5818
        %v5820 = vpop.f32.mrf.mxu0
        %v5821 = vpop.f32.mrf.mxu0
        %v5822 = vadd.f32 %v5661, %v5821
        %v5823 = vpop.f32.mrf.mxu0
        %5824 = vmatprep.mubr.bf16.mxu0 %v4760
        %5825 = vmatmul.mubr.bf16.gmra.mxu0 %v4759
        %v5826 = vpop.f32.mrf.mxu0
        %v5827 = vadd.f32 %v5666, %v5826
        %v5828 = vpop.f32.mrf.mxu0
        %v5829 = vpop.f32.mrf.mxu0
        %v5830 = vadd.f32 %v5669, %v5829
        %v5831 = vpop.f32.mrf.mxu0
        %5832 = vmatprep.mubr.bf16.mxu0 %v4769
        %5833 = vmatmul.mubr.bf16.gmra.mxu0 %v4768
        %v5834 = vpop.f32.mrf.mxu0
        %v5835 = vadd.f32 %v5674, %v5834
        %v5836 = vpop.f32.mrf.mxu0
        %v5837 = vpop.f32.mrf.mxu0
        %v5838 = vadd.f32 %v5677, %v5837
        %v5839 = vpop.f32.mrf.mxu0
        %5840 = vmatprep.mubr.bf16.mxu0 %v4778
        %5841 = vmatmul.mubr.bf16.gmra.mxu0 %v4777
        %v5842 = vpop.f32.mrf.mxu0
        %v5843 = vadd.f32 %v5682, %v5842
        %v5844 = vpop.f32.mrf.mxu0
        %v5845 = vpop.f32.mrf.mxu0
        %v5846 = vadd.f32 %v5685, %v5845
        %v5847 = vpop.f32.mrf.mxu0
        %5848 = vmatprep.mubr.bf16.mxu0 %v4787
        %5849 = vmatmul.mubr.bf16.gmra.mxu0 %v4786
        %v5850 = vpop.f32.mrf.mxu0
        %v5851 = vadd.f32 %v5690, %v5850
        %v5852 = vpop.f32.mrf.mxu0
        %v5853 = vpop.f32.mrf.mxu0
        %v5854 = vadd.f32 %v5693, %v5853
        %v5855 = vpop.f32.mrf.mxu0
        %5856 = vmatprep.mubr.bf16.mxu0 %v4796
        %5857 = vmatmul.mubr.bf16.gmra.mxu0 %v4795
        %v5858 = vpop.f32.mrf.mxu0
        %v5859 = vadd.f32 %v5698, %v5858
        %v5860 = vpop.f32.mrf.mxu0
        %v5861 = vpop.f32.mrf.mxu0
        %v5862 = vadd.f32 %v5701, %v5861
        %v5863 = vpop.f32.mrf.mxu0
        %5864 = vmatprep.mubr.bf16.mxu0 %v4805
        %5865 = vmatmul.mubr.bf16.gmra.mxu0 %v4804
        %v5866 = vpop.f32.mrf.mxu0
        %v5867 = vadd.f32 %v5706, %v5866
        %v5868 = vpop.f32.mrf.mxu0
        %v5869 = vpop.f32.mrf.mxu0
        %v5870 = vadd.f32 %v5709, %v5869
        %v5871 = vpop.f32.mrf.mxu0
        %5872 = vmatprep.mubr.bf16.mxu0 %v4814
        %5873 = vmatmul.mubr.bf16.gmra.mxu0 %v4813
        %v5874 = vpop.f32.mrf.mxu0
        %v5875 = vadd.f32 %v5714, %v5874
        %v5876 = vpop.f32.mrf.mxu0
        %v5877 = vpop.f32.mrf.mxu0
        %v5878 = vadd.f32 %v5717, %v5877
        %v5879 = vpop.f32.mrf.mxu0
        %5880 = vmatprep.mubr.bf16.mxu0 %v4823
        %5881 = vmatmul.mubr.bf16.gmra.mxu0 %v4822
        %v5882 = vpop.f32.mrf.mxu0
        %v5883 = vadd.f32 %v5722, %v5882
        %v5884 = vpop.f32.mrf.mxu0
        %v5885 = vpop.f32.mrf.mxu0
        %v5886 = vadd.f32 %v5725, %v5885
        %v5887 = vpop.f32.mrf.mxu0
        %5888 = vmatprep.mubr.bf16.mxu0 %v4832
        %5889 = vmatmul.mubr.bf16.gmra.mxu0 %v4831
        %v5890 = vpop.f32.mrf.mxu0
        %v5891 = vadd.f32 %v5730, %v5890
        %v5892 = vpop.f32.mrf.mxu0
        %v5893 = vpop.f32.mrf.mxu0
        %v5894 = vadd.f32 %v5733, %v5893
        %v5895 = vpop.f32.mrf.mxu0
        %5896 = vmatprep.mubr.bf16.mxu0 %v4841
        %5897 = vmatmul.mubr.bf16.gmra.mxu0 %v4840
        %v5898 = vpop.f32.mrf.mxu0
        %v5899 = vadd.f32 %v5738, %v5898
        %v5900 = vpop.f32.mrf.mxu0
        %v5901 = vpop.f32.mrf.mxu0
        %v5902 = vadd.f32 %v5741, %v5901
        %v5903 = vpop.f32.mrf.mxu0
        %5904 = vmatprep.mubr.bf16.mxu0 %v4850
        %5905 = vmatmul.mubr.bf16.gmra.mxu0 %v4849
        %v5906 = vpop.f32.mrf.mxu0
        %v5907 = vadd.f32 %v5746, %v5906
        %v5908 = vpop.f32.mrf.mxu0
        %v5909 = vpop.f32.mrf.mxu0
        %v5910 = vadd.f32 %v5749, %v5909
        %v5911 = vpop.f32.mrf.mxu0
        %5912 = vdwg.mxu0
        %5913 = vmatprep.subr.bf16.mxu0 0
        %5914 = vmatpush1.bf16.msra.mxu0 %v5341
        %5915 = vmatprep.subr.bf16.mxu0 0
        %5916 = vmatpush1.bf16.msra.mxu0 %v5340
        %5917 = vmatprep.subr.bf16.mxu0 0
        %5918 = vmatpush1.bf16.msra.mxu0 %v5339
        %5919 = vmatprep.subr.bf16.mxu0 0
        %5920 = vmatpush1.bf16.msra.mxu0 %v5338
        %5921 = vmatprep.subr.bf16.mxu0 0
        %5922 = vmatpush1.bf16.msra.mxu0 %v5337
        %5923 = vmatprep.subr.bf16.mxu0 0
        %5924 = vmatpush1.bf16.msra.mxu0 %v5336
        %5925 = vmatprep.subr.bf16.mxu0 0
        %5926 = vmatpush1.bf16.msra.mxu0 %v5335
        %5927 = vmatprep.subr.bf16.mxu0 0
        %5928 = vmatpush1.bf16.msra.mxu0 %v5334
        %5929 = vmatprep.subr.bf16.mxu0 0
        %5930 = vmatpush2.bf16.msra.mxu0 %v5349
        %5931 = vmatprep.subr.bf16.mxu0 0
        %5932 = vmatpush2.bf16.msra.mxu0 %v5348
        %5933 = vmatprep.subr.bf16.mxu0 0
        %5934 = vmatpush2.bf16.msra.mxu0 %v5347
        %5935 = vmatprep.subr.bf16.mxu0 0
        %5936 = vmatpush2.bf16.msra.mxu0 %v5346
        %5937 = vmatprep.subr.bf16.mxu0 0
        %5938 = vmatpush2.bf16.msra.mxu0 %v5345
        %5939 = vmatprep.subr.bf16.mxu0 0
        %5940 = vmatpush2.bf16.msra.mxu0 %v5344
        %5941 = vmatprep.subr.bf16.mxu0 0
        %5942 = vmatpush2.bf16.msra.mxu0 %v5343
        %5943 = vmatprep.subr.bf16.mxu0 0
        %5944 = vmatpush2.bf16.msra.mxu0 %v5342
        %5945 = vmatprep.mubr.bf16.mxu0 %v4717
        %5946 = vmatmul.mubr.bf16.gmra.mxu0 %v4716
        %v5947 = vpop.f32.mrf.mxu0
        %v5948 = vadd.f32 %v5787, %v5947
        %v5949 = vpop.f32.mrf.mxu0
        %v5950 = vpop.f32.mrf.mxu0
        %v5951 = vadd.f32 %v5790, %v5950
        %v5952 = vpop.f32.mrf.mxu0
        %5953 = vmatprep.mubr.bf16.mxu0 %v4726
        %5954 = vmatmul.mubr.bf16.gmra.mxu0 %v4725
        %v5955 = vpop.f32.mrf.mxu0
        %v5956 = vadd.f32 %v5795, %v5955
        %v5957 = vpop.f32.mrf.mxu0
        %v5958 = vpop.f32.mrf.mxu0
        %v5959 = vadd.f32 %v5798, %v5958
        %v5960 = vpop.f32.mrf.mxu0
        %5961 = vmatprep.mubr.bf16.mxu0 %v4735
        %5962 = vmatmul.mubr.bf16.gmra.mxu0 %v4734
        %v5963 = vpop.f32.mrf.mxu0
        %v5964 = vadd.f32 %v5803, %v5963
        %v5965 = vpop.f32.mrf.mxu0
        %v5966 = vpop.f32.mrf.mxu0
        %v5967 = vadd.f32 %v5806, %v5966
        %v5968 = vpop.f32.mrf.mxu0
        %5969 = vmatprep.mubr.bf16.mxu0 %v4744
        %5970 = vmatmul.mubr.bf16.gmra.mxu0 %v4743
        %v5971 = vpop.f32.mrf.mxu0
        %v5972 = vadd.f32 %v5811, %v5971
        %v5973 = vpop.f32.mrf.mxu0
        %v5974 = vpop.f32.mrf.mxu0
        %v5975 = vadd.f32 %v5814, %v5974
        %v5976 = vpop.f32.mrf.mxu0
        %5977 = vmatprep.mubr.bf16.mxu0 %v4753
        %5978 = vmatmul.mubr.bf16.gmra.mxu0 %v4752
        %v5979 = vpop.f32.mrf.mxu0
        %v5980 = vadd.f32 %v5819, %v5979
        %v5981 = vpop.f32.mrf.mxu0
        %v5982 = vpop.f32.mrf.mxu0
        %v5983 = vadd.f32 %v5822, %v5982
        %v5984 = vpop.f32.mrf.mxu0
        %5985 = vmatprep.mubr.bf16.mxu0 %v4762
        %5986 = vmatmul.mubr.bf16.gmra.mxu0 %v4761
        %v5987 = vpop.f32.mrf.mxu0
        %v5988 = vadd.f32 %v5827, %v5987
        %v5989 = vpop.f32.mrf.mxu0
        %v5990 = vpop.f32.mrf.mxu0
        %v5991 = vadd.f32 %v5830, %v5990
        %v5992 = vpop.f32.mrf.mxu0
        %5993 = vmatprep.mubr.bf16.mxu0 %v4771
        %5994 = vmatmul.mubr.bf16.gmra.mxu0 %v4770
        %v5995 = vpop.f32.mrf.mxu0
        %v5996 = vadd.f32 %v5835, %v5995
        %v5997 = vpop.f32.mrf.mxu0
        %v5998 = vpop.f32.mrf.mxu0
        %v5999 = vadd.f32 %v5838, %v5998
        %v6000 = vpop.f32.mrf.mxu0
        %6001 = vmatprep.mubr.bf16.mxu0 %v4780
        %6002 = vmatmul.mubr.bf16.gmra.mxu0 %v4779
        %v6003 = vpop.f32.mrf.mxu0
        %v6004 = vadd.f32 %v5843, %v6003
        %v6005 = vpop.f32.mrf.mxu0
        %v6006 = vpop.f32.mrf.mxu0
        %v6007 = vadd.f32 %v5846, %v6006
        %v6008 = vpop.f32.mrf.mxu0
        %6009 = vmatprep.mubr.bf16.mxu0 %v4789
        %6010 = vmatmul.mubr.bf16.gmra.mxu0 %v4788
        %v6011 = vpop.f32.mrf.mxu0
        %v6012 = vadd.f32 %v5851, %v6011
        %v6013 = vpop.f32.mrf.mxu0
        %v6014 = vpop.f32.mrf.mxu0
        %v6015 = vadd.f32 %v5854, %v6014
        %v6016 = vpop.f32.mrf.mxu0
        %6017 = vmatprep.mubr.bf16.mxu0 %v4798
        %6018 = vmatmul.mubr.bf16.gmra.mxu0 %v4797
        %v6019 = vpop.f32.mrf.mxu0
        %v6020 = vadd.f32 %v5859, %v6019
        %v6021 = vpop.f32.mrf.mxu0
        %v6022 = vpop.f32.mrf.mxu0
        %v6023 = vadd.f32 %v5862, %v6022
        %v6024 = vpop.f32.mrf.mxu0
        %6025 = vmatprep.mubr.bf16.mxu0 %v4807
        %6026 = vmatmul.mubr.bf16.gmra.mxu0 %v4806
        %v6027 = vpop.f32.mrf.mxu0
        %v6028 = vadd.f32 %v5867, %v6027
        %v6029 = vpop.f32.mrf.mxu0
        %v6030 = vpop.f32.mrf.mxu0
        %v6031 = vadd.f32 %v5870, %v6030
        %v6032 = vpop.f32.mrf.mxu0
        %6033 = vmatprep.mubr.bf16.mxu0 %v4816
        %6034 = vmatmul.mubr.bf16.gmra.mxu0 %v4815
        %v6035 = vpop.f32.mrf.mxu0
        %v6036 = vadd.f32 %v5875, %v6035
        %v6037 = vpop.f32.mrf.mxu0
        %v6038 = vpop.f32.mrf.mxu0
        %v6039 = vadd.f32 %v5878, %v6038
        %v6040 = vpop.f32.mrf.mxu0
        %6041 = vmatprep.mubr.bf16.mxu0 %v4825
        %6042 = vmatmul.mubr.bf16.gmra.mxu0 %v4824
        %v6043 = vpop.f32.mrf.mxu0
        %v6044 = vadd.f32 %v5883, %v6043
        %v6045 = vpop.f32.mrf.mxu0
        %v6046 = vpop.f32.mrf.mxu0
        %v6047 = vadd.f32 %v5886, %v6046
        %v6048 = vpop.f32.mrf.mxu0
        %6049 = vmatprep.mubr.bf16.mxu0 %v4834
        %6050 = vmatmul.mubr.bf16.gmra.mxu0 %v4833
        %v6051 = vpop.f32.mrf.mxu0
        %v6052 = vadd.f32 %v5891, %v6051
        %v6053 = vpop.f32.mrf.mxu0
        %v6054 = vpop.f32.mrf.mxu0
        %v6055 = vadd.f32 %v5894, %v6054
        %v6056 = vpop.f32.mrf.mxu0
        %6057 = vmatprep.mubr.bf16.mxu0 %v4843
        %6058 = vmatmul.mubr.bf16.gmra.mxu0 %v4842
        %v6059 = vpop.f32.mrf.mxu0
        %v6060 = vadd.f32 %v5899, %v6059
        %v6061 = vpop.f32.mrf.mxu0
        %v6062 = vpop.f32.mrf.mxu0
        %v6063 = vadd.f32 %v5902, %v6062
        %v6064 = vpop.f32.mrf.mxu0
        %6065 = vmatprep.mubr.bf16.mxu0 %v4852
        %6066 = vmatmul.mubr.bf16.gmra.mxu0 %v4851
        %v6067 = vpop.f32.mrf.mxu0
        %v6068 = vadd.f32 %v5907, %v6067
        %v6069 = vpop.f32.mrf.mxu0
        %v6070 = vpop.f32.mrf.mxu0
        %v6071 = vadd.f32 %v5910, %v6070
        %v6072 = vpop.f32.mrf.mxu0
        %6073 = vdwg.mxu0
        %6074 = vmatprep.subr.bf16.mxu0 0
        %6075 = vmatpush1.bf16.msra.mxu0 %v5357
        %6076 = vmatprep.subr.bf16.mxu0 0
        %6077 = vmatpush1.bf16.msra.mxu0 %v5356
        %6078 = vmatprep.subr.bf16.mxu0 0
        %6079 = vmatpush1.bf16.msra.mxu0 %v5355
        %6080 = vmatprep.subr.bf16.mxu0 0
        %6081 = vmatpush1.bf16.msra.mxu0 %v5354
        %6082 = vmatprep.subr.bf16.mxu0 0
        %6083 = vmatpush1.bf16.msra.mxu0 %v5353
        %6084 = vmatprep.subr.bf16.mxu0 0
        %6085 = vmatpush1.bf16.msra.mxu0 %v5352
        %6086 = vmatprep.subr.bf16.mxu0 0
        %6087 = vmatpush1.bf16.msra.mxu0 %v5351
        %6088 = vmatprep.subr.bf16.mxu0 0
        %6089 = vmatpush1.bf16.msra.mxu0 %v5350
        %6090 = vmatprep.subr.bf16.mxu0 0
        %6091 = vmatpush2.bf16.msra.mxu0 0
        %6092 = vmatprep.subr.bf16.mxu0 0
        %6093 = vmatpush2.bf16.msra.mxu0 0
        %6094 = vmatprep.subr.bf16.mxu0 0
        %6095 = vmatpush2.bf16.msra.mxu0 0
        %6096 = vmatprep.subr.bf16.mxu0 0
        %6097 = vmatpush2.bf16.msra.mxu0 0
        %6098 = vmatprep.subr.bf16.mxu0 0
        %6099 = vmatpush2.bf16.msra.mxu0 0
        %6100 = vmatprep.subr.bf16.mxu0 0
        %6101 = vmatpush2.bf16.msra.mxu0 0
        %6102 = vmatprep.subr.bf16.mxu0 0
        %6103 = vmatpush2.bf16.msra.mxu0 0
        %6104 = vmatprep.subr.bf16.mxu0 0
        %6105 = vmatpush2.bf16.msra.mxu0 0
        %6106 = vmatprep.mubr.bf16.mxu0 0
        %6107 = vmatmul.mubr.bf16.gmra.mxu0 %v4718
        %v6108 = vpop.f32.mrf.mxu0
        %v6109 = vadd.f32 %v5948, %v6108
        %v6110 = vpop.f32.mrf.mxu0
        %v6111 = vpop.f32.mrf.mxu0
        %v6112 = vadd.f32 %v5951, %v6111
        %v6113 = vpop.f32.mrf.mxu0
        %6114 = vmatprep.mubr.bf16.mxu0 0
        %6115 = vmatmul.mubr.bf16.gmra.mxu0 %v4727
        %v6116 = vpop.f32.mrf.mxu0
        %v6117 = vadd.f32 %v5956, %v6116
        %v6118 = vpop.f32.mrf.mxu0
        %v6119 = vpop.f32.mrf.mxu0
        %v6120 = vadd.f32 %v5959, %v6119
        %v6121 = vpop.f32.mrf.mxu0
        %6122 = vmatprep.mubr.bf16.mxu0 0
        %6123 = vmatmul.mubr.bf16.gmra.mxu0 %v4736
        %v6124 = vpop.f32.mrf.mxu0
        %v6125 = vadd.f32 %v5964, %v6124
        %v6126 = vpop.f32.mrf.mxu0
        %v6127 = vpop.f32.mrf.mxu0
        %v6128 = vadd.f32 %v5967, %v6127
        %v6129 = vpop.f32.mrf.mxu0
        %6130 = vmatprep.mubr.bf16.mxu0 0
        %6131 = vmatmul.mubr.bf16.gmra.mxu0 %v4745
        %v6132 = vpop.f32.mrf.mxu0
        %v6133 = vadd.f32 %v5972, %v6132
        %v6134 = vpop.f32.mrf.mxu0
        %v6135 = vpop.f32.mrf.mxu0
        %v6136 = vadd.f32 %v5975, %v6135
        %v6137 = vpop.f32.mrf.mxu0
        %6138 = vmatprep.mubr.bf16.mxu0 0
        %6139 = vmatmul.mubr.bf16.gmra.mxu0 %v4754
        %v6140 = vpop.f32.mrf.mxu0
        %v6141 = vadd.f32 %v5980, %v6140
        %v6142 = vpop.f32.mrf.mxu0
        %v6143 = vpop.f32.mrf.mxu0
        %v6144 = vadd.f32 %v5983, %v6143
        %v6145 = vpop.f32.mrf.mxu0
        %6146 = vmatprep.mubr.bf16.mxu0 0
        %6147 = vmatmul.mubr.bf16.gmra.mxu0 %v4763
        %v6148 = vpop.f32.mrf.mxu0
        %v6149 = vadd.f32 %v5988, %v6148
        %v6150 = vpop.f32.mrf.mxu0
        %v6151 = vpop.f32.mrf.mxu0
        %v6152 = vadd.f32 %v5991, %v6151
        %v6153 = vpop.f32.mrf.mxu0
        %6154 = vmatprep.mubr.bf16.mxu0 0
        %6155 = vmatmul.mubr.bf16.gmra.mxu0 %v4772
        %v6156 = vpop.f32.mrf.mxu0
        %v6157 = vadd.f32 %v5996, %v6156
        %v6158 = vpop.f32.mrf.mxu0
        %v6159 = vpop.f32.mrf.mxu0
        %v6160 = vadd.f32 %v5999, %v6159
        %v6161 = vpop.f32.mrf.mxu0
        %6162 = vmatprep.mubr.bf16.mxu0 0
        %6163 = vmatmul.mubr.bf16.gmra.mxu0 %v4781
        %v6164 = vpop.f32.mrf.mxu0
        %v6165 = vadd.f32 %v6004, %v6164
        %v6166 = vpop.f32.mrf.mxu0
        %v6167 = vpop.f32.mrf.mxu0
        %v6168 = vadd.f32 %v6007, %v6167
        %v6169 = vpop.f32.mrf.mxu0
        %6170 = vmatprep.mubr.bf16.mxu0 0
        %6171 = vmatmul.mubr.bf16.gmra.mxu0 %v4790
        %v6172 = vpop.f32.mrf.mxu0
        %v6173 = vadd.f32 %v6012, %v6172
        %v6174 = vpop.f32.mrf.mxu0
        %v6175 = vpop.f32.mrf.mxu0
        %v6176 = vadd.f32 %v6015, %v6175
        %v6177 = vpop.f32.mrf.mxu0
        %6178 = vmatprep.mubr.bf16.mxu0 0
        %6179 = vmatmul.mubr.bf16.gmra.mxu0 %v4799
        %v6180 = vpop.f32.mrf.mxu0
        %v6181 = vadd.f32 %v6020, %v6180
        %v6182 = vpop.f32.mrf.mxu0
        %v6183 = vpop.f32.mrf.mxu0
        %v6184 = vadd.f32 %v6023, %v6183
        %v6185 = vpop.f32.mrf.mxu0
        %6186 = vmatprep.mubr.bf16.mxu0 0
        %6187 = vmatmul.mubr.bf16.gmra.mxu0 %v4808
        %v6188 = vpop.f32.mrf.mxu0
        %v6189 = vadd.f32 %v6028, %v6188
        %v6190 = vpop.f32.mrf.mxu0
        %v6191 = vpop.f32.mrf.mxu0
        %v6192 = vadd.f32 %v6031, %v6191
        %v6193 = vpop.f32.mrf.mxu0
        %6194 = vmatprep.mubr.bf16.mxu0 0
        %6195 = vmatmul.mubr.bf16.gmra.mxu0 %v4817
        %v6196 = vpop.f32.mrf.mxu0
        %v6197 = vadd.f32 %v6036, %v6196
        %v6198 = vpop.f32.mrf.mxu0
        %v6199 = vpop.f32.mrf.mxu0
        %v6200 = vadd.f32 %v6039, %v6199
        %v6201 = vpop.f32.mrf.mxu0
        %6202 = vmatprep.mubr.bf16.mxu0 0
        %6203 = vmatmul.mubr.bf16.gmra.mxu0 %v4826
        %v6204 = vpop.f32.mrf.mxu0
        %v6205 = vadd.f32 %v6044, %v6204
        %v6206 = vpop.f32.mrf.mxu0
        %v6207 = vpop.f32.mrf.mxu0
        %v6208 = vadd.f32 %v6047, %v6207
        %v6209 = vpop.f32.mrf.mxu0
        %6210 = vmatprep.mubr.bf16.mxu0 0
        %6211 = vmatmul.mubr.bf16.gmra.mxu0 %v4835
        %v6212 = vpop.f32.mrf.mxu0
        %v6213 = vadd.f32 %v6052, %v6212
        %v6214 = vpop.f32.mrf.mxu0
        %v6215 = vpop.f32.mrf.mxu0
        %v6216 = vadd.f32 %v6055, %v6215
        %v6217 = vpop.f32.mrf.mxu0
        %6218 = vmatprep.mubr.bf16.mxu0 0
        %6219 = vmatmul.mubr.bf16.gmra.mxu0 %v4844
        %v6220 = vpop.f32.mrf.mxu0
        %v6221 = vadd.f32 %v6060, %v6220
        %v6222 = vpop.f32.mrf.mxu0
        %v6223 = vpop.f32.mrf.mxu0
        %v6224 = vadd.f32 %v6063, %v6223
        %v6225 = vpop.f32.mrf.mxu0
        %6226 = vmatprep.mubr.bf16.mxu0 0
        %6227 = vmatmul.mubr.bf16.gmra.mxu0 %v4853
        %v6228 = vpop.f32.mrf.mxu0
        %v6229 = vadd.f32 %v6068, %v6228
        %v6230 = vpop.f32.mrf.mxu0
        %v6231 = vpop.f32.mrf.mxu0
        %v6232 = vadd.f32 %v6071, %v6231
        %v6233 = vpop.f32.mrf.mxu0
        %6234 = vdwg.mxu0
        %v6235 = vld [vmem:[%s5] sm:$0x1]
        %v6236 = vld [vmem:[%s6] sm:$0x1]
        %vm6237 = vcmask 523264
        %v6238 = vsel %vm6237, %v6109, 0.0
        %v6239 = vsel %vm6237, %v6112, 0.0
        %v6240 = vadd.f32 %v6238, %v6239
        %v6241 = vsel %vm6237, %v6117, 0.0
        %v6242 = vadd.f32 %v6240, %v6241
        %v6243 = vsel %vm6237, %v6120, 0.0
        %v6244 = vadd.f32 %v6242, %v6243
        %v6245 = vsel %vm6237, %v6125, 0.0
        %v6246 = vadd.f32 %v6244, %v6245
        %v6247 = vsel %vm6237, %v6128, 0.0
        %v6248 = vadd.f32 %v6246, %v6247
        %v6249 = vsel %vm6237, %v6133, 0.0
        %v6250 = vadd.f32 %v6248, %v6249
        %v6251 = vsel %vm6237, %v6136, 0.0
        %v6252 = vadd.f32 %v6250, %v6251
        %v6253 = vsel %vm6237, %v6141, 0.0
        %v6254 = vadd.f32 %v6252, %v6253
        %v6255 = vsel %vm6237, %v6144, 0.0
        %v6256 = vadd.f32 %v6254, %v6255
        %v6257 = vsel %vm6237, %v6149, 0.0
        %v6258 = vadd.f32 %v6256, %v6257
        %v6259 = vsel %vm6237, %v6152, 0.0
        %v6260 = vadd.f32 %v6258, %v6259
        %v6261 = vsel %vm6237, %v6157, 0.0
        %v6262 = vadd.f32 %v6260, %v6261
        %v6263 = vsel %vm6237, %v6160, 0.0
        %v6264 = vadd.f32 %v6262, %v6263
        %v6265 = vsel %vm6237, %v6165, 0.0
        %v6266 = vadd.f32 %v6264, %v6265
        %v6267 = vsel %vm6237, %v6168, 0.0
        %v6268 = vadd.f32 %v6266, %v6267
        %v6269 = vsel %vm6237, %v6173, 0.0
        %v6270 = vadd.f32 %v6268, %v6269
        %v6271 = vsel %vm6237, %v6176, 0.0
        %v6272 = vadd.f32 %v6270, %v6271
        %v6273 = vsel %vm6237, %v6181, 0.0
        %v6274 = vadd.f32 %v6272, %v6273
        %v6275 = vsel %vm6237, %v6184, 0.0
        %v6276 = vadd.f32 %v6274, %v6275
        %v6277 = vsel %vm6237, %v6189, 0.0
        %v6278 = vadd.f32 %v6276, %v6277
        %v6279 = vsel %vm6237, %v6192, 0.0
        %v6280 = vadd.f32 %v6278, %v6279
        %v6281 = vsel %vm6237, %v6197, 0.0
        %v6282 = vadd.f32 %v6280, %v6281
        %v6283 = vsel %vm6237, %v6200, 0.0
        %v6284 = vadd.f32 %v6282, %v6283
        %v6285 = vsel %vm6237, %v6205, 0.0
        %v6286 = vadd.f32 %v6284, %v6285
        %v6287 = vsel %vm6237, %v6208, 0.0
        %v6288 = vadd.f32 %v6286, %v6287
        %v6289 = vsel %vm6237, %v6213, 0.0
        %v6290 = vadd.f32 %v6288, %v6289
        %v6291 = vsel %vm6237, %v6216, 0.0
        %v6292 = vadd.f32 %v6290, %v6291
        %v6293 = vsel %vm6237, %v6221, 0.0
        %v6294 = vadd.f32 %v6292, %v6293
        %v6295 = vsel %vm6237, %v6224, 0.0
        %v6296 = vadd.f32 %v6294, %v6295
        %v6297 = vsel %vm6237, %v6229, 0.0
        %v6298 = vadd.f32 %v6296, %v6297
        %v6299 = vsel %vm6237, %v6232, 0.0
        %v6300 = vadd.f32 %v6298, %v6299
        %v6301 = vrot.slane %v6300, 4
        %v6302 = vadd.f32 %v6300, %v6301
        %v6303 = vrot.slane %v6302, 2
        %v6304 = vadd.f32 %v6302, %v6303
        %v6305 = vrot.slane %v6304, 1
        %v6306 = vadd.f32 %v6304, %v6305
        %v6307 = vmul.f32 %v6109, %v6109
        %v6308 = vmul.f32 %v6112, %v6112
        %v6309 = vmul.f32 %v6117, %v6117
        %v6310 = vmul.f32 %v6120, %v6120
        %v6311 = vmul.f32 %v6125, %v6125
        %v6312 = vmul.f32 %v6128, %v6128
        %v6313 = vmul.f32 %v6133, %v6133
        %v6314 = vmul.f32 %v6136, %v6136
        %v6315 = vmul.f32 %v6141, %v6141
        %v6316 = vmul.f32 %v6144, %v6144
        %v6317 = vmul.f32 %v6149, %v6149
        %v6318 = vmul.f32 %v6152, %v6152
        %v6319 = vmul.f32 %v6157, %v6157
        %v6320 = vmul.f32 %v6160, %v6160
        %v6321 = vmul.f32 %v6165, %v6165
        %v6322 = vmul.f32 %v6168, %v6168
        %v6323 = vmul.f32 %v6173, %v6173
        %v6324 = vmul.f32 %v6176, %v6176
        %v6325 = vmul.f32 %v6181, %v6181
        %v6326 = vmul.f32 %v6184, %v6184
        %v6327 = vmul.f32 %v6189, %v6189
        %v6328 = vmul.f32 %v6192, %v6192
        %v6329 = vmul.f32 %v6197, %v6197
        %v6330 = vmul.f32 %v6200, %v6200
        %v6331 = vmul.f32 %v6205, %v6205
        %v6332 = vmul.f32 %v6208, %v6208
        %v6333 = vmul.f32 %v6213, %v6213
        %v6334 = vmul.f32 %v6216, %v6216
        %v6335 = vmul.f32 %v6221, %v6221
        %v6336 = vmul.f32 %v6224, %v6224
        %v6337 = vmul.f32 %v6229, %v6229
        %v6338 = vmul.f32 %v6232, %v6232
        %v6339 = vsel %vm6237, %v6307, 0.0
        %v6340 = vsel %vm6237, %v6308, 0.0
        %v6341 = vadd.f32 %v6339, %v6340
        %v6342 = vsel %vm6237, %v6309, 0.0
        %v6343 = vadd.f32 %v6341, %v6342
        %v6344 = vsel %vm6237, %v6310, 0.0
        %v6345 = vadd.f32 %v6343, %v6344
        %v6346 = vsel %vm6237, %v6311, 0.0
        %v6347 = vadd.f32 %v6345, %v6346
        %v6348 = vsel %vm6237, %v6312, 0.0
        %v6349 = vadd.f32 %v6347, %v6348
        %v6350 = vsel %vm6237, %v6313, 0.0
        %v6351 = vadd.f32 %v6349, %v6350
        %v6352 = vsel %vm6237, %v6314, 0.0
        %v6353 = vadd.f32 %v6351, %v6352
        %v6354 = vsel %vm6237, %v6315, 0.0
        %v6355 = vadd.f32 %v6353, %v6354
        %v6356 = vsel %vm6237, %v6316, 0.0
        %v6357 = vadd.f32 %v6355, %v6356
        %v6358 = vsel %vm6237, %v6317, 0.0
        %v6359 = vadd.f32 %v6357, %v6358
        %v6360 = vsel %vm6237, %v6318, 0.0
        %v6361 = vadd.f32 %v6359, %v6360
        %v6362 = vsel %vm6237, %v6319, 0.0
        %v6363 = vadd.f32 %v6361, %v6362
        %v6364 = vsel %vm6237, %v6320, 0.0
        %v6365 = vadd.f32 %v6363, %v6364
        %v6366 = vsel %vm6237, %v6321, 0.0
        %v6367 = vadd.f32 %v6365, %v6366
        %v6368 = vsel %vm6237, %v6322, 0.0
        %v6369 = vadd.f32 %v6367, %v6368
        %v6370 = vsel %vm6237, %v6323, 0.0
        %v6371 = vadd.f32 %v6369, %v6370
        %v6372 = vsel %vm6237, %v6324, 0.0
        %v6373 = vadd.f32 %v6371, %v6372
        %v6374 = vsel %vm6237, %v6325, 0.0
        %v6375 = vadd.f32 %v6373, %v6374
        %v6376 = vsel %vm6237, %v6326, 0.0
        %v6377 = vadd.f32 %v6375, %v6376
        %v6378 = vsel %vm6237, %v6327, 0.0
        %v6379 = vadd.f32 %v6377, %v6378
        %v6380 = vsel %vm6237, %v6328, 0.0
        %v6381 = vadd.f32 %v6379, %v6380
        %v6382 = vsel %vm6237, %v6329, 0.0
        %v6383 = vadd.f32 %v6381, %v6382
        %v6384 = vsel %vm6237, %v6330, 0.0
        %v6385 = vadd.f32 %v6383, %v6384
        %v6386 = vsel %vm6237, %v6331, 0.0
        %v6387 = vadd.f32 %v6385, %v6386
        %v6388 = vsel %vm6237, %v6332, 0.0
        %v6389 = vadd.f32 %v6387, %v6388
        %v6390 = vsel %vm6237, %v6333, 0.0
        %v6391 = vadd.f32 %v6389, %v6390
        %v6392 = vsel %vm6237, %v6334, 0.0
        %v6393 = vadd.f32 %v6391, %v6392
        %v6394 = vsel %vm6237, %v6335, 0.0
        %v6395 = vadd.f32 %v6393, %v6394
        %v6396 = vsel %vm6237, %v6336, 0.0
        %v6397 = vadd.f32 %v6395, %v6396
        %v6398 = vsel %vm6237, %v6337, 0.0
        %v6399 = vadd.f32 %v6397, %v6398
        %v6400 = vsel %vm6237, %v6338, 0.0
        %v6401 = vadd.f32 %v6399, %v6400
        %v6402 = vrot.slane %v6401, 4
        %v6403 = vadd.f32 %v6401, %v6402
        %v6404 = vrot.slane %v6403, 2
        %v6405 = vadd.f32 %v6403, %v6404
        %v6406 = vrot.slane %v6405, 1
        %v6407 = vadd.f32 %v6405, %v6406
        %v6408 = vsel %vm472, %v6306, %v6407
        %v6409 = vld [vmem:[%s8] sm:$0xff]
        %v6410 = vld [vmem:[%s8 + $0x8] sm:$0xff]
        %v6411 = vld [vmem:[%s8 + $0x10] sm:$0xff]
        %v6412 = vld [vmem:[%s8 + $0x18] sm:$0xff]
        %v6413 = vld [vmem:[%s8 + $0x20] sm:$0xff]
        %v6414 = vld [vmem:[%s8 + $0x28] sm:$0xff]
        %v6415 = vld [vmem:[%s8 + $0x30] sm:$0xff]
        %v6416 = vld [vmem:[%s8 + $0x38] sm:$0xff]
        %v6418 = vsel %vm6237, %v6408, 0
        %6420 = vmatprep.subr.mxu0 0.0
        %6421 = vmatpush1.msra.mxu0 0.0
        %6422 = vmatprep.subr.mxu0 0.0
        %6423 = vmatpush1.msra.mxu0 0.0
        %6424 = vmatprep.subr.mxu0 0.0
        %6425 = vmatpush1.msra.mxu0 0.0
        %6426 = vmatprep.subr.mxu0 0.0
        %6427 = vmatpush1.msra.mxu0 0.0
        %6428 = vmatprep.subr.mxu0 0.0
        %6429 = vmatpush1.msra.mxu0 0.0
        %6430 = vmatprep.subr.mxu0 0.0
        %6431 = vmatpush1.msra.mxu0 0.0
        %6432 = vmatprep.subr.mxu0 0.0
        %6433 = vmatpush1.msra.mxu0 0.0
        %6434 = vmatprep.subr.mxu0 0.0
        %6435 = vmatpush1.msra.mxu0 0.0
        %6436 = vmatprep.subr.mxu0 0.0
        %6437 = vmatpush1.msra.mxu0 %v6416
        %6438 = vmatprep.subr.mxu0 0.0
        %6439 = vmatpush1.msra.mxu0 %v6415
        %6440 = vmatprep.subr.mxu0 0.0
        %6441 = vmatpush1.msra.mxu0 %v6414
        %6442 = vmatprep.subr.mxu0 0.0
        %6443 = vmatpush1.msra.mxu0 %v6413
        %6444 = vmatprep.subr.mxu0 0.0
        %6445 = vmatpush1.msra.mxu0 %v6412
        %6446 = vmatprep.subr.mxu0 0.0
        %6447 = vmatpush1.msra.mxu0 %v6411
        %6448 = vmatprep.subr.mxu0 0.0
        %6449 = vmatpush1.msra.mxu0 %v6410
        %6450 = vmatprep.subr.mxu0 0.0
        %6451 = vmatpush1.msra.mxu0 %v6409
        %6452 = vmatprep.subr.mxu0 0.0
        %6453 = vmatpush2.msra.mxu0 0.0
        %6454 = vmatprep.subr.mxu0 0.0
        %6455 = vmatpush2.msra.mxu0 0.0
        %6456 = vmatprep.subr.mxu0 0.0
        %6457 = vmatpush2.msra.mxu0 0.0
        %6458 = vmatprep.subr.mxu0 0.0
        %6459 = vmatpush2.msra.mxu0 0.0
        %6460 = vmatprep.subr.mxu0 0.0
        %6461 = vmatpush2.msra.mxu0 0.0
        %6462 = vmatprep.subr.mxu0 0.0
        %6463 = vmatpush2.msra.mxu0 0.0
        %6464 = vmatprep.subr.mxu0 0.0
        %6465 = vmatpush2.msra.mxu0 0.0
        %6466 = vmatprep.subr.mxu0 0.0
        %6467 = vmatpush2.msra.mxu0 0.0
        %6468 = vmatprep.subr.mxu0 0.0
        %6469 = vmatpush2.msra.mxu0 0.0
        %6470 = vmatprep.subr.mxu0 0.0
        %6471 = vmatpush2.msra.mxu0 0.0
        %6472 = vmatprep.subr.mxu0 0.0
        %6473 = vmatpush2.msra.mxu0 0.0
        %6474 = vmatprep.subr.mxu0 0.0
        %6475 = vmatpush2.msra.mxu0 0.0
        %6476 = vmatprep.subr.mxu0 0.0
        %6477 = vmatpush2.msra.mxu0 0.0
        %6478 = vmatprep.subr.mxu0 0.0
        %6479 = vmatpush2.msra.mxu0 0.0
        %6480 = vmatprep.subr.mxu0 0.0
        %6481 = vmatpush2.msra.mxu0 0.0
        %6482 = vmatprep.subr.mxu0 0.0
        %6483 = vmatpush2.msra.mxu0 0.0
        %6484 = vmatprep.mubr.f32.mxu0 0.0
        %6485 = vmatmul.mubr.f32.gmra.mxu0 %v6418
        %v6486 = vpop.f32.mrf.mxu0
        %v6487 = vadd.f32 0.0, %v6486
        %v6488 = vpop.f32.mrf.mxu0
        %6489 = vdwg.mxu0
        %v6490 = vmul.f32 %v6487, 0.001953125
        %v6491 = vmul.f32 %v6490, %v6490
        %v6493 = vrot.slane %v6491, 7
        %v6495 = vsub.f32 %v6490, %v6493
        %v6496 = vadd.f32 %v6495, 1e-05
        %v6497 = vrsqrt.pop %v6496
        %v6499 = vlaneseq
        %v6500 = vshrl.u32 %v6499, 7
        %v6501 = vsub.s32 0, %v6500
        %v6502 = vrot.slane %v6235, %v6501
        %v6504 = vmul.f32 %v6497, %v6502
        %v6506 = vrot.slane %v6504, 1
        %v6508 = vmul.f32 %v6490, %v6506
        %v6509 = vsub.f32 %v6236, %v6508
        %v6510 = vlaneseq
        %v6511 = vshrl.u32 %v6510, 7
        %v6512 = vsub.s32 1, %v6511
        %v6513 = vrot.slane %v6504, %v6512
        %v6514 = vmul.f32 %v6109, %v6513
        %v6515 = vmul.f32 %v6112, %v6513
        %v6516 = vmul.f32 %v6117, %v6513
        %v6517 = vmul.f32 %v6120, %v6513
        %v6518 = vmul.f32 %v6125, %v6513
        %v6519 = vmul.f32 %v6128, %v6513
        %v6520 = vmul.f32 %v6133, %v6513
        %v6521 = vmul.f32 %v6136, %v6513
        %v6522 = vmul.f32 %v6141, %v6513
        %v6523 = vmul.f32 %v6144, %v6513
        %v6524 = vmul.f32 %v6149, %v6513
        %v6525 = vmul.f32 %v6152, %v6513
        %v6526 = vmul.f32 %v6157, %v6513
        %v6527 = vmul.f32 %v6160, %v6513
        %v6528 = vmul.f32 %v6165, %v6513
        %v6529 = vmul.f32 %v6168, %v6513
        %v6530 = vmul.f32 %v6173, %v6513
        %v6531 = vmul.f32 %v6176, %v6513
        %v6532 = vmul.f32 %v6181, %v6513
        %v6533 = vmul.f32 %v6184, %v6513
        %v6534 = vmul.f32 %v6189, %v6513
        %v6535 = vmul.f32 %v6192, %v6513
        %v6536 = vmul.f32 %v6197, %v6513
        %v6537 = vmul.f32 %v6200, %v6513
        %v6538 = vmul.f32 %v6205, %v6513
        %v6539 = vmul.f32 %v6208, %v6513
        %v6540 = vmul.f32 %v6213, %v6513
        %v6541 = vmul.f32 %v6216, %v6513
        %v6542 = vmul.f32 %v6221, %v6513
        %v6543 = vmul.f32 %v6224, %v6513
        %v6544 = vmul.f32 %v6229, %v6513
        %v6545 = vmul.f32 %v6232, %v6513
        %v6547 = vlaneseq
        %v6548 = vshrl.u32 %v6547, 7
        %v6549 = vsub.s32 0, %v6548
        %v6550 = vrot.slane %v6509, %v6549
        %v6552 = vadd.f32 %v6514, %v6550
        %v6553 = vadd.f32 %v6515, %v6550
        %v6554 = vadd.f32 %v6516, %v6550
        %v6555 = vadd.f32 %v6517, %v6550
        %v6556 = vadd.f32 %v6518, %v6550
        %v6557 = vadd.f32 %v6519, %v6550
        %v6558 = vadd.f32 %v6520, %v6550
        %v6559 = vadd.f32 %v6521, %v6550
        %v6560 = vadd.f32 %v6522, %v6550
        %v6561 = vadd.f32 %v6523, %v6550
        %v6562 = vadd.f32 %v6524, %v6550
        %v6563 = vadd.f32 %v6525, %v6550
        %v6564 = vadd.f32 %v6526, %v6550
        %v6565 = vadd.f32 %v6527, %v6550
        %v6566 = vadd.f32 %v6528, %v6550
        %v6567 = vadd.f32 %v6529, %v6550
        %v6568 = vadd.f32 %v6530, %v6550
        %v6569 = vadd.f32 %v6531, %v6550
        %v6570 = vadd.f32 %v6532, %v6550
        %v6571 = vadd.f32 %v6533, %v6550
        %v6572 = vadd.f32 %v6534, %v6550
        %v6573 = vadd.f32 %v6535, %v6550
        %v6574 = vadd.f32 %v6536, %v6550
        %v6575 = vadd.f32 %v6537, %v6550
        %v6576 = vadd.f32 %v6538, %v6550
        %v6577 = vadd.f32 %v6539, %v6550
        %v6578 = vadd.f32 %v6540, %v6550
        %v6579 = vadd.f32 %v6541, %v6550
        %v6580 = vadd.f32 %v6542, %v6550
        %v6581 = vadd.f32 %v6543, %v6550
        %v6582 = vadd.f32 %v6544, %v6550
        %v6583 = vadd.f32 %v6545, %v6550
        %v6584 = vadd.f32 %v6552, 3.0
        %v6585 = vadd.f32 %v6553, 3.0
        %v6586 = vadd.f32 %v6554, 3.0
        %v6587 = vadd.f32 %v6555, 3.0
        %v6588 = vadd.f32 %v6556, 3.0
        %v6589 = vadd.f32 %v6557, 3.0
        %v6590 = vadd.f32 %v6558, 3.0
        %v6591 = vadd.f32 %v6559, 3.0
        %v6592 = vadd.f32 %v6560, 3.0
        %v6593 = vadd.f32 %v6561, 3.0
        %v6594 = vadd.f32 %v6562, 3.0
        %v6595 = vadd.f32 %v6563, 3.0
        %v6596 = vadd.f32 %v6564, 3.0
        %v6597 = vadd.f32 %v6565, 3.0
        %v6598 = vadd.f32 %v6566, 3.0
        %v6599 = vadd.f32 %v6567, 3.0
        %v6600 = vadd.f32 %v6568, 3.0
        %v6601 = vadd.f32 %v6569, 3.0
        %v6602 = vadd.f32 %v6570, 3.0
        %v6603 = vadd.f32 %v6571, 3.0
        %v6604 = vadd.f32 %v6572, 3.0
        %v6605 = vadd.f32 %v6573, 3.0
        %v6606 = vadd.f32 %v6574, 3.0
        %v6607 = vadd.f32 %v6575, 3.0
        %v6608 = vadd.f32 %v6576, 3.0
        %v6609 = vadd.f32 %v6577, 3.0
        %v6610 = vadd.f32 %v6578, 3.0
        %v6611 = vadd.f32 %v6579, 3.0
        %v6612 = vadd.f32 %v6580, 3.0
        %v6613 = vadd.f32 %v6581, 3.0
        %v6614 = vadd.f32 %v6582, 3.0
        %v6615 = vadd.f32 %v6583, 3.0
        %v6616 = vmax.f32 %v6584, 0.0
        %v6617 = vmax.f32 %v6585, 0.0
        %v6618 = vmax.f32 %v6586, 0.0
        %v6619 = vmax.f32 %v6587, 0.0
        %v6620 = vmax.f32 %v6588, 0.0
        %v6621 = vmax.f32 %v6589, 0.0
        %v6622 = vmax.f32 %v6590, 0.0
        %v6623 = vmax.f32 %v6591, 0.0
        %v6624 = vmax.f32 %v6592, 0.0
        %v6625 = vmax.f32 %v6593, 0.0
        %v6626 = vmax.f32 %v6594, 0.0
        %v6627 = vmax.f32 %v6595, 0.0
        %v6628 = vmax.f32 %v6596, 0.0
        %v6629 = vmax.f32 %v6597, 0.0
        %v6630 = vmax.f32 %v6598, 0.0
        %v6631 = vmax.f32 %v6599, 0.0
        %v6632 = vmax.f32 %v6600, 0.0
        %v6633 = vmax.f32 %v6601, 0.0
        %v6634 = vmax.f32 %v6602, 0.0
        %v6635 = vmax.f32 %v6603, 0.0
        %v6636 = vmax.f32 %v6604, 0.0
        %v6637 = vmax.f32 %v6605, 0.0
        %v6638 = vmax.f32 %v6606, 0.0
        %v6639 = vmax.f32 %v6607, 0.0
        %v6640 = vmax.f32 %v6608, 0.0
        %v6641 = vmax.f32 %v6609, 0.0
        %v6642 = vmax.f32 %v6610, 0.0
        %v6643 = vmax.f32 %v6611, 0.0
        %v6644 = vmax.f32 %v6612, 0.0
        %v6645 = vmax.f32 %v6613, 0.0
        %v6646 = vmax.f32 %v6614, 0.0
        %v6647 = vmax.f32 %v6615, 0.0
        %v6648 = vmin.f32 %v6616, 6.0
        %v6649 = vmin.f32 %v6617, 6.0
        %v6650 = vmin.f32 %v6618, 6.0
        %v6651 = vmin.f32 %v6619, 6.0
        %v6652 = vmin.f32 %v6620, 6.0
        %v6653 = vmin.f32 %v6621, 6.0
        %v6654 = vmin.f32 %v6622, 6.0
        %v6655 = vmin.f32 %v6623, 6.0
        %v6656 = vmin.f32 %v6624, 6.0
        %v6657 = vmin.f32 %v6625, 6.0
        %v6658 = vmin.f32 %v6626, 6.0
        %v6659 = vmin.f32 %v6627, 6.0
        %v6660 = vmin.f32 %v6628, 6.0
        %v6661 = vmin.f32 %v6629, 6.0
        %v6662 = vmin.f32 %v6630, 6.0
        %v6663 = vmin.f32 %v6631, 6.0
        %v6664 = vmin.f32 %v6632, 6.0
        %v6665 = vmin.f32 %v6633, 6.0
        %v6666 = vmin.f32 %v6634, 6.0
        %v6667 = vmin.f32 %v6635, 6.0
        %v6668 = vmin.f32 %v6636, 6.0
        %v6669 = vmin.f32 %v6637, 6.0
        %v6670 = vmin.f32 %v6638, 6.0
        %v6671 = vmin.f32 %v6639, 6.0
        %v6672 = vmin.f32 %v6640, 6.0
        %v6673 = vmin.f32 %v6641, 6.0
        %v6674 = vmin.f32 %v6642, 6.0
        %v6675 = vmin.f32 %v6643, 6.0
        %v6676 = vmin.f32 %v6644, 6.0
        %v6677 = vmin.f32 %v6645, 6.0
        %v6678 = vmin.f32 %v6646, 6.0
        %v6679 = vmin.f32 %v6647, 6.0
        %v6680 = vmul.f32 %v6552, %v6648
        %v6681 = vmul.f32 %v6553, %v6649
        %v6682 = vmul.f32 %v6554, %v6650
        %v6683 = vmul.f32 %v6555, %v6651
        %v6684 = vmul.f32 %v6556, %v6652
        %v6685 = vmul.f32 %v6557, %v6653
        %v6686 = vmul.f32 %v6558, %v6654
        %v6687 = vmul.f32 %v6559, %v6655
        %v6688 = vmul.f32 %v6560, %v6656
        %v6689 = vmul.f32 %v6561, %v6657
        %v6690 = vmul.f32 %v6562, %v6658
        %v6691 = vmul.f32 %v6563, %v6659
        %v6692 = vmul.f32 %v6564, %v6660
        %v6693 = vmul.f32 %v6565, %v6661
        %v6694 = vmul.f32 %v6566, %v6662
        %v6695 = vmul.f32 %v6567, %v6663
        %v6696 = vmul.f32 %v6568, %v6664
        %v6697 = vmul.f32 %v6569, %v6665
        %v6698 = vmul.f32 %v6570, %v6666
        %v6699 = vmul.f32 %v6571, %v6667
        %v6700 = vmul.f32 %v6572, %v6668
        %v6701 = vmul.f32 %v6573, %v6669
        %v6702 = vmul.f32 %v6574, %v6670
        %v6703 = vmul.f32 %v6575, %v6671
        %v6704 = vmul.f32 %v6576, %v6672
        %v6705 = vmul.f32 %v6577, %v6673
        %v6706 = vmul.f32 %v6578, %v6674
        %v6707 = vmul.f32 %v6579, %v6675
        %v6708 = vmul.f32 %v6580, %v6676
        %v6709 = vmul.f32 %v6581, %v6677
        %v6710 = vmul.f32 %v6582, %v6678
        %v6711 = vmul.f32 %v6583, %v6679
        %v6712 = vmul.f32 %v6680, 0.16666667
        %v6713 = vmul.f32 %v6681, 0.16666667
        %v6714 = vmul.f32 %v6682, 0.16666667
        %v6715 = vmul.f32 %v6683, 0.16666667
        %v6716 = vmul.f32 %v6684, 0.16666667
        %v6717 = vmul.f32 %v6685, 0.16666667
        %v6718 = vmul.f32 %v6686, 0.16666667
        %v6719 = vmul.f32 %v6687, 0.16666667
        %v6720 = vmul.f32 %v6688, 0.16666667
        %v6721 = vmul.f32 %v6689, 0.16666667
        %v6722 = vmul.f32 %v6690, 0.16666667
        %v6723 = vmul.f32 %v6691, 0.16666667
        %v6724 = vmul.f32 %v6692, 0.16666667
        %v6725 = vmul.f32 %v6693, 0.16666667
        %v6726 = vmul.f32 %v6694, 0.16666667
        %v6727 = vmul.f32 %v6695, 0.16666667
        %v6728 = vmul.f32 %v6696, 0.16666667
        %v6729 = vmul.f32 %v6697, 0.16666667
        %v6730 = vmul.f32 %v6698, 0.16666667
        %v6731 = vmul.f32 %v6699, 0.16666667
        %v6732 = vmul.f32 %v6700, 0.16666667
        %v6733 = vmul.f32 %v6701, 0.16666667
        %v6734 = vmul.f32 %v6702, 0.16666667
        %v6735 = vmul.f32 %v6703, 0.16666667
        %v6736 = vmul.f32 %v6704, 0.16666667
        %v6737 = vmul.f32 %v6705, 0.16666667
        %v6738 = vmul.f32 %v6706, 0.16666667
        %v6739 = vmul.f32 %v6707, 0.16666667
        %v6740 = vmul.f32 %v6708, 0.16666667
        %v6741 = vmul.f32 %v6709, 0.16666667
        %v6742 = vmul.f32 %v6710, 0.16666667
        %v6743 = vmul.f32 %v6711, 0.16666667
        %v6744 = vpack.c.bf16 %v6713, %v6712
        %v6745 = vpack.c.bf16 %v6715, %v6714
        %v6746 = vpack.c.bf16 %v6717, %v6716
        %v6747 = vpack.c.bf16 %v6719, %v6718
        %v6748 = vpack.c.bf16 %v6721, %v6720
        %v6749 = vpack.c.bf16 %v6723, %v6722
        %v6750 = vpack.c.bf16 %v6725, %v6724
        %v6751 = vpack.c.bf16 %v6727, %v6726
        %v6752 = vpack.c.bf16 %v6729, %v6728
        %v6753 = vpack.c.bf16 %v6731, %v6730
        %v6754 = vpack.c.bf16 %v6733, %v6732
        %v6755 = vpack.c.bf16 %v6735, %v6734
        %v6756 = vpack.c.bf16 %v6737, %v6736
        %v6757 = vpack.c.bf16 %v6739, %v6738
        %v6758 = vpack.c.bf16 %v6741, %v6740
        %v6759 = vpack.c.bf16 %v6743, %v6742
        %v6760 = vld [vmem:[%s2] sm:$0xf]
        %v6761 = vld [vmem:[%s2 + $0x4] sm:$0xf]
        %v6762 = vld [vmem:[%s2 + $0x8] sm:$0xf]
        %v6763 = vld [vmem:[%s2 + $0xc] sm:$0xf]
        %v6764 = vld [vmem:[%s2 + $0x10] sm:$0xf]
        %v6765 = vld [vmem:[%s2 + $0x14] sm:$0xf]
        %v6766 = vld [vmem:[%s2 + $0x18] sm:$0xf]
        %v6767 = vld [vmem:[%s2 + $0x1c] sm:$0xf]
        %v6776 = vunpack.c.l.b16 %v6760
        %v6777 = vunpack.c.l.b16 %v6761
        %v6778 = vunpack.c.l.b16 %v6762
        %v6779 = vunpack.c.l.b16 %v6763
        %v6780 = vunpack.c.l.b16 %v6764
        %v6781 = vunpack.c.l.b16 %v6765
        %v6782 = vunpack.c.l.b16 %v6766
        %v6783 = vunpack.c.l.b16 %v6767
        %v6784 = vpack.c.b16 %v6777, %v6776
        %v6785 = vpack.c.b16 %v6779, %v6778
        %v6786 = vpack.c.b16 %v6781, %v6780
        %v6787 = vpack.c.b16 %v6783, %v6782
        %v6793 = vsel %vm6237, %v6744, 0
        %v6796 = vsel %vm6237, %v6745, 0
        %v6799 = vsel %vm6237, %v6746, 0
        %v6802 = vsel %vm6237, %v6747, 0
        %v6805 = vsel %vm6237, %v6748, 0
        %v6808 = vsel %vm6237, %v6749, 0
        %v6811 = vsel %vm6237, %v6750, 0
        %v6814 = vsel %vm6237, %v6751, 0
        %v6817 = vsel %vm6237, %v6752, 0
        %v6820 = vsel %vm6237, %v6753, 0
        %v6823 = vsel %vm6237, %v6754, 0
        %v6826 = vsel %vm6237, %v6755, 0
        %v6829 = vsel %vm6237, %v6756, 0
        %v6832 = vsel %vm6237, %v6757, 0
        %v6835 = vsel %vm6237, %v6758, 0
        %v6838 = vsel %vm6237, %v6759, 0
        %6840 = vmatprep.subr.bf16.mxu0 0
        %6841 = vmatpush1.bf16.msra.mxu0 0
        %6842 = vmatprep.subr.bf16.mxu0 0
        %6843 = vmatpush1.bf16.msra.mxu0 0
        %6844 = vmatprep.subr.bf16.mxu0 0
        %6845 = vmatpush1.bf16.msra.mxu0 0
        %6846 = vmatprep.subr.bf16.mxu0 0
        %6847 = vmatpush1.bf16.msra.mxu0 0
        %6848 = vmatprep.subr.bf16.mxu0 0
        %6849 = vmatpush1.bf16.msra.mxu0 %v6787
        %6850 = vmatprep.subr.bf16.mxu0 0
        %6851 = vmatpush1.bf16.msra.mxu0 %v6786
        %6852 = vmatprep.subr.bf16.mxu0 0
        %6853 = vmatpush1.bf16.msra.mxu0 %v6785
        %6854 = vmatprep.subr.bf16.mxu0 0
        %6855 = vmatpush1.bf16.msra.mxu0 %v6784
        %6856 = vmatprep.subr.bf16.mxu0 0
        %6857 = vmatpush2.bf16.msra.mxu0 0
        %6858 = vmatprep.subr.bf16.mxu0 0
        %6859 = vmatpush2.bf16.msra.mxu0 0
        %6860 = vmatprep.subr.bf16.mxu0 0
        %6861 = vmatpush2.bf16.msra.mxu0 0
        %6862 = vmatprep.subr.bf16.mxu0 0
        %6863 = vmatpush2.bf16.msra.mxu0 0
        %6864 = vmatprep.subr.bf16.mxu0 0
        %6865 = vmatpush2.bf16.msra.mxu0 0
        %6866 = vmatprep.subr.bf16.mxu0 0
        %6867 = vmatpush2.bf16.msra.mxu0 0
        %6868 = vmatprep.subr.bf16.mxu0 0
        %6869 = vmatpush2.bf16.msra.mxu0 0
        %6870 = vmatprep.subr.bf16.mxu0 0
        %6871 = vmatpush2.bf16.msra.mxu0 0
        %6872 = vmatprep.mubr.bf16.mxu0 0
        %6873 = vmatmul.mubr.bf16.gmra.mxu0 %v6793
        %v6874 = vpop.f32.mrf.mxu0
        %v6875 = vadd.f32 0.0, %v6874
        %v6876 = vpop.f32.mrf.mxu0
        %v6877 = vpop.f32.mrf.mxu0
        %v6878 = vadd.f32 0.0, %v6877
        %v6879 = vpop.f32.mrf.mxu0
        %6880 = vmatprep.mubr.bf16.mxu0 0
        %6881 = vmatmul.mubr.bf16.gmra.mxu0 %v6796
        %v6882 = vpop.f32.mrf.mxu0
        %v6883 = vadd.f32 0.0, %v6882
        %v6884 = vpop.f32.mrf.mxu0
        %v6885 = vpop.f32.mrf.mxu0
        %v6886 = vadd.f32 0.0, %v6885
        %v6887 = vpop.f32.mrf.mxu0
        %6888 = vmatprep.mubr.bf16.mxu0 0
        %6889 = vmatmul.mubr.bf16.gmra.mxu0 %v6799
        %v6890 = vpop.f32.mrf.mxu0
        %v6891 = vadd.f32 0.0, %v6890
        %v6892 = vpop.f32.mrf.mxu0
        %v6893 = vpop.f32.mrf.mxu0
        %v6894 = vadd.f32 0.0, %v6893
        %v6895 = vpop.f32.mrf.mxu0
        %6896 = vmatprep.mubr.bf16.mxu0 0
        %6897 = vmatmul.mubr.bf16.gmra.mxu0 %v6802
        %v6898 = vpop.f32.mrf.mxu0
        %v6899 = vadd.f32 0.0, %v6898
        %v6900 = vpop.f32.mrf.mxu0
        %v6901 = vpop.f32.mrf.mxu0
        %v6902 = vadd.f32 0.0, %v6901
        %v6903 = vpop.f32.mrf.mxu0
        %6904 = vmatprep.mubr.bf16.mxu0 0
        %6905 = vmatmul.mubr.bf16.gmra.mxu0 %v6805
        %v6906 = vpop.f32.mrf.mxu0
        %v6907 = vadd.f32 0.0, %v6906
        %v6908 = vpop.f32.mrf.mxu0
        %v6909 = vpop.f32.mrf.mxu0
        %v6910 = vadd.f32 0.0, %v6909
        %v6911 = vpop.f32.mrf.mxu0
        %6912 = vmatprep.mubr.bf16.mxu0 0
        %6913 = vmatmul.mubr.bf16.gmra.mxu0 %v6808
        %v6914 = vpop.f32.mrf.mxu0
        %v6915 = vadd.f32 0.0, %v6914
        %v6916 = vpop.f32.mrf.mxu0
        %v6917 = vpop.f32.mrf.mxu0
        %v6918 = vadd.f32 0.0, %v6917
        %v6919 = vpop.f32.mrf.mxu0
        %6920 = vmatprep.mubr.bf16.mxu0 0
        %6921 = vmatmul.mubr.bf16.gmra.mxu0 %v6811
        %v6922 = vpop.f32.mrf.mxu0
        %v6923 = vadd.f32 0.0, %v6922
        %v6924 = vpop.f32.mrf.mxu0
        %v6925 = vpop.f32.mrf.mxu0
        %v6926 = vadd.f32 0.0, %v6925
        %v6927 = vpop.f32.mrf.mxu0
        %6928 = vmatprep.mubr.bf16.mxu0 0
        %6929 = vmatmul.mubr.bf16.gmra.mxu0 %v6814
        %v6930 = vpop.f32.mrf.mxu0
        %v6931 = vadd.f32 0.0, %v6930
        %v6932 = vpop.f32.mrf.mxu0
        %v6933 = vpop.f32.mrf.mxu0
        %v6934 = vadd.f32 0.0, %v6933
        %v6935 = vpop.f32.mrf.mxu0
        %6936 = vmatprep.mubr.bf16.mxu0 0
        %6937 = vmatmul.mubr.bf16.gmra.mxu0 %v6817
        %v6938 = vpop.f32.mrf.mxu0
        %v6939 = vadd.f32 0.0, %v6938
        %v6940 = vpop.f32.mrf.mxu0
        %v6941 = vpop.f32.mrf.mxu0
        %v6942 = vadd.f32 0.0, %v6941
        %v6943 = vpop.f32.mrf.mxu0
        %6944 = vmatprep.mubr.bf16.mxu0 0
        %6945 = vmatmul.mubr.bf16.gmra.mxu0 %v6820
        %v6946 = vpop.f32.mrf.mxu0
        %v6947 = vadd.f32 0.0, %v6946
        %v6948 = vpop.f32.mrf.mxu0
        %v6949 = vpop.f32.mrf.mxu0
        %v6950 = vadd.f32 0.0, %v6949
        %v6951 = vpop.f32.mrf.mxu0
        %6952 = vmatprep.mubr.bf16.mxu0 0
        %6953 = vmatmul.mubr.bf16.gmra.mxu0 %v6823
        %v6954 = vpop.f32.mrf.mxu0
        %v6955 = vadd.f32 0.0, %v6954
        %v6956 = vpop.f32.mrf.mxu0
        %v6957 = vpop.f32.mrf.mxu0
        %v6958 = vadd.f32 0.0, %v6957
        %v6959 = vpop.f32.mrf.mxu0
        %6960 = vmatprep.mubr.bf16.mxu0 0
        %6961 = vmatmul.mubr.bf16.gmra.mxu0 %v6826
        %v6962 = vpop.f32.mrf.mxu0
        %v6963 = vadd.f32 0.0, %v6962
        %v6964 = vpop.f32.mrf.mxu0
        %v6965 = vpop.f32.mrf.mxu0
        %v6966 = vadd.f32 0.0, %v6965
        %v6967 = vpop.f32.mrf.mxu0
        %6968 = vmatprep.mubr.bf16.mxu0 0
        %6969 = vmatmul.mubr.bf16.gmra.mxu0 %v6829
        %v6970 = vpop.f32.mrf.mxu0
        %v6971 = vadd.f32 0.0, %v6970
        %v6972 = vpop.f32.mrf.mxu0
        %v6973 = vpop.f32.mrf.mxu0
        %v6974 = vadd.f32 0.0, %v6973
        %v6975 = vpop.f32.mrf.mxu0
        %6976 = vmatprep.mubr.bf16.mxu0 0
        %6977 = vmatmul.mubr.bf16.gmra.mxu0 %v6832
        %v6978 = vpop.f32.mrf.mxu0
        %v6979 = vadd.f32 0.0, %v6978
        %v6980 = vpop.f32.mrf.mxu0
        %v6981 = vpop.f32.mrf.mxu0
        %v6982 = vadd.f32 0.0, %v6981
        %v6983 = vpop.f32.mrf.mxu0
        %6984 = vmatprep.mubr.bf16.mxu0 0
        %6985 = vmatmul.mubr.bf16.gmra.mxu0 %v6835
        %v6986 = vpop.f32.mrf.mxu0
        %v6987 = vadd.f32 0.0, %v6986
        %v6988 = vpop.f32.mrf.mxu0
        %v6989 = vpop.f32.mrf.mxu0
        %v6990 = vadd.f32 0.0, %v6989
        %v6991 = vpop.f32.mrf.mxu0
        %6992 = vmatprep.mubr.bf16.mxu0 0
        %6993 = vmatmul.mubr.bf16.gmra.mxu0 %v6838
        %v6994 = vpop.f32.mrf.mxu0
        %v6995 = vadd.f32 0.0, %v6994
        %v6996 = vpop.f32.mrf.mxu0
        %v6997 = vpop.f32.mrf.mxu0
        %v6998 = vadd.f32 0.0, %v6997
        %v6999 = vpop.f32.mrf.mxu0
        %7000 = vdwg.mxu0
        %v7001 = vadd.f32 %v332, %v6875
        %v7002 = vadd.f32 %v333, %v6878
        %v7003 = vadd.f32 %v334, %v6883
        %v7004 = vadd.f32 %v335, %v6886
        %v7005 = vadd.f32 %v336, %v6891
        %v7006 = vadd.f32 %v337, %v6894
        %v7007 = vadd.f32 %v338, %v6899
        %v7008 = vadd.f32 %v339, %v6902
        %v7009 = vadd.f32 %v340, %v6907
        %v7010 = vadd.f32 %v341, %v6910
        %v7011 = vadd.f32 %v342, %v6915
        %v7012 = vadd.f32 %v343, %v6918
        %v7013 = vadd.f32 %v344, %v6923
        %v7014 = vadd.f32 %v345, %v6926
        %v7015 = vadd.f32 %v346, %v6931
        %v7016 = vadd.f32 %v347, %v6934
        %v7017 = vadd.f32 %v348, %v6939
        %v7018 = vadd.f32 %v349, %v6942
        %v7019 = vadd.f32 %v350, %v6947
        %v7020 = vadd.f32 %v351, %v6950
        %v7021 = vadd.f32 %v352, %v6955
        %v7022 = vadd.f32 %v353, %v6958
        %v7023 = vadd.f32 %v354, %v6963
        %v7024 = vadd.f32 %v355, %v6966
        %v7025 = vadd.f32 %v356, %v6971
        %v7026 = vadd.f32 %v357, %v6974
        %v7027 = vadd.f32 %v358, %v6979
        %v7028 = vadd.f32 %v359, %v6982
        %v7029 = vadd.f32 %v360, %v6987
        %v7030 = vadd.f32 %v361, %v6990
        %v7031 = vadd.f32 %v362, %v6995
        %v7032 = vadd.f32 %v363, %v6998
        %7033 = vst [vmem:[%s325] sm:$0xff] %v7001
        %7034 = vst [vmem:[%s325 + $0x8] sm:$0xff] %v7002
        %7035 = vst [vmem:[%s325 + $0x10] sm:$0xff] %v7003
        %7036 = vst [vmem:[%s325 + $0x18] sm:$0xff] %v7004
        %7037 = vst [vmem:[%s325 + $0x20] sm:$0xff] %v7005
        %7038 = vst [vmem:[%s325 + $0x28] sm:$0xff] %v7006
        %7039 = vst [vmem:[%s325 + $0x30] sm:$0xff] %v7007
        %7040 = vst [vmem:[%s325 + $0x38] sm:$0xff] %v7008
        %7041 = vst [vmem:[%s325 + $0x40] sm:$0xff] %v7009
        %7042 = vst [vmem:[%s325 + $0x48] sm:$0xff] %v7010
        %7043 = vst [vmem:[%s325 + $0x50] sm:$0xff] %v7011
        %7044 = vst [vmem:[%s325 + $0x58] sm:$0xff] %v7012
        %7045 = vst [vmem:[%s325 + $0x60] sm:$0xff] %v7013
        %7046 = vst [vmem:[%s325 + $0x68] sm:$0xff] %v7014
        %7047 = vst [vmem:[%s325 + $0x70] sm:$0xff] %v7015
        %7048 = vst [vmem:[%s325 + $0x78] sm:$0xff] %v7016
        %7049 = vst [vmem:[%s325 + $0x80] sm:$0xff] %v7017
        %7050 = vst [vmem:[%s325 + $0x88] sm:$0xff] %v7018
        %7051 = vst [vmem:[%s325 + $0x90] sm:$0xff] %v7019
        %7052 = vst [vmem:[%s325 + $0x98] sm:$0xff] %v7020
        %7053 = vst [vmem:[%s325 + $0xa0] sm:$0xff] %v7021
        %7054 = vst [vmem:[%s325 + $0xa8] sm:$0xff] %v7022
        %7055 = vst [vmem:[%s325 + $0xb0] sm:$0xff] %v7023
        %7056 = vst [vmem:[%s325 + $0xb8] sm:$0xff] %v7024
        %7057 = vst [vmem:[%s325 + $0xc0] sm:$0xff] %v7025
        %7058 = vst [vmem:[%s325 + $0xc8] sm:$0xff] %v7026
        %7059 = vst [vmem:[%s325 + $0xd0] sm:$0xff] %v7027
        %7060 = vst [vmem:[%s325 + $0xd8] sm:$0xff] %v7028
        %7061 = vst [vmem:[%s325 + $0xe0] sm:$0xff] %v7029
        %7062 = vst [vmem:[%s325 + $0xe8] sm:$0xff] %v7030
        %7063 = vst [vmem:[%s325 + $0xf0] sm:$0xff] %v7031
        %7064 = vst [vmem:[%s325 + $0xf8] sm:$0xff] %v7032
        %s7065 = sand.u32 %s225, 1
        %s7066 = scalar_lea.sflag [#allocation5], %s7065
        %s7067 = sand.u32 %s225, 1
        %s7068 = smul.addr %s7067, 256
        %s7069 = scalar_lea.vmem [#allocation4], %s7068
        // Predicated region
        $region57: #{tpu_custom_call.1} parent=55 // pred_check
          %p7070 = pneg %p235
        $region58: #{tpu_custom_call.1} parent=55 // pred_check_branch
          %7072 = sbr.rel (%p7070) target = $region60
        $region59: #{tpu_custom_call.1} parent=55 // pred_region
          %s7074 = ssub.s32 4096, 4096
          %7075 = vsyncadd %s7066, %s7074
          %s7076 = smul.addr %s23, 32
          %s7077 = smul.addr %s7076, 128
          %s7078 = scalar_lea.hbm %s9, %s7077
          %s7079 = sshll.u32 %s7069, 4
          %s7080 = int_to_ptr.vmem [resolvable:$true] %s7079
          %7085 = dma.vmem_to_hbm [thread:$0]  %s7080, 4096, %s7078, %s7066, 128, 128, 8
        $region60: #{tpu_custom_call.1} parent=55 // pred_fallthru
          _
      $region56: #{tpu_custom_call.1} parent=5 // pred_fallthru
        _
      %p7086 = scmp.le.s32.totalorder 2, %s18
      // Predicated region
      $region61: #{tpu_custom_call.1} parent=5 // pred_check
        %p7087 = pneg %p7086
      $region62: #{tpu_custom_call.1} parent=5 // pred_check_branch
        %7089 = sbr.rel (%p7087) target = $region64
      $region63: #{tpu_custom_call.1} parent=5 // pred_region
        %s7090 = ssub.s32 %s18, 2
        // Predicated region
        $region65: #{tpu_custom_call.1} parent=63 // pred_check
          %p7091 = pneg %p241
        $region66: #{tpu_custom_call.1} parent=63 // pred_check_branch
          %7093 = sbr.rel (%p7091) target = $region68
        $region67: #{tpu_custom_call.1} parent=63 // pred_region
          %s7094 = sand.u32 %s226, 1
          %s7095 = scalar_lea.sflag [#allocation5], %s7094
          %s7096 = sand.u32 %s226, 1
          %s7097 = smul.addr %s7096, 256
          %s7098 = scalar_lea.vmem [#allocation4], %s7097
          %7099 = dma.done %s7095, 4096
        $region68: #{tpu_custom_call.1} parent=63 // pred_fallthru
          _
      $region64: #{tpu_custom_call.1} parent=5 // pred_fallthru
        _
    $region6: #{tpu_custom_call.1} parent=1 // loop_footer
      %s22 = sadd.s32 1, %s18
    $region7: #{tpu_custom_call.1} parent=1 // loop_footer_branch
      %17 = sbr.rel target = $region3
    $region8: #{tpu_custom_call.1} parent=1 // loop_exit
      _
    %7100 = vsyncpa [#allocation5], 1
    %s7101 = scalar_lea.sflag [#allocation5], 1
    %7102 = vsyncpa %s7101, 1

</llo_original>
